<compile_context>
chip_gen: v7x
topology: tpu7x:2x2x1
jax: 0.10.0
libtpu: 0.0.40
codegen_flags: <defaults>
</compile_context>

<pallas_src>
import jax
import jax.numpy as jnp
from jax.experimental import pallas as pl
from jax.experimental.pallas import tpu as pltpu


# --------------------------- wrapper-side weight prep ------------------------

def _band_weight(w, w_sp, dtype):
    """PyTorch conv weight (Cout, Cin, 3, 3) -> banded matmul weight.

    Returns Wband of shape (3*w_sp*Cin, w_sp*Cout).  With lhs_dh[(b,i), r*Cin+cin]
    = padded_rows[b, i+dh, r, cin] (rows zero-padded top/bottom only, r = real
    column), the 3x3 pad-1 conv is  y = sum_dh lhs_dh @ Wband[dh*K:(dh+1)*K],
    K = w_sp*Cin.  Output columns are ordered col = e*(w_sp//2)*Cout + q*Cout + c
    with j = 2q + e, so a 2x-maxpool over columns is max of the two lane halves.
    """
    Cout, Cin = w.shape[0], w.shape[1]
    wT = jnp.transpose(w, (2, 3, 1, 0))                              # (dh, dw, Cin, Cout)
    a = jnp.broadcast_to(wT[:, None], (3, w_sp, 3, Cin, Cout))       # (dh, j, dw, ...)
    z = jnp.zeros((3, w_sp, w_sp - 2, Cin, Cout), w.dtype)
    bm = jnp.concatenate([a, z], axis=2)                             # (dh, j, w_sp+1, ...)
    bm = bm.reshape(3, w_sp * (w_sp + 1), Cin, Cout)
    c = bm[:, 1:1 + w_sp * w_sp]                                     # Toeplitz shift
    c = c.reshape(3, w_sp, w_sp, Cin, Cout)                          # (dh, j, r, cin, cout)
    c = c.reshape(3, w_sp // 2, 2, w_sp, Cin, Cout)                  # (dh, q, e, r, cin, cout)
    c = jnp.transpose(c, (0, 3, 4, 2, 1, 5))                         # (dh, r, cin, e, q, cout)
    return c.reshape(3 * w_sp * Cin, w_sp * Cout).astype(dtype)


def _band_bias(bias, w_sp):
    # column index % Cout == output channel for every column ordering used above
    return jnp.tile(bias, w_sp).reshape(1, w_sp * bias.shape[0]).astype(jnp.float32)


# --------------------------------- kernel ------------------------------------

def _make_fused_kernel(B, H, W):
    H1, W1, C1 = H, W, 32
    H2, W2, C2 = H // 2, W // 2, 64
    H3, W3, C3 = H // 4, W // 4, 128

    def conv_relu(p_ref, act, wb_ref, bias_ref, cdt):
        # act: (B, h, w*cin) f32;  p_ref: (B, h+2, w*cin) VMEM scratch
        h, wc = act.shape[1], act.shape[2]
        p_ref[...] = jnp.zeros(p_ref.shape, p_ref.dtype)          # top/bottom zero rows
        p_ref[:, 1:h + 1, :] = act
        acc = None
        for dh in range(3):                                        # static, unrolled
            lhs = p_ref[:, dh:dh + h, :].reshape(B * h, wc).astype(cdt)
            rhs = wb_ref[dh * wc:(dh + 1) * wc, :]
            part = jnp.dot(lhs, rhs, preferred_element_type=jnp.float32)
            acc = part if acc is None else acc + part
        return jnp.maximum(acc + bias_ref[...], 0.0)               # (B*h, w*cout) f32

    def pool2x2(y, h, n):
        # y: (B*h, n) with rows (b, i) and columns (even-j half | odd-j half)
        y = jnp.max(y.reshape(B * (h // 2), 2, n), axis=1)         # pool over rows
        y = jnp.maximum(y[:, : n // 2], y[:, n // 2:])             # pool over columns
        return y.reshape(B, h // 2, n // 2)

    def kernel(x_ref, wb1, bb1, wb2, bb2, wb3, bb3, wl1, bl1, wl2, bl2,
               o_ref, p1, p2, p3):
        x = x_ref[...]                                             # (B, H, W) f32, Cin = 1
        y = conv_relu(p1, x, wb1, bb1, jnp.float32)                # (B*H1, W1*32)
        a1 = pool2x2(y, H1, W1 * C1)                               # (B, H2, W2*32)
        y = conv_relu(p2, a1, wb2, bb2, jnp.bfloat16)              # (B*H2, W2*64)
        a2 = pool2x2(y, H2, W2 * C2)                               # (B, H3, W3*64)
        y = conv_relu(p3, a2, wb3, bb3, jnp.bfloat16)              # (B*H3, W3*128)

        # AdaptiveAvgPool2d((1,1)): sum over rows, then over the W3 column blocks.
        s = jnp.sum(y.reshape(B, H3, W3 * C3), axis=1)             # (B, W3*128)
        pooled = s[:, 0:C3]
        for k in range(1, W3):
            pooled = pooled + s[:, k * C3:(k + 1) * C3]
        pooled = pooled * (1.0 / float(H3 * W3))                   # (B, 128) f32

        # Projector: Linear(128,128) + ReLU + Linear(128,feat), then L2 normalize.
        z = jnp.dot(pooled.astype(jnp.bfloat16), wl1[...],
                    preferred_element_type=jnp.float32) + bl1[...]
        z = jnp.maximum(z, 0.0)
        z = jnp.dot(z.astype(jnp.bfloat16), wl2[...],
                    preferred_element_type=jnp.float32) + bl2[...]
        ssq = jnp.maximum(jnp.sum(z * z, axis=1, keepdims=True), 1e-24)
        r = jax.lax.rsqrt(ssq)
        r = r * (1.5 - 0.5 * ssq * r * r)                          # Newton refinement
        o_ref[0] = (z * r).astype(o_ref.dtype)

    return kernel


# -------------------------------- wrapper -------------------------------------

def contrastive_forward(x_nchw, params):
    N = int(x_nchw.shape[0])
    H, W = int(x_nchw.shape[2]), int(x_nchw.shape[3])
    assert x_nchw.shape[1] == 1 and H % 4 == 0 and W % 4 == 0
    feat = int(params["w_l2"].shape[0])

    # B images per grid step; keep >= 2 grid steps when possible (v7x megacore).
    B = max(1, min(8, N // 2)) if N > 1 else 1
    G = -(-N // B)
    Npad = G * B

    x = x_nchw.reshape(N, H, W).astype(jnp.float32)
    if Npad != N:
        x = jnp.concatenate([x, jnp.zeros((Npad - N, H, W), jnp.float32)], axis=0)

    # Banded conv weights: f32 for conv1 (tiny, input fidelity), bf16 MXU operands
    # for conv2 / conv3 / projector, f32 biases (epilogues stay f32 -> v5e safe).
    wb1 = _band_weight(params["w_c1"], W, jnp.float32)             # (3*W, W*32)
    bb1 = _band_bias(params["b_c1"], W)
    wb2 = _band_weight(params["w_c2"], W // 2, jnp.bfloat16)       # (3*(W/2)*32, (W/2)*64)
    bb2 = _band_bias(params["b_c2"], W // 2)
    wb3 = _band_weight(params["w_c3"], W // 4, jnp.bfloat16)       # (3*(W/4)*64, (W/4)*128)
    bb3 = _band_bias(params["b_c3"], W // 4)
    wl1 = params["w_l1"].T.astype(jnp.bfloat16)                    # (128, 128)
    bl1 = params["b_l1"].reshape(1, -1).astype(jnp.float32)
    wl2 = params["w_l2"].T.astype(jnp.bfloat16)                    # (128, feat)
    bl2 = params["b_l2"].reshape(1, -1).astype(jnp.float32)

    kernel = _make_fused_kernel(B, H, W)

    def _full2d(shape):
        return pl.BlockSpec(shape, lambda n: (0, 0))

    flops = 2 * Npad * (3 * H * W * 1 * (W * 32)
                        + 3 * (H // 2) * ((W // 2) * 32) * ((W // 2) * 64)
                        + 3 * (H // 4) * ((W // 4) * 64) * ((W // 4) * 128)
                        + 128 * 128 + 128 * feat)
    bytes_accessed = int(x.size * 4 + wb1.size * 4 + bb1.size * 4
                         + (wb2.size + wb3.size + wl1.size + wl2.size) * 2
                         + (bb2.size + bb3.size + bl1.size + bl2.size) * 4
                         + Npad * feat * 4)

    out = pl.pallas_call(
        kernel,
        out_shape=jax.ShapeDtypeStruct((G, B, feat), jnp.float32),
        grid=(G,),
        in_specs=[
            pl.BlockSpec((B, H, W), lambda n: (n, 0, 0)),
            _full2d(wb1.shape), _full2d(bb1.shape),
            _full2d(wb2.shape), _full2d(bb2.shape),
            _full2d(wb3.shape), _full2d(bb3.shape),
            _full2d(wl1.shape), _full2d(bl1.shape),
            _full2d(wl2.shape), _full2d(bl2.shape),
        ],
        out_specs=pl.BlockSpec((1, B, feat), lambda n: (n, 0, 0)),
        scratch_shapes=[
            pltpu.VMEM((B, H + 2, W), jnp.float32),                      # padded conv1 input
            pltpu.VMEM((B, H // 2 + 2, (W // 2) * 32), jnp.float32),     # padded conv2 input
            pltpu.VMEM((B, H // 4 + 2, (W // 4) * 64), jnp.float32),     # padded conv3 input
        ],
        compiler_params=pltpu.CompilerParams(dimension_semantics=("parallel",)),
        cost_estimate=pl.CostEstimate(flops=flops, transcendentals=0,
                                      bytes_accessed=bytes_accessed),
    )(x, wb1, bb1, wb2, bb2, wb3, bb3, wl1, bl1, wl2, bl2)

    return out.reshape(Npad, feat)[:N]


# --------------------------- init + pure-JAX reference ------------------------

def init_params(key, feature_dim=128):
    def uniform(k, shape, fan_in):
        bound = 1.0 / jnp.sqrt(float(fan_in))
        return jax.random.uniform(k, shape, jnp.float32, -bound, bound)

    ks = jax.random.split(key, 10)
    return {
        "w_c1": uniform(ks[0], (32, 1, 3, 3), 9),
        "b_c1": uniform(ks[1], (32,), 9),
        "w_c2": uniform(ks[2], (64, 32, 3, 3), 288),
        "b_c2": uniform(ks[3], (64,), 288),
        "w_c3": uniform(ks[4], (128, 64, 3, 3), 576),
        "b_c3": uniform(ks[5], (128,), 576),
        "w_l1": uniform(ks[6], (128, 128), 128),
        "b_l1": uniform(ks[7], (128,), 128),
        "w_l2": uniform(ks[8], (feature_dim, 128), 128),
        "b_l2": uniform(ks[9], (feature_dim,), 128),
    }


def reference_forward(x_nchw, params):
    def conv(x, w, b):
        dn = jax.lax.conv_dimension_numbers(x.shape, w.shape, ("NCHW", "OIHW", "NCHW"))
        y = jax.lax.conv_general_dilated(x, w, (1, 1), "SAME", dimension_numbers=dn)
        return jax.nn.relu(y + b.reshape(1, -1, 1, 1))

    def maxpool(x):
        return jax.lax.reduce_window(x, -jnp.inf, jax.lax.max,
                                     (1, 1, 2, 2), (1, 1, 2, 2), "VALID")

    h = maxpool(conv(x_nchw, params["w_c1"], params["b_c1"]))
    h = maxpool(conv(h, params["w_c2"], params["b_c2"]))
    h = conv(h, params["w_c3"], params["b_c3"])
    h = jnp.mean(h, axis=(2, 3))
    z = jax.nn.relu(h @ params["w_l1"].T + params["b_l1"])
    z = z @ params["w_l2"].T + params["b_l2"]
    nrm = jnp.maximum(jnp.linalg.norm(z, axis=1, keepdims=True), 1e-12)
    return z / nrm


if __name__ == "__main__":
    key = jax.random.PRNGKey(0)
    k_params, k_x = jax.random.split(key)
    params = init_params(k_params, feature_dim=128)

    # batch=2, 1 channel (required by Conv2d(1, 32, ...)), 16x16 spatial (NCHW)
    x = jax.random.normal(k_x, (2, 1, 16, 16), dtype=jnp.float32)

    z = jax.block_until_ready(jax.jit(contrastive_forward)(x, params))
    assert z.shape == (2, 128)

    # rows must be unit-norm after F.normalize(dim=1)
    norms = jnp.linalg.norm(z, axis=1)
    assert bool(jnp.all(jnp.abs(norms - 1.0) < 1e-3)), norms

    # compare against a pure-JAX f32 reference (bf16 MXU operands -> loose tol)
    z_ref = reference_forward(x, params)
    err = float(jnp.max(jnp.abs(z - z_ref)))
    assert err < 5e-2, f"max abs err vs reference: {err}"

    print("KERNEL_OK")
</pallas_src>

<mosaic_0001>
module attributes {stable_mosaic.version = 11 : i64} {
  func.func @kernel(%arg0: i32, %arg1: memref<1x16x16xf32, #tpu.memory_space<vmem>>, %arg2: memref<48x512xf32, #tpu.memory_space<vmem>>, %arg3: memref<1x512xf32, #tpu.memory_space<vmem>>, %arg4: memref<768x512xbf16, #tpu.memory_space<vmem>>, %arg5: memref<1x512xf32, #tpu.memory_space<vmem>>, %arg6: memref<768x512xbf16, #tpu.memory_space<vmem>>, %arg7: memref<1x512xf32, #tpu.memory_space<vmem>>, %arg8: memref<128x128xbf16, #tpu.memory_space<vmem>>, %arg9: memref<1x128xf32, #tpu.memory_space<vmem>>, %arg10: memref<128x128xbf16, #tpu.memory_space<vmem>>, %arg11: memref<1x128xf32, #tpu.memory_space<vmem>>, %arg12: memref<1x1x128xf32, #tpu.memory_space<vmem>>, %arg13: memref<1x18x16xf32, #tpu.memory_space<vmem>>, %arg14: memref<1x10x256xf32, #tpu.memory_space<vmem>>, %arg15: memref<1x6x256xf32, #tpu.memory_space<vmem>>) attributes {dimension_semantics = [#tpu.dimension_semantics<parallel>], iteration_bounds = array<i64: 2>, scalar_prefetch = 0 : i64, scratch_operands = 3 : i64, tpu.core_type = #tpu.core_type<tc>, window_params = [{transform_indices = @transform_0, window_bounds = array<i64: 1, 16, 16>}, {pipeline_mode = #tpu.pipeline_mode<synchronous>, transform_indices = @transform_1, window_bounds = array<i64: 48, 512>}, {pipeline_mode = #tpu.pipeline_mode<synchronous>, transform_indices = @transform_2, window_bounds = array<i64: 1, 512>}, {pipeline_mode = #tpu.pipeline_mode<synchronous>, transform_indices = @transform_3, window_bounds = array<i64: 768, 512>}, {pipeline_mode = #tpu.pipeline_mode<synchronous>, transform_indices = @transform_4, window_bounds = array<i64: 1, 512>}, {pipeline_mode = #tpu.pipeline_mode<synchronous>, transform_indices = @transform_5, window_bounds = array<i64: 768, 512>}, {pipeline_mode = #tpu.pipeline_mode<synchronous>, transform_indices = @transform_6, window_bounds = array<i64: 1, 512>}, {pipeline_mode = #tpu.pipeline_mode<synchronous>, transform_indices = @transform_7, window_bounds = array<i64: 128, 128>}, {pipeline_mode = #tpu.pipeline_mode<synchronous>, transform_indices = @transform_8, window_bounds = array<i64: 1, 128>}, {pipeline_mode = #tpu.pipeline_mode<synchronous>, transform_indices = @transform_9, window_bounds = array<i64: 128, 128>}, {pipeline_mode = #tpu.pipeline_mode<synchronous>, transform_indices = @transform_10, window_bounds = array<i64: 1, 128>}, {transform_indices = @transform_11, window_bounds = array<i64: 1, 1, 128>}]} {
    %c0 = arith.constant 0 : index
    %c0_0 = arith.constant 0 : index
    %c0_1 = arith.constant 0 : index
    %0 = vector.load %arg1[%c0, %c0_0, %c0_1] : memref<1x16x16xf32, #tpu.memory_space<vmem>>, vector<1x16x16xf32>
    %cst = arith.constant 0.000000e+00 : f32
    %1 = vector.broadcast %cst : f32 to vector<1x18x16xf32>
    %c0_2 = arith.constant 0 : index
    %c0_3 = arith.constant 0 : index
    %c0_4 = arith.constant 0 : index
    %2 = vector.load %arg13[%c0_2, %c0_3, %c0_4] : memref<1x18x16xf32, #tpu.memory_space<vmem>>, vector<1x18x16xf32>
    tpu.vector_store %arg13[%c0_2, %c0_3, %c0_4], %1 {strides = array<i32>} : memref<1x18x16xf32, #tpu.memory_space<vmem>>, vector<1x18x16xf32>,
    %c0_5 = arith.constant 0 : index
    %c1 = arith.constant 1 : index
    %c0_6 = arith.constant 0 : index
    %3 = vector.load %arg13[%c0_5, %c1, %c0_6] : memref<1x18x16xf32, #tpu.memory_space<vmem>>, vector<1x16x16xf32>
    tpu.vector_store %arg13[%c0_5, %c1, %c0_6], %0 {strides = array<i32>} : memref<1x18x16xf32, #tpu.memory_space<vmem>>, vector<1x16x16xf32>,
    %c0_7 = arith.constant 0 : index
    %c0_8 = arith.constant 0 : index
    %c0_9 = arith.constant 0 : index
    %4 = vector.load %arg13[%c0_7, %c0_8, %c0_9] : memref<1x18x16xf32, #tpu.memory_space<vmem>>, vector<1x16x16xf32>
    %5 = vector.shape_cast %4 : vector<1x16x16xf32> to vector<16x16xf32>
    %c0_10 = arith.constant 0 : index
    %c0_11 = arith.constant 0 : index
    %6 = vector.load %arg2[%c0_10, %c0_11] : memref<48x512xf32, #tpu.memory_space<vmem>>, vector<16x512xf32>
    %cst_12 = arith.constant dense<0.000000e+00> : vector<16x512xf32>
    %7 = tpu.matmul %5, %6, %cst_12 {dimension_numbers = #tpu.dot_dimension_numbers<[1], [0], [0], [1], [0, 0, 1, 1], [], []>} : vector<16x16xf32>, vector<16x512xf32>, vector<16x512xf32> -> vector<16x512xf32>
    %c0_13 = arith.constant 0 : index
    %c1_14 = arith.constant 1 : index
    %c0_15 = arith.constant 0 : index
    %8 = vector.load %arg13[%c0_13, %c1_14, %c0_15] : memref<1x18x16xf32, #tpu.memory_space<vmem>>, vector<1x16x16xf32>
    %9 = vector.shape_cast %8 : vector<1x16x16xf32> to vector<16x16xf32>
    %c16 = arith.constant 16 : index
    %c0_16 = arith.constant 0 : index
    %10 = vector.load %arg2[%c16, %c0_16] : memref<48x512xf32, #tpu.memory_space<vmem>>, vector<16x512xf32>
    %cst_17 = arith.constant dense<0.000000e+00> : vector<16x512xf32>
    %11 = tpu.matmul %9, %10, %cst_17 {dimension_numbers = #tpu.dot_dimension_numbers<[1], [0], [0], [1], [0, 0, 1, 1], [], []>} : vector<16x16xf32>, vector<16x512xf32>, vector<16x512xf32> -> vector<16x512xf32>
    %12 = arith.addf %7, %11 : vector<16x512xf32>
    %c0_18 = arith.constant 0 : index
    %c2 = arith.constant 2 : index
    %c0_19 = arith.constant 0 : index
    %13 = vector.load %arg13[%c0_18, %c2, %c0_19] : memref<1x18x16xf32, #tpu.memory_space<vmem>>, vector<1x16x16xf32>
    %14 = vector.shape_cast %13 : vector<1x16x16xf32> to vector<16x16xf32>
    %c32 = arith.constant 32 : index
    %c0_20 = arith.constant 0 : index
    %15 = vector.load %arg2[%c32, %c0_20] : memref<48x512xf32, #tpu.memory_space<vmem>>, vector<16x512xf32>
    %cst_21 = arith.constant dense<0.000000e+00> : vector<16x512xf32>
    %16 = tpu.matmul %14, %15, %cst_21 {dimension_numbers = #tpu.dot_dimension_numbers<[1], [0], [0], [1], [0, 0, 1, 1], [], []>} : vector<16x16xf32>, vector<16x512xf32>, vector<16x512xf32> -> vector<16x512xf32>
    %17 = arith.addf %12, %16 : vector<16x512xf32>
    %c0_22 = arith.constant 0 : index
    %c0_23 = arith.constant 0 : index
    %18 = vector.load %arg3[%c0_22, %c0_23] : memref<1x512xf32, #tpu.memory_space<vmem>>, vector<1x512xf32>
    %19 = vector.broadcast %18 : vector<1x512xf32> to vector<16x512xf32>
    %20 = arith.addf %17, %19 : vector<16x512xf32>
    %cst_24 = arith.constant 0.000000e+00 : f32
    %21 = vector.broadcast %cst_24 : f32 to vector<16x512xf32>
    %22 = arith.maximumf %20, %21 : vector<16x512xf32>
    %23 = vector.shape_cast %22 : vector<16x512xf32> to vector<8x2x512xf32>
    %cst_25 = arith.constant dense<0xFF800000> : vector<8x512xf32>
    %24 = vector.multi_reduction <maximumf>, %23, %cst_25 [1] : vector<8x2x512xf32> to vector<8x512xf32>
    %25 = vector.extract_strided_slice %24 {offsets = [0, 0], sizes = [8, 256], strides = [1, 1]} : vector<8x512xf32> to vector<8x256xf32>
    %26 = vector.extract_strided_slice %24 {offsets = [0, 256], sizes = [8, 256], strides = [1, 1]} : vector<8x512xf32> to vector<8x256xf32>
    %27 = arith.maximumf %25, %26 : vector<8x256xf32>
    %28 = vector.shape_cast %27 : vector<8x256xf32> to vector<1x8x256xf32>
    %cst_26 = arith.constant 0.000000e+00 : f32
    %29 = vector.broadcast %cst_26 : f32 to vector<1x10x256xf32>
    %c0_27 = arith.constant 0 : index
    %c0_28 = arith.constant 0 : index
    %c0_29 = arith.constant 0 : index
    %30 = vector.load %arg14[%c0_27, %c0_28, %c0_29] : memref<1x10x256xf32, #tpu.memory_space<vmem>>, vector<1x10x256xf32>
    tpu.vector_store %arg14[%c0_27, %c0_28, %c0_29], %29 {strides = array<i32>} : memref<1x10x256xf32, #tpu.memory_space<vmem>>, vector<1x10x256xf32>,
    %c0_30 = arith.constant 0 : index
    %c1_31 = arith.constant 1 : index
    %c0_32 = arith.constant 0 : index
    %31 = vector.load %arg14[%c0_30, %c1_31, %c0_32] : memref<1x10x256xf32, #tpu.memory_space<vmem>>, vector<1x8x256xf32>
    tpu.vector_store %arg14[%c0_30, %c1_31, %c0_32], %28 {strides = array<i32>} : memref<1x10x256xf32, #tpu.memory_space<vmem>>, vector<1x8x256xf32>,
    %c0_33 = arith.constant 0 : index
    %c0_34 = arith.constant 0 : index
    %c0_35 = arith.constant 0 : index
    %32 = vector.load %arg14[%c0_33, %c0_34, %c0_35] : memref<1x10x256xf32, #tpu.memory_space<vmem>>, vector<1x8x256xf32>
    %33 = vector.shape_cast %32 : vector<1x8x256xf32> to vector<8x256xf32>
    %34 = arith.truncf %33 : vector<8x256xf32> to vector<8x256xbf16>
    %c0_36 = arith.constant 0 : index
    %c0_37 = arith.constant 0 : index
    %35 = vector.load %arg4[%c0_36, %c0_37] : memref<768x512xbf16, #tpu.memory_space<vmem>>, vector<256x512xbf16>
    %cst_38 = arith.constant dense<0.000000e+00> : vector<8x512xf32>
    %36 = tpu.matmul %34, %35, %cst_38 {dimension_numbers = #tpu.dot_dimension_numbers<[1], [0], [0], [1], [0, 0, 1, 1], [], []>} : vector<8x256xbf16>, vector<256x512xbf16>, vector<8x512xf32> -> vector<8x512xf32>
    %c0_39 = arith.constant 0 : index
    %c1_40 = arith.constant 1 : index
    %c0_41 = arith.constant 0 : index
    %37 = vector.load %arg14[%c0_39, %c1_40, %c0_41] : memref<1x10x256xf32, #tpu.memory_space<vmem>>, vector<1x8x256xf32>
    %38 = vector.shape_cast %37 : vector<1x8x256xf32> to vector<8x256xf32>
    %39 = arith.truncf %38 : vector<8x256xf32> to vector<8x256xbf16>
    %c256 = arith.constant 256 : index
    %c0_42 = arith.constant 0 : index
    %40 = vector.load %arg4[%c256, %c0_42] : memref<768x512xbf16, #tpu.memory_space<vmem>>, vector<256x512xbf16>
    %cst_43 = arith.constant dense<0.000000e+00> : vector<8x512xf32>
    %41 = tpu.matmul %39, %40, %cst_43 {dimension_numbers = #tpu.dot_dimension_numbers<[1], [0], [0], [1], [0, 0, 1, 1], [], []>} : vector<8x256xbf16>, vector<256x512xbf16>, vector<8x512xf32> -> vector<8x512xf32>
    %42 = arith.addf %36, %41 : vector<8x512xf32>
    %c0_44 = arith.constant 0 : index
    %c2_45 = arith.constant 2 : index
    %c0_46 = arith.constant 0 : index
    %43 = vector.load %arg14[%c0_44, %c2_45, %c0_46] : memref<1x10x256xf32, #tpu.memory_space<vmem>>, vector<1x8x256xf32>
    %44 = vector.shape_cast %43 : vector<1x8x256xf32> to vector<8x256xf32>
    %45 = arith.truncf %44 : vector<8x256xf32> to vector<8x256xbf16>
    %c512 = arith.constant 512 : index
    %c0_47 = arith.constant 0 : index
    %46 = vector.load %arg4[%c512, %c0_47] : memref<768x512xbf16, #tpu.memory_space<vmem>>, vector<256x512xbf16>
    %cst_48 = arith.constant dense<0.000000e+00> : vector<8x512xf32>
    %47 = tpu.matmul %45, %46, %cst_48 {dimension_numbers = #tpu.dot_dimension_numbers<[1], [0], [0], [1], [0, 0, 1, 1], [], []>} : vector<8x256xbf16>, vector<256x512xbf16>, vector<8x512xf32> -> vector<8x512xf32>
    %48 = arith.addf %42, %47 : vector<8x512xf32>
    %c0_49 = arith.constant 0 : index
    %c0_50 = arith.constant 0 : index
    %49 = vector.load %arg5[%c0_49, %c0_50] : memref<1x512xf32, #tpu.memory_space<vmem>>, vector<1x512xf32>
    %50 = vector.broadcast %49 : vector<1x512xf32> to vector<8x512xf32>
    %51 = arith.addf %48, %50 : vector<8x512xf32>
    %cst_51 = arith.constant 0.000000e+00 : f32
    %52 = vector.broadcast %cst_51 : f32 to vector<8x512xf32>
    %53 = arith.maximumf %51, %52 : vector<8x512xf32>
    %54 = vector.shape_cast %53 : vector<8x512xf32> to vector<4x2x512xf32>
    %cst_52 = arith.constant dense<0xFF800000> : vector<4x512xf32>
    %55 = vector.multi_reduction <maximumf>, %54, %cst_52 [1] : vector<4x2x512xf32> to vector<4x512xf32>
    %56 = vector.extract_strided_slice %55 {offsets = [0, 0], sizes = [4, 256], strides = [1, 1]} : vector<4x512xf32> to vector<4x256xf32>
    %57 = vector.extract_strided_slice %55 {offsets = [0, 256], sizes = [4, 256], strides = [1, 1]} : vector<4x512xf32> to vector<4x256xf32>
    %58 = arith.maximumf %56, %57 : vector<4x256xf32>
    %59 = vector.shape_cast %58 : vector<4x256xf32> to vector<1x4x256xf32>
    %cst_53 = arith.constant 0.000000e+00 : f32
    %60 = vector.broadcast %cst_53 : f32 to vector<1x6x256xf32>
    %c0_54 = arith.constant 0 : index
    %c0_55 = arith.constant 0 : index
    %c0_56 = arith.constant 0 : index
    %61 = vector.load %arg15[%c0_54, %c0_55, %c0_56] : memref<1x6x256xf32, #tpu.memory_space<vmem>>, vector<1x6x256xf32>
    tpu.vector_store %arg15[%c0_54, %c0_55, %c0_56], %60 {strides = array<i32>} : memref<1x6x256xf32, #tpu.memory_space<vmem>>, vector<1x6x256xf32>,
    %c0_57 = arith.constant 0 : index
    %c1_58 = arith.constant 1 : index
    %c0_59 = arith.constant 0 : index
    %62 = vector.load %arg15[%c0_57, %c1_58, %c0_59] : memref<1x6x256xf32, #tpu.memory_space<vmem>>, vector<1x4x256xf32>
    tpu.vector_store %arg15[%c0_57, %c1_58, %c0_59], %59 {strides = array<i32>} : memref<1x6x256xf32, #tpu.memory_space<vmem>>, vector<1x4x256xf32>,
    %c0_60 = arith.constant 0 : index
    %c0_61 = arith.constant 0 : index
    %c0_62 = arith.constant 0 : index
    %63 = vector.load %arg15[%c0_60, %c0_61, %c0_62] : memref<1x6x256xf32, #tpu.memory_space<vmem>>, vector<1x4x256xf32>
    %64 = vector.shape_cast %63 : vector<1x4x256xf32> to vector<4x256xf32>
    %65 = arith.truncf %64 : vector<4x256xf32> to vector<4x256xbf16>
    %c0_63 = arith.constant 0 : index
    %c0_64 = arith.constant 0 : index
    %66 = vector.load %arg6[%c0_63, %c0_64] : memref<768x512xbf16, #tpu.memory_space<vmem>>, vector<256x512xbf16>
    %cst_65 = arith.constant dense<0.000000e+00> : vector<4x512xf32>
    %67 = tpu.matmul %65, %66, %cst_65 {dimension_numbers = #tpu.dot_dimension_numbers<[1], [0], [0], [1], [0, 0, 1, 1], [], []>} : vector<4x256xbf16>, vector<256x512xbf16>, vector<4x512xf32> -> vector<4x512xf32>
    %c0_66 = arith.constant 0 : index
    %c1_67 = arith.constant 1 : index
    %c0_68 = arith.constant 0 : index
    %68 = vector.load %arg15[%c0_66, %c1_67, %c0_68] : memref<1x6x256xf32, #tpu.memory_space<vmem>>, vector<1x4x256xf32>
    %69 = vector.shape_cast %68 : vector<1x4x256xf32> to vector<4x256xf32>
    %70 = arith.truncf %69 : vector<4x256xf32> to vector<4x256xbf16>
    %c256_69 = arith.constant 256 : index
    %c0_70 = arith.constant 0 : index
    %71 = vector.load %arg6[%c256_69, %c0_70] : memref<768x512xbf16, #tpu.memory_space<vmem>>, vector<256x512xbf16>
    %cst_71 = arith.constant dense<0.000000e+00> : vector<4x512xf32>
    %72 = tpu.matmul %70, %71, %cst_71 {dimension_numbers = #tpu.dot_dimension_numbers<[1], [0], [0], [1], [0, 0, 1, 1], [], []>} : vector<4x256xbf16>, vector<256x512xbf16>, vector<4x512xf32> -> vector<4x512xf32>
    %73 = arith.addf %67, %72 : vector<4x512xf32>
    %c0_72 = arith.constant 0 : index
    %c2_73 = arith.constant 2 : index
    %c0_74 = arith.constant 0 : index
    %74 = vector.load %arg15[%c0_72, %c2_73, %c0_74] : memref<1x6x256xf32, #tpu.memory_space<vmem>>, vector<1x4x256xf32>
    %75 = vector.shape_cast %74 : vector<1x4x256xf32> to vector<4x256xf32>
    %76 = arith.truncf %75 : vector<4x256xf32> to vector<4x256xbf16>
    %c512_75 = arith.constant 512 : index
    %c0_76 = arith.constant 0 : index
    %77 = vector.load %arg6[%c512_75, %c0_76] : memref<768x512xbf16, #tpu.memory_space<vmem>>, vector<256x512xbf16>
    %cst_77 = arith.constant dense<0.000000e+00> : vector<4x512xf32>
    %78 = tpu.matmul %76, %77, %cst_77 {dimension_numbers = #tpu.dot_dimension_numbers<[1], [0], [0], [1], [0, 0, 1, 1], [], []>} : vector<4x256xbf16>, vector<256x512xbf16>, vector<4x512xf32> -> vector<4x512xf32>
    %79 = arith.addf %73, %78 : vector<4x512xf32>
    %c0_78 = arith.constant 0 : index
    %c0_79 = arith.constant 0 : index
    %80 = vector.load %arg7[%c0_78, %c0_79] : memref<1x512xf32, #tpu.memory_space<vmem>>, vector<1x512xf32>
    %81 = vector.broadcast %80 : vector<1x512xf32> to vector<4x512xf32>
    %82 = arith.addf %79, %81 : vector<4x512xf32>
    %cst_80 = arith.constant 0.000000e+00 : f32
    %83 = vector.broadcast %cst_80 : f32 to vector<4x512xf32>
    %84 = arith.maximumf %82, %83 : vector<4x512xf32>
    %85 = vector.shape_cast %84 : vector<4x512xf32> to vector<1x4x512xf32>
    %cst_81 = arith.constant dense<0.000000e+00> : vector<1x512xf32>
    %86 = vector.multi_reduction <add>, %85, %cst_81 [1] : vector<1x4x512xf32> to vector<1x512xf32>
    %87 = vector.extract_strided_slice %86 {offsets = [0, 0], sizes = [1, 128], strides = [1, 1]} : vector<1x512xf32> to vector<1x128xf32>
    %88 = vector.extract_strided_slice %86 {offsets = [0, 128], sizes = [1, 128], strides = [1, 1]} : vector<1x512xf32> to vector<1x128xf32>
    %89 = arith.addf %87, %88 : vector<1x128xf32>
    %90 = vector.extract_strided_slice %86 {offsets = [0, 256], sizes = [1, 128], strides = [1, 1]} : vector<1x512xf32> to vector<1x128xf32>
    %91 = arith.addf %89, %90 : vector<1x128xf32>
    %92 = vector.extract_strided_slice %86 {offsets = [0, 384], sizes = [1, 128], strides = [1, 1]} : vector<1x512xf32> to vector<1x128xf32>
    %93 = arith.addf %91, %92 : vector<1x128xf32>
    %cst_82 = arith.constant 6.250000e-02 : f32
    %94 = vector.broadcast %cst_82 : f32 to vector<1x128xf32>
    %95 = arith.mulf %93, %94 : vector<1x128xf32>
    %96 = arith.truncf %95 : vector<1x128xf32> to vector<1x128xbf16>
    %c0_83 = arith.constant 0 : index
    %c0_84 = arith.constant 0 : index
    %97 = vector.load %arg8[%c0_83, %c0_84] : memref<128x128xbf16, #tpu.memory_space<vmem>>, vector<128x128xbf16>
    %cst_85 = arith.constant dense<0.000000e+00> : vector<1x128xf32>
    %98 = tpu.matmul %96, %97, %cst_85 {dimension_numbers = #tpu.dot_dimension_numbers<[1], [0], [0], [1], [0, 0, 1, 1], [], []>} : vector<1x128xbf16>, vector<128x128xbf16>, vector<1x128xf32> -> vector<1x128xf32>
    %c0_86 = arith.constant 0 : index
    %c0_87 = arith.constant 0 : index
    %99 = vector.load %arg9[%c0_86, %c0_87] : memref<1x128xf32, #tpu.memory_space<vmem>>, vector<1x128xf32>
    %100 = arith.addf %98, %99 : vector<1x128xf32>
    %cst_88 = arith.constant 0.000000e+00 : f32
    %101 = vector.broadcast %cst_88 : f32 to vector<1x128xf32>
    %102 = arith.maximumf %100, %101 : vector<1x128xf32>
    %103 = arith.truncf %102 : vector<1x128xf32> to vector<1x128xbf16>
    %c0_89 = arith.constant 0 : index
    %c0_90 = arith.constant 0 : index
    %104 = vector.load %arg10[%c0_89, %c0_90] : memref<128x128xbf16, #tpu.memory_space<vmem>>, vector<128x128xbf16>
    %cst_91 = arith.constant dense<0.000000e+00> : vector<1x128xf32>
    %105 = tpu.matmul %103, %104, %cst_91 {dimension_numbers = #tpu.dot_dimension_numbers<[1], [0], [0], [1], [0, 0, 1, 1], [], []>} : vector<1x128xbf16>, vector<128x128xbf16>, vector<1x128xf32> -> vector<1x128xf32>
    %c0_92 = arith.constant 0 : index
    %c0_93 = arith.constant 0 : index
    %106 = vector.load %arg11[%c0_92, %c0_93] : memref<1x128xf32, #tpu.memory_space<vmem>>, vector<1x128xf32>
    %107 = arith.addf %105, %106 : vector<1x128xf32>
    %108 = arith.mulf %107, %107 : vector<1x128xf32>
    %cst_94 = arith.constant dense<0.000000e+00> : vector<1xf32>
    %109 = vector.multi_reduction <add>, %108, %cst_94 [1] : vector<1x128xf32> to vector<1xf32>
    %110 = vector.shape_cast %109 : vector<1xf32> to vector<1x1xf32>
    %cst_95 = arith.constant 1.000000e-24 : f32
    %111 = vector.broadcast %cst_95 : f32 to vector<1x1xf32>
    %112 = arith.maximumf %110, %111 : vector<1x1xf32>
    %113 = math.rsqrt %112 : vector<1x1xf32>
    %cst_96 = arith.constant 5.000000e-01 : f32
    %114 = vector.broadcast %cst_96 : f32 to vector<1x1xf32>
    %115 = arith.mulf %114, %112 : vector<1x1xf32>
    %116 = arith.mulf %115, %113 : vector<1x1xf32>
    %117 = arith.mulf %116, %113 : vector<1x1xf32>
    %cst_97 = arith.constant 1.500000e+00 : f32
    %118 = vector.broadcast %cst_97 : f32 to vector<1x1xf32>
    %119 = arith.subf %118, %117 : vector<1x1xf32>
    %120 = arith.mulf %113, %119 : vector<1x1xf32>
    %121 = vector.broadcast %120 : vector<1x1xf32> to vector<1x128xf32>
    %122 = arith.mulf %107, %121 : vector<1x128xf32>
    %c0_98 = arith.constant 0 : index
    %c0_99 = arith.constant 0 : index
    %c0_100 = arith.constant 0 : index
    %123 = vector.load %arg12[%c0_98, %c0_99, %c0_100] : memref<1x1x128xf32, #tpu.memory_space<vmem>>, vector<1x1x128xf32>
    %124 = vector.shape_cast %123 : vector<1x1x128xf32> to vector<1x128xf32>
    %125 = vector.shape_cast %122 : vector<1x128xf32> to vector<1x1x128xf32>
    tpu.vector_store %arg12[%c0_98, %c0_99, %c0_100], %125 {strides = array<i32>} : memref<1x1x128xf32, #tpu.memory_space<vmem>>, vector<1x1x128xf32>,
    return
  }
  func.func @transform_0(%arg0: i32) -> (i32, i32, i32) {
    %c0_i32 = arith.constant 0 : i32
    %c0_i32_0 = arith.constant 0 : i32
    %c0_i32_1 = arith.constant 0 : i32
    return %arg0, %c0_i32, %c0_i32_0 : i32, i32, i32
  }
  func.func @transform_1(%arg0: i32) -> (i32, i32) {
    %c0_i32 = arith.constant 0 : i32
    %c0_i32_0 = arith.constant 0 : i32
    %c0_i32_1 = arith.constant 0 : i32
    return %c0_i32, %c0_i32_0 : i32, i32
  }
  func.func @transform_2(%arg0: i32) -> (i32, i32) {
    %c0_i32 = arith.constant 0 : i32
    %c0_i32_0 = arith.constant 0 : i32
    %c0_i32_1 = arith.constant 0 : i32
    return %c0_i32, %c0_i32_0 : i32, i32
  }
  func.func @transform_3(%arg0: i32) -> (i32, i32) {
    %c0_i32 = arith.constant 0 : i32
    %c0_i32_0 = arith.constant 0 : i32
    %c0_i32_1 = arith.constant 0 : i32
    return %c0_i32, %c0_i32_0 : i32, i32
  }
  func.func @transform_4(%arg0: i32) -> (i32, i32) {
    %c0_i32 = arith.constant 0 : i32
    %c0_i32_0 = arith.constant 0 : i32
    %c0_i32_1 = arith.constant 0 : i32
    return %c0_i32, %c0_i32_0 : i32, i32
  }
  func.func @transform_5(%arg0: i32) -> (i32, i32) {
    %c0_i32 = arith.constant 0 : i32
    %c0_i32_0 = arith.constant 0 : i32
    %c0_i32_1 = arith.constant 0 : i32
    return %c0_i32, %c0_i32_0 : i32, i32
  }
  func.func @transform_6(%arg0: i32) -> (i32, i32) {
    %c0_i32 = arith.constant 0 : i32
    %c0_i32_0 = arith.constant 0 : i32
    %c0_i32_1 = arith.constant 0 : i32
    return %c0_i32, %c0_i32_0 : i32, i32
  }
  func.func @transform_7(%arg0: i32) -> (i32, i32) {
    %c0_i32 = arith.constant 0 : i32
    %c0_i32_0 = arith.constant 0 : i32
    %c0_i32_1 = arith.constant 0 : i32
    return %c0_i32, %c0_i32_0 : i32, i32
  }
  func.func @transform_8(%arg0: i32) -> (i32, i32) {
    %c0_i32 = arith.constant 0 : i32
    %c0_i32_0 = arith.constant 0 : i32
    %c0_i32_1 = arith.constant 0 : i32
    return %c0_i32, %c0_i32_0 : i32, i32
  }
  func.func @transform_9(%arg0: i32) -> (i32, i32) {
    %c0_i32 = arith.constant 0 : i32
    %c0_i32_0 = arith.constant 0 : i32
    %c0_i32_1 = arith.constant 0 : i32
    return %c0_i32, %c0_i32_0 : i32, i32
  }
  func.func @transform_10(%arg0: i32) -> (i32, i32) {
    %c0_i32 = arith.constant 0 : i32
    %c0_i32_0 = arith.constant 0 : i32
    %c0_i32_1 = arith.constant 0 : i32
    return %c0_i32, %c0_i32_0 : i32, i32
  }
  func.func @transform_11(%arg0: i32) -> (i32, i32, i32) {
    %c0_i32 = arith.constant 0 : i32
    %c0_i32_0 = arith.constant 0 : i32
    %c0_i32_1 = arith.constant 0 : i32
    return %arg0, %c0_i32, %c0_i32_0 : i32, i32, i32
  }
}

</mosaic_0001>

<llo_original>
// kernel: tile.18
$region0: #{tile.18}
  #allocation0 [shape = 's32[1]{0}', space=sflag, size = 0x4, scoped, tag = 'scoped memory for tile.18']
  %s0 = inlined_call_operand.vmem [shape: f32[32], index: 0, kind: input, shape index: {}]
  %s1 = inlined_call_operand.vmem [shape: f32[16,32], index: 1, kind: output, shape index: {}]
  // Predicated region
  $region2: #{tile.18} parent=0 // pred_check
    _
  $region3: #{tile.18} parent=0 // pred_check_branch
    %3 = sbr.rel (0) target = $region5
  $region4: #{tile.18} parent=0 // pred_region
    _
  $region5: #{tile.18} parent=0 // pred_fallthru
    _
  %v4 = vld [vmem:[%s0] ss:$0 sm:$0xff]
  %5 = vst [vmem:[%s1] sm:$0xff] %v4
  %s6 = scalar_lea.vmem %s1, 8
  %7 = vst [vmem:[%s6] sm:$0xff] %v4

// kernel: tile.19
$region0: #{tile.19}
  %s0 = inlined_call_operand.vmem [shape: f32[16,32], index: 0, kind: input, shape index: {}]
  %s1 = inlined_call_operand.vmem [shape: f32[1,512], index: 1, kind: output, shape index: {}]
  $region1: #{tile.19} parent=0
    #allocation0 [shape = 'u8[16384]{0}', space=vmem, size = 0x4000, scoped, tag = 'scoped mem for output reshape']
    %v2 = vld [vmem:[%s0] ss:$4 sm:$0xf]
    %vm3 = vcmask 261120
    %4 = vst.msk [vmem:[#allocation0] ss:$8 sm:$0xf] %vm3, %v2
    %s5 = scalar_lea.vmem %s0, 3
    %v6 = vld [vmem:[%s5] ss:$4 sm:$0xf]
    %7 = vrot.lane.b32.xlu0 %v6, 96
    %v8 = vpop.permute.xlu0 %7
    %vm9 = vcmask 1048320
    %10 = vst.msk [vmem:[#allocation0] ss:$8 sm:$0xf] %vm9, %v8
    %s11 = scalar_lea.vmem %s0, 2
    %v12 = vld [vmem:[%s11] ss:$4 sm:$0xf]
    %13 = vrot.lane.b32.xlu0 %v12, 64
    %v14 = vpop.permute.xlu0 %13
    %vm15 = vcmask 785920
    %16 = vst.msk [vmem:[#allocation0] ss:$8 sm:$0xf] %vm15, %v14
    %s17 = scalar_lea.vmem %s0, 1
    %v18 = vld [vmem:[%s17] ss:$4 sm:$0xf]
    %19 = vrot.lane.b32.xlu0 %v18, 32
    %v20 = vpop.permute.xlu0 %19
    %vm21 = vcmask 523520
    %22 = vst.msk [vmem:[#allocation0] ss:$8 sm:$0xf] %vm21, %v20
    %s24 = sshllo.u32 0, 1
    %v26 = vld [vmem:[#allocation0] sm:%s24]
    %s27 = sshllo.u32 0, 1
    %28 = vst [vmem:[%s1] sm:%s27] %v26
    %s29 = scalar_lea.vmem [#allocation0], 8
    %v30 = vld [vmem:[%s29] sm:%s24]
    %s31 = sshllo.u32 0, 1
    %s32 = scalar_lea.vmem %s1, 1
    %33 = vst [vmem:[%s32] sm:%s31] %v30
    %s34 = scalar_lea.vmem [#allocation0], 16
    %v35 = vld [vmem:[%s34] sm:%s24]
    %s36 = sshllo.u32 0, 1
    %s37 = smul.addr 1, 2
    %s38 = scalar_lea.vmem %s1, %s37
    %39 = vst [vmem:[%s38] sm:%s36] %v35
    %s40 = scalar_lea.vmem [#allocation0], 24
    %v41 = vld [vmem:[%s40] sm:%s24]
    %s42 = sshllo.u32 0, 1
    %s43 = smul.addr 1, 3
    %s44 = scalar_lea.vmem %s1, %s43
    %45 = vst [vmem:[%s44] sm:%s42] %v41

// kernel: tile.23
$region0: #{tile.23}
  #allocation0 [shape = 's32[1]{0}', space=sflag, size = 0x4, scoped, tag = 'scoped memory for tile.23']
  %s0 = inlined_call_operand.vmem [shape: f32[64], index: 0, kind: input, shape index: {}]
  %s1 = inlined_call_operand.vmem [shape: f32[8,64], index: 1, kind: output, shape index: {}]
  // Predicated region
  $region2: #{tile.23} parent=0 // pred_check
    _
  $region3: #{tile.23} parent=0 // pred_check_branch
    %3 = sbr.rel (0) target = $region5
  $region4: #{tile.23} parent=0 // pred_region
    _
  $region5: #{tile.23} parent=0 // pred_fallthru
    _
  %v4 = vld [vmem:[%s0] ss:$0 sm:$0xff]
  %5 = vst [vmem:[%s1] sm:$0xff] %v4

// kernel: tile.24
$region0: #{tile.24}
  %s0 = inlined_call_operand.vmem [shape: f32[8,64], index: 0, kind: input, shape index: {}]
  %s1 = inlined_call_operand.vmem [shape: f32[1,512], index: 1, kind: output, shape index: {}]
  $region1: #{tile.24} parent=0
    #allocation0 [shape = 'u8[16384]{0}', space=vmem, size = 0x4000, scoped, tag = 'scoped mem for output reshape']
    %v2 = vld [vmem:[%s0] ss:$2 sm:$0xf]
    %vm3 = vcmask 523264
    %4 = vst.msk [vmem:[#allocation0] ss:$8 sm:$0xf] %vm3, %v2
    %s5 = scalar_lea.vmem %s0, 1
    %v6 = vld [vmem:[%s5] ss:$2 sm:$0xf]
    %7 = vrot.lane.b32.xlu0 %v6, 64
    %v8 = vpop.permute.xlu0 %7
    %vm9 = vcmask 1048064
    %10 = vst.msk [vmem:[#allocation0] ss:$8 sm:$0xf] %vm9, %v8
    %s12 = sshllo.u32 0, 1
    %v14 = vld [vmem:[#allocation0] sm:%s12]
    %s15 = sshllo.u32 0, 1
    %16 = vst [vmem:[%s1] sm:%s15] %v14
    %s17 = scalar_lea.vmem [#allocation0], 8
    %v18 = vld [vmem:[%s17] sm:%s12]
    %s19 = sshllo.u32 0, 1
    %s20 = scalar_lea.vmem %s1, 1
    %21 = vst [vmem:[%s20] sm:%s19] %v18
    %s22 = scalar_lea.vmem [#allocation0], 16
    %v23 = vld [vmem:[%s22] sm:%s12]
    %s24 = sshllo.u32 0, 1
    %s25 = smul.addr 1, 2
    %s26 = scalar_lea.vmem %s1, %s25
    %27 = vst [vmem:[%s26] sm:%s24] %v23
    %s28 = scalar_lea.vmem [#allocation0], 24
    %v29 = vld [vmem:[%s28] sm:%s12]
    %s30 = sshllo.u32 0, 1
    %s31 = smul.addr 1, 3
    %s32 = scalar_lea.vmem %s1, %s31
    %33 = vst [vmem:[%s32] sm:%s30] %v29

// kernel: tile.28
$region0: #{tile.28}
  #allocation0 [shape = 's32[1]{0}', space=sflag, size = 0x4, scoped, tag = 'scoped memory for tile.28']
  %s0 = inlined_call_operand.vmem [shape: f32[128], index: 0, kind: input, shape index: {}]
  %s1 = inlined_call_operand.vmem [shape: f32[4,128], index: 1, kind: output, shape index: {}]
  // Predicated region
  $region2: #{tile.28} parent=0 // pred_check
    _
  $region3: #{tile.28} parent=0 // pred_check_branch
    %3 = sbr.rel (0) target = $region5
  $region4: #{tile.28} parent=0 // pred_region
    _
  $region5: #{tile.28} parent=0 // pred_fallthru
    _
  %v4 = vld [vmem:[%s0] ss:$0 sm:$0xff]
  %5 = vst [vmem:[%s1] sm:$0xf] %v4

// kernel: contrastive_forward.1
$region0: #{contrastive_forward.1}
  #allocation0 [shape = 'u32[]', space=smem, size = 0x4, offset = 0x4, fixed_abs, tag = 'smem constant byte address 0x4 - core index']
  #allocation1 [shape = 'u32[144,128]{1,0:T(1,128)}', space=vmem, size = 0x12000, scoped, tag = 'internal scratch']
  #allocation2 [shape = 'f32[1,18,16]{2,1,0:T(8,128)}', space=vmem, size = 0x3000, scoped, tag = 'scratch operand']
  #allocation3 [shape = 'f32[1,10,256]{2,1,0:T(8,128)}', space=vmem, size = 0x4000, scoped, tag = 'scratch operand']
  #allocation4 [shape = 'f32[1,6,256]{2,1,0:T(8,128)}', space=vmem, size = 0x2000, scoped, tag = 'scratch operand']
  %s0 = inlined_call_operand.vmem [shape: f32[2,16,16], index: 0, kind: input, shape index: {}]
  %s1 = inlined_call_operand.vmem [shape: f32[48,512], index: 1, kind: input, shape index: {}]
  %s2 = inlined_call_operand.vmem [shape: f32[1,512], index: 2, kind: input, shape index: {}]
  %s3 = inlined_call_operand.vmem [shape: bf16[768,512], index: 3, kind: input, shape index: {}]
  %s4 = inlined_call_operand.vmem [shape: f32[1,512], index: 4, kind: input, shape index: {}]
  %s5 = inlined_call_operand.vmem [shape: bf16[768,512], index: 5, kind: input, shape index: {}]
  %s6 = inlined_call_operand.vmem [shape: f32[1,512], index: 6, kind: input, shape index: {}]
  %s7 = inlined_call_operand.vmem [shape: bf16[128,128], index: 7, kind: input, shape index: {}]
  %s8 = inlined_call_operand.vmem [shape: f32[1,128], index: 8, kind: input, shape index: {}]
  %s9 = inlined_call_operand.vmem [shape: bf16[128,128], index: 9, kind: input, shape index: {}]
  %s10 = inlined_call_operand.vmem [shape: f32[1,128], index: 10, kind: input, shape index: {}]
  %s11 = inlined_call_operand.hbm [shape: f32[2,1,128], index: 11, kind: output, shape index: {}]
  %s12 = sld [smem:[#allocation0]]
  $region77: #{contrastive_forward.1} parent=0
    _
  %s14 = ssub.s32 1, %s12
  %s15 = scalar_select 0, %s14, %s12
  $region1: #{contrastive_forward.1} parent=0
    #allocation5 [shape = 'u8[1024]{0}', space=vmem, size = 0x400, scoped, tag = 'output window, operand 0']
    #allocation6 [shape = 's32[2]{0}', space=sflag, size = 0x8, scoped, tag = 'scoped memory for contrastive_forward.1']
    %16 = vsyncpa [#allocation6], 0
    %s17 = scalar_lea.sflag [#allocation6], 1
    %18 = vsyncpa %s17, 0
    loop: start=0, step=1, limit=4
    $region2: #{contrastive_forward.1} parent=1 // loop_pre_header
      _
    $region3: #{contrastive_forward.1} parent=1 // loop_header
      %s20 = sphi 0, %s24
      %p21 = scmp.ge.s32.totalorder %s20, 4
      %s30 = sphi 0, %s32
      %s33 = sphi 0, %s30
      %s34 = sphi 0, %s33
      %s50 = sphi 0, %s34
      %s54 = sphi 0, %s54
      %s56 = sphi 0, %s54
      %s57 = sphi 0, %s56
      %s71 = sphi 0, %s57
      %s75 = sphi 0, %s75
      %s77 = sphi 0, %s75
      %s78 = sphi 0, %s77
      %s92 = sphi 0, %s78
      %s96 = sphi 0, %s96
      %s98 = sphi 0, %s96
      %s99 = sphi 0, %s98
      %s113 = sphi 0, %s99
      %s117 = sphi 0, %s117
      %s119 = sphi 0, %s117
      %s120 = sphi 0, %s119
      %s134 = sphi 0, %s120
      %s138 = sphi 0, %s138
      %s140 = sphi 0, %s138
      %s141 = sphi 0, %s140
      %s155 = sphi 0, %s141
      %s159 = sphi 0, %s159
      %s161 = sphi 0, %s159
      %s162 = sphi 0, %s161
      %s176 = sphi 0, %s162
      %s180 = sphi 0, %s180
      %s182 = sphi 0, %s180
      %s183 = sphi 0, %s182
      %s197 = sphi 0, %s183
      %s201 = sphi 0, %s201
      %s203 = sphi 0, %s201
      %s204 = sphi 0, %s203
      %s218 = sphi 0, %s204
      %s222 = sphi 0, %s222
      %s224 = sphi 0, %s222
      %s225 = sphi 0, %s224
      %s239 = sphi 0, %s225
      %s243 = sphi 0, %s243
      %s245 = sphi 0, %s243
      %s246 = sphi 0, %s245
      %s260 = sphi 0, %s246
      %s266 = sphi 0, %s268
      %s269 = sphi 0, %s266
      %s270 = sphi 0, %s269
      %s286 = sphi 0, %s270
    $region4: #{contrastive_forward.1} parent=1 // loop_header_branch
      %23 = sbr.rel (%p21) target = $region8
    $region5: #{contrastive_forward.1} parent=1 // loop_body
      %s25 = ssub.s32 %s20, 1
      %s26 = ssub.s32 %s20, 2
      %s27 = sadd.s32 %s20, 1
      %s28 = ssub.s32 %s20, %s27
      %p29 = scmp.eq.s32.totalorder %s28, 0
      %s31 = sadd.s32 %s30, 1
      %s32 = scalar_select %p29, %s30, %s31
      %p35 = pneg %p29
      %p36 = scmp.eq.s32.totalorder %s20, 1
      %p37 = por %p35, %p36
      %p38 = scmp.ne.s32.totalorder %s30, %s33
      %p39 = scmp.eq.s32.totalorder %s20, 0
      %p40 = por %p38, %p39
      %p41 = scmp.ne.s32.totalorder %s30, %s33
      %p42 = scmp.eq.s32.totalorder %s25, 1
      %p43 = por %p41, %p42
      %p44 = scmp.ne.s32.totalorder %s33, %s34
      %p45 = scmp.eq.s32.totalorder %s25, 0
      %p46 = por %p44, %p45
      %p47 = scmp.ne.s32.totalorder %s33, %s34
      %p48 = scmp.eq.s32.totalorder %s26, 1
      %p49 = por %p47, %p48
      %p51 = scmp.ne.s32.totalorder %s34, %s50
      %p52 = scmp.eq.s32.totalorder %s26, 0
      %p53 = por %p51, %p52
      %s55 = sadd.s32 %s54, 1
      %p58 = scmp.eq.s32.totalorder %s20, 1
      %p59 = scmp.ne.s32.totalorder %s54, %s56
      %p60 = scmp.eq.s32.totalorder %s20, 0
      %p61 = por %p59, %p60
      %p62 = scmp.ne.s32.totalorder %s54, %s56
      %p63 = scmp.eq.s32.totalorder %s25, 1
      %p64 = por %p62, %p63
      %p65 = scmp.ne.s32.totalorder %s56, %s57
      %p66 = scmp.eq.s32.totalorder %s25, 0
      %p67 = por %p65, %p66
      %p68 = scmp.ne.s32.totalorder %s56, %s57
      %p69 = scmp.eq.s32.totalorder %s26, 1
      %p70 = por %p68, %p69
      %p72 = scmp.ne.s32.totalorder %s57, %s71
      %p73 = scmp.eq.s32.totalorder %s26, 0
      %p74 = por %p72, %p73
      %s76 = sadd.s32 %s75, 1
      %p79 = scmp.eq.s32.totalorder %s20, 1
      %p80 = scmp.ne.s32.totalorder %s75, %s77
      %p81 = scmp.eq.s32.totalorder %s20, 0
      %p82 = por %p80, %p81
      %p83 = scmp.ne.s32.totalorder %s75, %s77
      %p84 = scmp.eq.s32.totalorder %s25, 1
      %p85 = por %p83, %p84
      %p86 = scmp.ne.s32.totalorder %s77, %s78
      %p87 = scmp.eq.s32.totalorder %s25, 0
      %p88 = por %p86, %p87
      %p89 = scmp.ne.s32.totalorder %s77, %s78
      %p90 = scmp.eq.s32.totalorder %s26, 1
      %p91 = por %p89, %p90
      %p93 = scmp.ne.s32.totalorder %s78, %s92
      %p94 = scmp.eq.s32.totalorder %s26, 0
      %p95 = por %p93, %p94
      %s97 = sadd.s32 %s96, 1
      %p100 = scmp.eq.s32.totalorder %s20, 1
      %p101 = scmp.ne.s32.totalorder %s96, %s98
      %p102 = scmp.eq.s32.totalorder %s20, 0
      %p103 = por %p101, %p102
      %p104 = scmp.ne.s32.totalorder %s96, %s98
      %p105 = scmp.eq.s32.totalorder %s25, 1
      %p106 = por %p104, %p105
      %p107 = scmp.ne.s32.totalorder %s98, %s99
      %p108 = scmp.eq.s32.totalorder %s25, 0
      %p109 = por %p107, %p108
      %p110 = scmp.ne.s32.totalorder %s98, %s99
      %p111 = scmp.eq.s32.totalorder %s26, 1
      %p112 = por %p110, %p111
      %p114 = scmp.ne.s32.totalorder %s99, %s113
      %p115 = scmp.eq.s32.totalorder %s26, 0
      %p116 = por %p114, %p115
      %s118 = sadd.s32 %s117, 1
      %p121 = scmp.eq.s32.totalorder %s20, 1
      %p122 = scmp.ne.s32.totalorder %s117, %s119
      %p123 = scmp.eq.s32.totalorder %s20, 0
      %p124 = por %p122, %p123
      %p125 = scmp.ne.s32.totalorder %s117, %s119
      %p126 = scmp.eq.s32.totalorder %s25, 1
      %p127 = por %p125, %p126
      %p128 = scmp.ne.s32.totalorder %s119, %s120
      %p129 = scmp.eq.s32.totalorder %s25, 0
      %p130 = por %p128, %p129
      %p131 = scmp.ne.s32.totalorder %s119, %s120
      %p132 = scmp.eq.s32.totalorder %s26, 1
      %p133 = por %p131, %p132
      %p135 = scmp.ne.s32.totalorder %s120, %s134
      %p136 = scmp.eq.s32.totalorder %s26, 0
      %p137 = por %p135, %p136
      %s139 = sadd.s32 %s138, 1
      %p142 = scmp.eq.s32.totalorder %s20, 1
      %p143 = scmp.ne.s32.totalorder %s138, %s140
      %p144 = scmp.eq.s32.totalorder %s20, 0
      %p145 = por %p143, %p144
      %p146 = scmp.ne.s32.totalorder %s138, %s140
      %p147 = scmp.eq.s32.totalorder %s25, 1
      %p148 = por %p146, %p147
      %p149 = scmp.ne.s32.totalorder %s140, %s141
      %p150 = scmp.eq.s32.totalorder %s25, 0
      %p151 = por %p149, %p150
      %p152 = scmp.ne.s32.totalorder %s140, %s141
      %p153 = scmp.eq.s32.totalorder %s26, 1
      %p154 = por %p152, %p153
      %p156 = scmp.ne.s32.totalorder %s141, %s155
      %p157 = scmp.eq.s32.totalorder %s26, 0
      %p158 = por %p156, %p157
      %s160 = sadd.s32 %s159, 1
      %p163 = scmp.eq.s32.totalorder %s20, 1
      %p164 = scmp.ne.s32.totalorder %s159, %s161
      %p165 = scmp.eq.s32.totalorder %s20, 0
      %p166 = por %p164, %p165
      %p167 = scmp.ne.s32.totalorder %s159, %s161
      %p168 = scmp.eq.s32.totalorder %s25, 1
      %p169 = por %p167, %p168
      %p170 = scmp.ne.s32.totalorder %s161, %s162
      %p171 = scmp.eq.s32.totalorder %s25, 0
      %p172 = por %p170, %p171
      %p173 = scmp.ne.s32.totalorder %s161, %s162
      %p174 = scmp.eq.s32.totalorder %s26, 1
      %p175 = por %p173, %p174
      %p177 = scmp.ne.s32.totalorder %s162, %s176
      %p178 = scmp.eq.s32.totalorder %s26, 0
      %p179 = por %p177, %p178
      %s181 = sadd.s32 %s180, 1
      %p184 = scmp.eq.s32.totalorder %s20, 1
      %p185 = scmp.ne.s32.totalorder %s180, %s182
      %p186 = scmp.eq.s32.totalorder %s20, 0
      %p187 = por %p185, %p186
      %p188 = scmp.ne.s32.totalorder %s180, %s182
      %p189 = scmp.eq.s32.totalorder %s25, 1
      %p190 = por %p188, %p189
      %p191 = scmp.ne.s32.totalorder %s182, %s183
      %p192 = scmp.eq.s32.totalorder %s25, 0
      %p193 = por %p191, %p192
      %p194 = scmp.ne.s32.totalorder %s182, %s183
      %p195 = scmp.eq.s32.totalorder %s26, 1
      %p196 = por %p194, %p195
      %p198 = scmp.ne.s32.totalorder %s183, %s197
      %p199 = scmp.eq.s32.totalorder %s26, 0
      %p200 = por %p198, %p199
      %s202 = sadd.s32 %s201, 1
      %p205 = scmp.eq.s32.totalorder %s20, 1
      %p206 = scmp.ne.s32.totalorder %s201, %s203
      %p207 = scmp.eq.s32.totalorder %s20, 0
      %p208 = por %p206, %p207
      %p209 = scmp.ne.s32.totalorder %s201, %s203
      %p210 = scmp.eq.s32.totalorder %s25, 1
      %p211 = por %p209, %p210
      %p212 = scmp.ne.s32.totalorder %s203, %s204
      %p213 = scmp.eq.s32.totalorder %s25, 0
      %p214 = por %p212, %p213
      %p215 = scmp.ne.s32.totalorder %s203, %s204
      %p216 = scmp.eq.s32.totalorder %s26, 1
      %p217 = por %p215, %p216
      %p219 = scmp.ne.s32.totalorder %s204, %s218
      %p220 = scmp.eq.s32.totalorder %s26, 0
      %p221 = por %p219, %p220
      %s223 = sadd.s32 %s222, 1
      %p226 = scmp.eq.s32.totalorder %s20, 1
      %p227 = scmp.ne.s32.totalorder %s222, %s224
      %p228 = scmp.eq.s32.totalorder %s20, 0
      %p229 = por %p227, %p228
      %p230 = scmp.ne.s32.totalorder %s222, %s224
      %p231 = scmp.eq.s32.totalorder %s25, 1
      %p232 = por %p230, %p231
      %p233 = scmp.ne.s32.totalorder %s224, %s225
      %p234 = scmp.eq.s32.totalorder %s25, 0
      %p235 = por %p233, %p234
      %p236 = scmp.ne.s32.totalorder %s224, %s225
      %p237 = scmp.eq.s32.totalorder %s26, 1
      %p238 = por %p236, %p237
      %p240 = scmp.ne.s32.totalorder %s225, %s239
      %p241 = scmp.eq.s32.totalorder %s26, 0
      %p242 = por %p240, %p241
      %s244 = sadd.s32 %s243, 1
      %p247 = scmp.eq.s32.totalorder %s20, 1
      %p248 = scmp.ne.s32.totalorder %s243, %s245
      %p249 = scmp.eq.s32.totalorder %s20, 0
      %p250 = por %p248, %p249
      %p251 = scmp.ne.s32.totalorder %s243, %s245
      %p252 = scmp.eq.s32.totalorder %s25, 1
      %p253 = por %p251, %p252
      %p254 = scmp.ne.s32.totalorder %s245, %s246
      %p255 = scmp.eq.s32.totalorder %s25, 0
      %p256 = por %p254, %p255
      %p257 = scmp.ne.s32.totalorder %s245, %s246
      %p258 = scmp.eq.s32.totalorder %s26, 1
      %p259 = por %p257, %p258
      %p261 = scmp.ne.s32.totalorder %s246, %s260
      %p262 = scmp.eq.s32.totalorder %s26, 0
      %p263 = por %p261, %p262
      %s264 = ssub.s32 %s20, %s27
      %p265 = scmp.eq.s32.totalorder %s264, 0
      %s267 = sadd.s32 %s266, 1
      %s268 = scalar_select %p265, %s266, %s267
      %p271 = pneg %p265
      %p272 = scmp.eq.s32.totalorder %s20, 1
      %p273 = por %p271, %p272
      %p274 = scmp.ne.s32.totalorder %s266, %s269
      %p275 = scmp.eq.s32.totalorder %s20, 0
      %p276 = por %p274, %p275
      %p277 = scmp.ne.s32.totalorder %s266, %s269
      %p278 = scmp.eq.s32.totalorder %s25, 1
      %p279 = por %p277, %p278
      %p280 = scmp.ne.s32.totalorder %s269, %s270
      %p281 = scmp.eq.s32.totalorder %s25, 0
      %p282 = por %p280, %p281
      %p283 = scmp.ne.s32.totalorder %s269, %s270
      %p284 = scmp.eq.s32.totalorder %s26, 1
      %p285 = por %p283, %p284
      %p287 = scmp.ne.s32.totalorder %s270, %s286
      %p288 = scmp.eq.s32.totalorder %s26, 0
      %p289 = por %p287, %p288
      %p290 = scmp.le.s32.totalorder 1, %s20
      %p291 = scmp.lt.s32.totalorder %s20, 3
      %p292 = pnand %p290, %p291
      %p293 = pneg %p292
      // Predicated region
      $region9: #{contrastive_forward.1} parent=5 // pred_check
        _
      $region10: #{contrastive_forward.1} parent=5 // pred_check_branch
        %295 = sbr.rel (%p292) target = $region12
      $region11: #{contrastive_forward.1} parent=5 // pred_region
        %s296 = ssub.s32 %s20, 1
        // Predicated region
        $region13: #{contrastive_forward.1} parent=11 // pred_check
          %p297 = pneg %p67
        $region14: #{contrastive_forward.1} parent=11 // pred_check_branch
          %299 = sbr.rel (%p297) target = $region16
        $region15: #{contrastive_forward.1} parent=11 // pred_region
          _
        $region16: #{contrastive_forward.1} parent=11 // pred_fallthru
          _
        // Predicated region
        $region17: #{contrastive_forward.1} parent=11 // pred_check
          %p300 = pneg %p88
        $region18: #{contrastive_forward.1} parent=11 // pred_check_branch
          %302 = sbr.rel (%p300) target = $region20
        $region19: #{contrastive_forward.1} parent=11 // pred_region
          _
        $region20: #{contrastive_forward.1} parent=11 // pred_fallthru
          _
        // Predicated region
        $region21: #{contrastive_forward.1} parent=11 // pred_check
          %p303 = pneg %p109
        $region22: #{contrastive_forward.1} parent=11 // pred_check_branch
          %305 = sbr.rel (%p303) target = $region24
        $region23: #{contrastive_forward.1} parent=11 // pred_region
          _
        $region24: #{contrastive_forward.1} parent=11 // pred_fallthru
          _
        // Predicated region
        $region25: #{contrastive_forward.1} parent=11 // pred_check
          %p306 = pneg %p130
        $region26: #{contrastive_forward.1} parent=11 // pred_check_branch
          %308 = sbr.rel (%p306) target = $region28
        $region27: #{contrastive_forward.1} parent=11 // pred_region
          _
        $region28: #{contrastive_forward.1} parent=11 // pred_fallthru
          _
        // Predicated region
        $region29: #{contrastive_forward.1} parent=11 // pred_check
          %p309 = pneg %p151
        $region30: #{contrastive_forward.1} parent=11 // pred_check_branch
          %311 = sbr.rel (%p309) target = $region32
        $region31: #{contrastive_forward.1} parent=11 // pred_region
          _
        $region32: #{contrastive_forward.1} parent=11 // pred_fallthru
          _
        // Predicated region
        $region33: #{contrastive_forward.1} parent=11 // pred_check
          %p312 = pneg %p172
        $region34: #{contrastive_forward.1} parent=11 // pred_check_branch
          %314 = sbr.rel (%p312) target = $region36
        $region35: #{contrastive_forward.1} parent=11 // pred_region
          _
        $region36: #{contrastive_forward.1} parent=11 // pred_fallthru
          _
        // Predicated region
        $region37: #{contrastive_forward.1} parent=11 // pred_check
          %p315 = pneg %p193
        $region38: #{contrastive_forward.1} parent=11 // pred_check_branch
          %317 = sbr.rel (%p315) target = $region40
        $region39: #{contrastive_forward.1} parent=11 // pred_region
          _
        $region40: #{contrastive_forward.1} parent=11 // pred_fallthru
          _
        // Predicated region
        $region41: #{contrastive_forward.1} parent=11 // pred_check
          %p318 = pneg %p214
        $region42: #{contrastive_forward.1} parent=11 // pred_check_branch
          %320 = sbr.rel (%p318) target = $region44
        $region43: #{contrastive_forward.1} parent=11 // pred_region
          _
        $region44: #{contrastive_forward.1} parent=11 // pred_fallthru
          _
        // Predicated region
        $region45: #{contrastive_forward.1} parent=11 // pred_check
          %p321 = pneg %p235
        $region46: #{contrastive_forward.1} parent=11 // pred_check_branch
          %323 = sbr.rel (%p321) target = $region48
        $region47: #{contrastive_forward.1} parent=11 // pred_region
          _
        $region48: #{contrastive_forward.1} parent=11 // pred_fallthru
          _
        // Predicated region
        $region49: #{contrastive_forward.1} parent=11 // pred_check
          %p324 = pneg %p256
        $region50: #{contrastive_forward.1} parent=11 // pred_check_branch
          %326 = sbr.rel (%p324) target = $region52
        $region51: #{contrastive_forward.1} parent=11 // pred_region
          _
        $region52: #{contrastive_forward.1} parent=11 // pred_fallthru
          _
      $region12: #{contrastive_forward.1} parent=5 // pred_fallthru
        _
      %p327 = scmp.lt.s32.totalorder %s20, 2
      // Predicated region
      $region53: #{contrastive_forward.1} parent=5 // pred_check
        %p328 = pneg %p327
      $region54: #{contrastive_forward.1} parent=5 // pred_check_branch
        %330 = sbr.rel (%p328) target = $region56
      $region55: #{contrastive_forward.1} parent=5 // pred_region
        // Predicated region
        $region57: #{contrastive_forward.1} parent=55 // pred_check
          %p331 = pneg %p40
        $region58: #{contrastive_forward.1} parent=55 // pred_check_branch
          %333 = sbr.rel (%p331) target = $region60
        $region59: #{contrastive_forward.1} parent=55 // pred_region
          %p334 = scmp.lt.s32.totalorder %s20, 1
          %s335 = scalar_select %p334, %s20, 1
          %s336 = smul.addr %s335, 2
          %s337 = smul.addr %s336, 8
          %s338 = scalar_lea.vmem %s0, %s337
        $region60: #{contrastive_forward.1} parent=55 // pred_fallthru
          _
      $region56: #{contrastive_forward.1} parent=5 // pred_fallthru
        _
      %p339 = scmp.le.s32.totalorder 1, %s20
      %p340 = scmp.lt.s32.totalorder %s20, 3
      %p341 = pnand %p339, %p340
      %p342 = pneg %p341
      // Predicated region
      $region61: #{contrastive_forward.1} parent=5 // pred_check
        _
      $region62: #{contrastive_forward.1} parent=5 // pred_check_branch
        %344 = sbr.rel (%p341) target = $region64
      $region63: #{contrastive_forward.1} parent=5 // pred_region
        %s345 = ssub.s32 %s20, 1
        %p346 = scmp.lt.s32.totalorder %s25, 1
        %s347 = scalar_select %p346, %s25, 1
        %s348 = smul.addr %s347, 2
        %s349 = smul.addr %s348, 8
        %s350 = scalar_lea.vmem %s0, %s349
        %p351 = pneg %p46
        %p352 = pneg %p43
        %p353 = pneg %p67
        %p354 = pneg %p64
        %p355 = pneg %p88
        %p356 = pneg %p85
        %p357 = pneg %p109
        %p358 = pneg %p106
        %p359 = pneg %p130
        %p360 = pneg %p127
        %p361 = pneg %p151
        %p362 = pneg %p148
        %p363 = pneg %p172
        %p364 = pneg %p169
        %p365 = pneg %p193
        %p366 = pneg %p190
        %p367 = pneg %p214
        %p368 = pneg %p211
        %p369 = pneg %p235
        %p370 = pneg %p232
        %p371 = pneg %p256
        %p372 = pneg %p253
        %p373 = pneg %p282
        %p374 = pneg %p279
        %s375 = sand.u32 %s269, 1
        %s376 = scalar_lea.sflag [#allocation6], %s375
        %s377 = sand.u32 %s269, 1
        %s378 = scalar_lea.vmem [#allocation5], %s377
        %p379 = scmp.lt.s32.totalorder %s25, 1
        %s380 = scalar_select %p379, %s25, 1
        %s381 = smul.addr %s380, 2
        %s382 = smul.addr %s381, 8
        %s383 = scalar_lea.vmem %s0, %s382
        %v385 = vld [vmem:[%s383] sm:$0xff]
        %v386 = vld [vmem:[%s383 + $0x8] sm:$0xff]
        %vm387 = vcmask 130048
        %388 = vst.msk [vmem:[#allocation2] sm:$0xff] %vm387, 0.0
        %389 = vst.msk [vmem:[#allocation2 + $0x8] sm:$0xff] %vm387, 0.0
        %vm390 = vcmask 123904
        %391 = vst.msk [vmem:[#allocation2 + $0x10] sm:$0x3] %vm390, 0.0
        %392 = vst.msk [vmem:[#allocation2 + $0x1] sm:$0xff] %vm387, %v385
        %393 = vst.msk [vmem:[#allocation2 + $0x9] sm:$0xff] %vm387, %v386
        %v394 = vld [vmem:[#allocation2] sm:$0xff]
        %v395 = vld [vmem:[#allocation2 + $0x8] sm:$0xff]
        %v396 = vld [vmem:[%s1] sm:$0xff]
        %v397 = vld [vmem:[%s1 + $0x8] sm:$0xff]
        %v398 = vld [vmem:[%s1 + $0x10] sm:$0xff]
        %v399 = vld [vmem:[%s1 + $0x18] sm:$0xff]
        %v400 = vld [vmem:[%s1 + $0x20] sm:$0xff]
        %v401 = vld [vmem:[%s1 + $0x28] sm:$0xff]
        %v402 = vld [vmem:[%s1 + $0x30] sm:$0xff]
        %v403 = vld [vmem:[%s1 + $0x38] sm:$0xff]
        %v404 = vld [vmem:[#allocation2 + $0x1] sm:$0xff]
        %v405 = vld [vmem:[#allocation2 + $0x9] sm:$0xff]
        %v406 = vld [vmem:[%s1 + $0x40] sm:$0xff]
        %v407 = vld [vmem:[%s1 + $0x48] sm:$0xff]
        %v408 = vld [vmem:[%s1 + $0x50] sm:$0xff]
        %v409 = vld [vmem:[%s1 + $0x58] sm:$0xff]
        %v410 = vld [vmem:[%s1 + $0x60] sm:$0xff]
        %v411 = vld [vmem:[%s1 + $0x68] sm:$0xff]
        %v412 = vld [vmem:[%s1 + $0x70] sm:$0xff]
        %v413 = vld [vmem:[%s1 + $0x78] sm:$0xff]
        %v415 = vsel %vm387, %v404, 0
        %v418 = vsel %vm387, %v405, 0
        %420 = vmatprep.subr.mxu0 %v407
        %421 = vmatpush1.msra.mxu0 %v406
        %422 = vmatprep.subr.mxu0 %v411
        %423 = vmatpush1.msra.mxu0 %v410
        %424 = vmatprep.subr.mxu0 0.0
        %425 = vmatpush1.msra.mxu0 0.0
        %426 = vmatprep.subr.mxu0 0.0
        %427 = vmatpush1.msra.mxu0 0.0
        %428 = vmatprep.subr.mxu0 0.0
        %429 = vmatpush1.msra.mxu0 0.0
        %430 = vmatprep.subr.mxu0 0.0
        %431 = vmatpush1.msra.mxu0 0.0
        %432 = vmatprep.subr.mxu0 0.0
        %433 = vmatpush1.msra.mxu0 0.0
        %434 = vmatprep.subr.mxu0 0.0
        %435 = vmatpush1.msra.mxu0 0.0
        %436 = vmatprep.subr.mxu0 0.0
        %437 = vmatpush1.msra.mxu0 0.0
        %438 = vmatprep.subr.mxu0 0.0
        %439 = vmatpush1.msra.mxu0 0.0
        %440 = vmatprep.subr.mxu0 0.0
        %441 = vmatpush1.msra.mxu0 0.0
        %442 = vmatprep.subr.mxu0 0.0
        %443 = vmatpush1.msra.mxu0 0.0
        %444 = vmatprep.subr.mxu0 0.0
        %445 = vmatpush1.msra.mxu0 0.0
        %446 = vmatprep.subr.mxu0 0.0
        %447 = vmatpush1.msra.mxu0 0.0
        %448 = vmatprep.subr.mxu0 0.0
        %449 = vmatpush1.msra.mxu0 0.0
        %450 = vmatprep.subr.mxu0 0.0
        %451 = vmatpush1.msra.mxu0 0.0
        %452 = vmatprep.subr.mxu0 0.0
        %453 = vmatpush1.msra.mxu0 0.0
        %454 = vmatprep.subr.mxu0 0.0
        %455 = vmatpush1.msra.mxu0 0.0
        %456 = vmatprep.subr.mxu0 0.0
        %457 = vmatpush1.msra.mxu0 0.0
        %458 = vmatprep.subr.mxu0 0.0
        %459 = vmatpush1.msra.mxu0 0.0
        %460 = vmatprep.subr.mxu0 0.0
        %461 = vmatpush1.msra.mxu0 0.0
        %462 = vmatprep.subr.mxu0 0.0
        %463 = vmatpush1.msra.mxu0 0.0
        %464 = vmatprep.subr.mxu0 0.0
        %465 = vmatpush1.msra.mxu0 0.0
        %466 = vmatprep.subr.mxu0 0.0
        %467 = vmatpush1.msra.mxu0 0.0
        %468 = vmatprep.subr.mxu0 0.0
        %469 = vmatpush1.msra.mxu0 0.0
        %470 = vmatprep.subr.mxu0 0.0
        %471 = vmatpush1.msra.mxu0 0.0
        %472 = vmatprep.subr.mxu0 0.0
        %473 = vmatpush1.msra.mxu0 0.0
        %474 = vmatprep.subr.mxu0 0.0
        %475 = vmatpush1.msra.mxu0 0.0
        %476 = vmatprep.subr.mxu0 0.0
        %477 = vmatpush1.msra.mxu0 0.0
        %478 = vmatprep.subr.mxu0 0.0
        %479 = vmatpush1.msra.mxu0 0.0
        %480 = vmatprep.subr.mxu0 0.0
        %481 = vmatpush1.msra.mxu0 0.0
        %482 = vmatprep.subr.mxu0 0.0
        %483 = vmatpush1.msra.mxu0 0.0
        %484 = vmatprep.mubr.f32.mxu0 0.0
        %485 = vmatmul.mubr.f32.gmra.mrb[0].mxu0 %v415
        %v486 = vpop.f32.mrb[0].mxu0
        %v487 = vadd.f32 0.0, %v486
        %v488 = vpop.f32.mrb[0].mxu0
        %v489 = vadd.f32 0.0, %v488
        %490 = vmatprep.mubr.f32.mxu0 0.0
        %491 = vmatmul.mubr.f32.gmra.mrb[0].mxu0 %v418
        %v492 = vpop.f32.mrb[0].mxu0
        %v493 = vadd.f32 0.0, %v492
        %v494 = vpop.f32.mrb[0].mxu0
        %v495 = vadd.f32 0.0, %v494
        %496 = vdwg.mxu0
        %497 = vmatprep.subr.mxu0 %v409
        %498 = vmatpush1.msra.mxu0 %v408
        %499 = vmatprep.subr.mxu0 %v413
        %500 = vmatpush1.msra.mxu0 %v412
        %501 = vmatprep.subr.mxu0 0.0
        %502 = vmatpush1.msra.mxu0 0.0
        %503 = vmatprep.subr.mxu0 0.0
        %504 = vmatpush1.msra.mxu0 0.0
        %505 = vmatprep.subr.mxu0 0.0
        %506 = vmatpush1.msra.mxu0 0.0
        %507 = vmatprep.subr.mxu0 0.0
        %508 = vmatpush1.msra.mxu0 0.0
        %509 = vmatprep.subr.mxu0 0.0
        %510 = vmatpush1.msra.mxu0 0.0
        %511 = vmatprep.subr.mxu0 0.0
        %512 = vmatpush1.msra.mxu0 0.0
        %513 = vmatprep.subr.mxu0 0.0
        %514 = vmatpush1.msra.mxu0 0.0
        %515 = vmatprep.subr.mxu0 0.0
        %516 = vmatpush1.msra.mxu0 0.0
        %517 = vmatprep.subr.mxu0 0.0
        %518 = vmatpush1.msra.mxu0 0.0
        %519 = vmatprep.subr.mxu0 0.0
        %520 = vmatpush1.msra.mxu0 0.0
        %521 = vmatprep.subr.mxu0 0.0
        %522 = vmatpush1.msra.mxu0 0.0
        %523 = vmatprep.subr.mxu0 0.0
        %524 = vmatpush1.msra.mxu0 0.0
        %525 = vmatprep.subr.mxu0 0.0
        %526 = vmatpush1.msra.mxu0 0.0
        %527 = vmatprep.subr.mxu0 0.0
        %528 = vmatpush1.msra.mxu0 0.0
        %529 = vmatprep.subr.mxu0 0.0
        %530 = vmatpush1.msra.mxu0 0.0
        %531 = vmatprep.subr.mxu0 0.0
        %532 = vmatpush1.msra.mxu0 0.0
        %533 = vmatprep.subr.mxu0 0.0
        %534 = vmatpush1.msra.mxu0 0.0
        %535 = vmatprep.subr.mxu0 0.0
        %536 = vmatpush1.msra.mxu0 0.0
        %537 = vmatprep.subr.mxu0 0.0
        %538 = vmatpush1.msra.mxu0 0.0
        %539 = vmatprep.subr.mxu0 0.0
        %540 = vmatpush1.msra.mxu0 0.0
        %541 = vmatprep.subr.mxu0 0.0
        %542 = vmatpush1.msra.mxu0 0.0
        %543 = vmatprep.subr.mxu0 0.0
        %544 = vmatpush1.msra.mxu0 0.0
        %545 = vmatprep.subr.mxu0 0.0
        %546 = vmatpush1.msra.mxu0 0.0
        %547 = vmatprep.subr.mxu0 0.0
        %548 = vmatpush1.msra.mxu0 0.0
        %549 = vmatprep.subr.mxu0 0.0
        %550 = vmatpush1.msra.mxu0 0.0
        %551 = vmatprep.subr.mxu0 0.0
        %552 = vmatpush1.msra.mxu0 0.0
        %553 = vmatprep.subr.mxu0 0.0
        %554 = vmatpush1.msra.mxu0 0.0
        %555 = vmatprep.subr.mxu0 0.0
        %556 = vmatpush1.msra.mxu0 0.0
        %557 = vmatprep.subr.mxu0 0.0
        %558 = vmatpush1.msra.mxu0 0.0
        %559 = vmatprep.subr.mxu0 0.0
        %560 = vmatpush1.msra.mxu0 0.0
        %561 = vmatprep.mubr.f32.mxu0 0.0
        %562 = vmatmul.mubr.f32.gmra.mrb[0].mxu0 %v415
        %v563 = vpop.f32.mrb[0].mxu0
        %v564 = vadd.f32 0.0, %v563
        %v565 = vpop.f32.mrb[0].mxu0
        %v566 = vadd.f32 0.0, %v565
        %567 = vmatprep.mubr.f32.mxu0 0.0
        %568 = vmatmul.mubr.f32.gmra.mrb[0].mxu0 %v418
        %v569 = vpop.f32.mrb[0].mxu0
        %v570 = vadd.f32 0.0, %v569
        %v571 = vpop.f32.mrb[0].mxu0
        %v572 = vadd.f32 0.0, %v571
        %573 = vdwg.mxu0
        %v575 = vsel %vm387, %v394, 0
        %v578 = vsel %vm387, %v395, 0
        %580 = vmatprep.subr.mxu0 %v397
        %581 = vmatpush1.msra.mxu0 %v396
        %582 = vmatprep.subr.mxu0 %v401
        %583 = vmatpush1.msra.mxu0 %v400
        %584 = vmatprep.subr.mxu0 0.0
        %585 = vmatpush1.msra.mxu0 0.0
        %586 = vmatprep.subr.mxu0 0.0
        %587 = vmatpush1.msra.mxu0 0.0
        %588 = vmatprep.subr.mxu0 0.0
        %589 = vmatpush1.msra.mxu0 0.0
        %590 = vmatprep.subr.mxu0 0.0
        %591 = vmatpush1.msra.mxu0 0.0
        %592 = vmatprep.subr.mxu0 0.0
        %593 = vmatpush1.msra.mxu0 0.0
        %594 = vmatprep.subr.mxu0 0.0
        %595 = vmatpush1.msra.mxu0 0.0
        %596 = vmatprep.subr.mxu0 0.0
        %597 = vmatpush1.msra.mxu0 0.0
        %598 = vmatprep.subr.mxu0 0.0
        %599 = vmatpush1.msra.mxu0 0.0
        %600 = vmatprep.subr.mxu0 0.0
        %601 = vmatpush1.msra.mxu0 0.0
        %602 = vmatprep.subr.mxu0 0.0
        %603 = vmatpush1.msra.mxu0 0.0
        %604 = vmatprep.subr.mxu0 0.0
        %605 = vmatpush1.msra.mxu0 0.0
        %606 = vmatprep.subr.mxu0 0.0
        %607 = vmatpush1.msra.mxu0 0.0
        %608 = vmatprep.subr.mxu0 0.0
        %609 = vmatpush1.msra.mxu0 0.0
        %610 = vmatprep.subr.mxu0 0.0
        %611 = vmatpush1.msra.mxu0 0.0
        %612 = vmatprep.subr.mxu0 0.0
        %613 = vmatpush1.msra.mxu0 0.0
        %614 = vmatprep.subr.mxu0 0.0
        %615 = vmatpush1.msra.mxu0 0.0
        %616 = vmatprep.subr.mxu0 0.0
        %617 = vmatpush1.msra.mxu0 0.0
        %618 = vmatprep.subr.mxu0 0.0
        %619 = vmatpush1.msra.mxu0 0.0
        %620 = vmatprep.subr.mxu0 0.0
        %621 = vmatpush1.msra.mxu0 0.0
        %622 = vmatprep.subr.mxu0 0.0
        %623 = vmatpush1.msra.mxu0 0.0
        %624 = vmatprep.subr.mxu0 0.0
        %625 = vmatpush1.msra.mxu0 0.0
        %626 = vmatprep.subr.mxu0 0.0
        %627 = vmatpush1.msra.mxu0 0.0
        %628 = vmatprep.subr.mxu0 0.0
        %629 = vmatpush1.msra.mxu0 0.0
        %630 = vmatprep.subr.mxu0 0.0
        %631 = vmatpush1.msra.mxu0 0.0
        %632 = vmatprep.subr.mxu0 0.0
        %633 = vmatpush1.msra.mxu0 0.0
        %634 = vmatprep.subr.mxu0 0.0
        %635 = vmatpush1.msra.mxu0 0.0
        %636 = vmatprep.subr.mxu0 0.0
        %637 = vmatpush1.msra.mxu0 0.0
        %638 = vmatprep.subr.mxu0 0.0
        %639 = vmatpush1.msra.mxu0 0.0
        %640 = vmatprep.subr.mxu0 0.0
        %641 = vmatpush1.msra.mxu0 0.0
        %642 = vmatprep.subr.mxu0 0.0
        %643 = vmatpush1.msra.mxu0 0.0
        %644 = vmatprep.mubr.f32.mxu0 0.0
        %645 = vmatmul.mubr.f32.gmra.mrb[0].mxu0 %v575
        %v646 = vpop.f32.mrb[0].mxu0
        %v647 = vadd.f32 %v487, %v646
        %v648 = vpop.f32.mrb[0].mxu0
        %v649 = vadd.f32 %v489, %v648
        %650 = vmatprep.mubr.f32.mxu0 0.0
        %651 = vmatmul.mubr.f32.gmra.mrb[0].mxu0 %v578
        %v652 = vpop.f32.mrb[0].mxu0
        %v653 = vadd.f32 %v493, %v652
        %v654 = vpop.f32.mrb[0].mxu0
        %v655 = vadd.f32 %v495, %v654
        %656 = vdwg.mxu0
        %657 = vmatprep.subr.mxu0 %v399
        %658 = vmatpush1.msra.mxu0 %v398
        %659 = vmatprep.subr.mxu0 %v403
        %660 = vmatpush1.msra.mxu0 %v402
        %661 = vmatprep.subr.mxu0 0.0
        %662 = vmatpush1.msra.mxu0 0.0
        %663 = vmatprep.subr.mxu0 0.0
        %664 = vmatpush1.msra.mxu0 0.0
        %665 = vmatprep.subr.mxu0 0.0
        %666 = vmatpush1.msra.mxu0 0.0
        %667 = vmatprep.subr.mxu0 0.0
        %668 = vmatpush1.msra.mxu0 0.0
        %669 = vmatprep.subr.mxu0 0.0
        %670 = vmatpush1.msra.mxu0 0.0
        %671 = vmatprep.subr.mxu0 0.0
        %672 = vmatpush1.msra.mxu0 0.0
        %673 = vmatprep.subr.mxu0 0.0
        %674 = vmatpush1.msra.mxu0 0.0
        %675 = vmatprep.subr.mxu0 0.0
        %676 = vmatpush1.msra.mxu0 0.0
        %677 = vmatprep.subr.mxu0 0.0
        %678 = vmatpush1.msra.mxu0 0.0
        %679 = vmatprep.subr.mxu0 0.0
        %680 = vmatpush1.msra.mxu0 0.0
        %681 = vmatprep.subr.mxu0 0.0
        %682 = vmatpush1.msra.mxu0 0.0
        %683 = vmatprep.subr.mxu0 0.0
        %684 = vmatpush1.msra.mxu0 0.0
        %685 = vmatprep.subr.mxu0 0.0
        %686 = vmatpush1.msra.mxu0 0.0
        %687 = vmatprep.subr.mxu0 0.0
        %688 = vmatpush1.msra.mxu0 0.0
        %689 = vmatprep.subr.mxu0 0.0
        %690 = vmatpush1.msra.mxu0 0.0
        %691 = vmatprep.subr.mxu0 0.0
        %692 = vmatpush1.msra.mxu0 0.0
        %693 = vmatprep.subr.mxu0 0.0
        %694 = vmatpush1.msra.mxu0 0.0
        %695 = vmatprep.subr.mxu0 0.0
        %696 = vmatpush1.msra.mxu0 0.0
        %697 = vmatprep.subr.mxu0 0.0
        %698 = vmatpush1.msra.mxu0 0.0
        %699 = vmatprep.subr.mxu0 0.0
        %700 = vmatpush1.msra.mxu0 0.0
        %701 = vmatprep.subr.mxu0 0.0
        %702 = vmatpush1.msra.mxu0 0.0
        %703 = vmatprep.subr.mxu0 0.0
        %704 = vmatpush1.msra.mxu0 0.0
        %705 = vmatprep.subr.mxu0 0.0
        %706 = vmatpush1.msra.mxu0 0.0
        %707 = vmatprep.subr.mxu0 0.0
        %708 = vmatpush1.msra.mxu0 0.0
        %709 = vmatprep.subr.mxu0 0.0
        %710 = vmatpush1.msra.mxu0 0.0
        %711 = vmatprep.subr.mxu0 0.0
        %712 = vmatpush1.msra.mxu0 0.0
        %713 = vmatprep.subr.mxu0 0.0
        %714 = vmatpush1.msra.mxu0 0.0
        %715 = vmatprep.subr.mxu0 0.0
        %716 = vmatpush1.msra.mxu0 0.0
        %717 = vmatprep.subr.mxu0 0.0
        %718 = vmatpush1.msra.mxu0 0.0
        %719 = vmatprep.subr.mxu0 0.0
        %720 = vmatpush1.msra.mxu0 0.0
        %721 = vmatprep.mubr.f32.mxu0 0.0
        %722 = vmatmul.mubr.f32.gmra.mrb[0].mxu0 %v575
        %v723 = vpop.f32.mrb[0].mxu0
        %v724 = vadd.f32 %v564, %v723
        %v725 = vpop.f32.mrb[0].mxu0
        %v726 = vadd.f32 %v566, %v725
        %727 = vmatprep.mubr.f32.mxu0 0.0
        %728 = vmatmul.mubr.f32.gmra.mrb[0].mxu0 %v578
        %v729 = vpop.f32.mrb[0].mxu0
        %v730 = vadd.f32 %v570, %v729
        %v731 = vpop.f32.mrb[0].mxu0
        %v732 = vadd.f32 %v572, %v731
        %733 = vdwg.mxu0
        %v734 = vld [vmem:[#allocation2 + $0x2] sm:$0xff]
        %v735 = vld [vmem:[#allocation2 + $0xa] sm:$0xff]
        %v736 = vld [vmem:[%s1 + $0x80] sm:$0xff]
        %v737 = vld [vmem:[%s1 + $0x88] sm:$0xff]
        %v738 = vld [vmem:[%s1 + $0x90] sm:$0xff]
        %v739 = vld [vmem:[%s1 + $0x98] sm:$0xff]
        %v740 = vld [vmem:[%s1 + $0xa0] sm:$0xff]
        %v741 = vld [vmem:[%s1 + $0xa8] sm:$0xff]
        %v742 = vld [vmem:[%s1 + $0xb0] sm:$0xff]
        %v743 = vld [vmem:[%s1 + $0xb8] sm:$0xff]
        %v745 = vsel %vm387, %v734, 0
        %v748 = vsel %vm387, %v735, 0
        %750 = vmatprep.subr.mxu0 %v737
        %751 = vmatpush1.msra.mxu0 %v736
        %752 = vmatprep.subr.mxu0 %v741
        %753 = vmatpush1.msra.mxu0 %v740
        %754 = vmatprep.subr.mxu0 0.0
        %755 = vmatpush1.msra.mxu0 0.0
        %756 = vmatprep.subr.mxu0 0.0
        %757 = vmatpush1.msra.mxu0 0.0
        %758 = vmatprep.subr.mxu0 0.0
        %759 = vmatpush1.msra.mxu0 0.0
        %760 = vmatprep.subr.mxu0 0.0
        %761 = vmatpush1.msra.mxu0 0.0
        %762 = vmatprep.subr.mxu0 0.0
        %763 = vmatpush1.msra.mxu0 0.0
        %764 = vmatprep.subr.mxu0 0.0
        %765 = vmatpush1.msra.mxu0 0.0
        %766 = vmatprep.subr.mxu0 0.0
        %767 = vmatpush1.msra.mxu0 0.0
        %768 = vmatprep.subr.mxu0 0.0
        %769 = vmatpush1.msra.mxu0 0.0
        %770 = vmatprep.subr.mxu0 0.0
        %771 = vmatpush1.msra.mxu0 0.0
        %772 = vmatprep.subr.mxu0 0.0
        %773 = vmatpush1.msra.mxu0 0.0
        %774 = vmatprep.subr.mxu0 0.0
        %775 = vmatpush1.msra.mxu0 0.0
        %776 = vmatprep.subr.mxu0 0.0
        %777 = vmatpush1.msra.mxu0 0.0
        %778 = vmatprep.subr.mxu0 0.0
        %779 = vmatpush1.msra.mxu0 0.0
        %780 = vmatprep.subr.mxu0 0.0
        %781 = vmatpush1.msra.mxu0 0.0
        %782 = vmatprep.subr.mxu0 0.0
        %783 = vmatpush1.msra.mxu0 0.0
        %784 = vmatprep.subr.mxu0 0.0
        %785 = vmatpush1.msra.mxu0 0.0
        %786 = vmatprep.subr.mxu0 0.0
        %787 = vmatpush1.msra.mxu0 0.0
        %788 = vmatprep.subr.mxu0 0.0
        %789 = vmatpush1.msra.mxu0 0.0
        %790 = vmatprep.subr.mxu0 0.0
        %791 = vmatpush1.msra.mxu0 0.0
        %792 = vmatprep.subr.mxu0 0.0
        %793 = vmatpush1.msra.mxu0 0.0
        %794 = vmatprep.subr.mxu0 0.0
        %795 = vmatpush1.msra.mxu0 0.0
        %796 = vmatprep.subr.mxu0 0.0
        %797 = vmatpush1.msra.mxu0 0.0
        %798 = vmatprep.subr.mxu0 0.0
        %799 = vmatpush1.msra.mxu0 0.0
        %800 = vmatprep.subr.mxu0 0.0
        %801 = vmatpush1.msra.mxu0 0.0
        %802 = vmatprep.subr.mxu0 0.0
        %803 = vmatpush1.msra.mxu0 0.0
        %804 = vmatprep.subr.mxu0 0.0
        %805 = vmatpush1.msra.mxu0 0.0
        %806 = vmatprep.subr.mxu0 0.0
        %807 = vmatpush1.msra.mxu0 0.0
        %808 = vmatprep.subr.mxu0 0.0
        %809 = vmatpush1.msra.mxu0 0.0
        %810 = vmatprep.subr.mxu0 0.0
        %811 = vmatpush1.msra.mxu0 0.0
        %812 = vmatprep.subr.mxu0 0.0
        %813 = vmatpush1.msra.mxu0 0.0
        %814 = vmatprep.mubr.f32.mxu0 0.0
        %815 = vmatmul.mubr.f32.gmra.mrb[0].mxu0 %v745
        %v816 = vpop.f32.mrb[0].mxu0
        %v817 = vadd.f32 0.0, %v816
        %v818 = vpop.f32.mrb[0].mxu0
        %v819 = vadd.f32 0.0, %v818
        %820 = vmatprep.mubr.f32.mxu0 0.0
        %821 = vmatmul.mubr.f32.gmra.mrb[0].mxu0 %v748
        %v822 = vpop.f32.mrb[0].mxu0
        %v823 = vadd.f32 0.0, %v822
        %v824 = vpop.f32.mrb[0].mxu0
        %v825 = vadd.f32 0.0, %v824
        %826 = vdwg.mxu0
        %827 = vmatprep.subr.mxu0 %v739
        %828 = vmatpush1.msra.mxu0 %v738
        %829 = vmatprep.subr.mxu0 %v743
        %830 = vmatpush1.msra.mxu0 %v742
        %831 = vmatprep.subr.mxu0 0.0
        %832 = vmatpush1.msra.mxu0 0.0
        %833 = vmatprep.subr.mxu0 0.0
        %834 = vmatpush1.msra.mxu0 0.0
        %835 = vmatprep.subr.mxu0 0.0
        %836 = vmatpush1.msra.mxu0 0.0
        %837 = vmatprep.subr.mxu0 0.0
        %838 = vmatpush1.msra.mxu0 0.0
        %839 = vmatprep.subr.mxu0 0.0
        %840 = vmatpush1.msra.mxu0 0.0
        %841 = vmatprep.subr.mxu0 0.0
        %842 = vmatpush1.msra.mxu0 0.0
        %843 = vmatprep.subr.mxu0 0.0
        %844 = vmatpush1.msra.mxu0 0.0
        %845 = vmatprep.subr.mxu0 0.0
        %846 = vmatpush1.msra.mxu0 0.0
        %847 = vmatprep.subr.mxu0 0.0
        %848 = vmatpush1.msra.mxu0 0.0
        %849 = vmatprep.subr.mxu0 0.0
        %850 = vmatpush1.msra.mxu0 0.0
        %851 = vmatprep.subr.mxu0 0.0
        %852 = vmatpush1.msra.mxu0 0.0
        %853 = vmatprep.subr.mxu0 0.0
        %854 = vmatpush1.msra.mxu0 0.0
        %855 = vmatprep.subr.mxu0 0.0
        %856 = vmatpush1.msra.mxu0 0.0
        %857 = vmatprep.subr.mxu0 0.0
        %858 = vmatpush1.msra.mxu0 0.0
        %859 = vmatprep.subr.mxu0 0.0
        %860 = vmatpush1.msra.mxu0 0.0
        %861 = vmatprep.subr.mxu0 0.0
        %862 = vmatpush1.msra.mxu0 0.0
        %863 = vmatprep.subr.mxu0 0.0
        %864 = vmatpush1.msra.mxu0 0.0
        %865 = vmatprep.subr.mxu0 0.0
        %866 = vmatpush1.msra.mxu0 0.0
        %867 = vmatprep.subr.mxu0 0.0
        %868 = vmatpush1.msra.mxu0 0.0
        %869 = vmatprep.subr.mxu0 0.0
        %870 = vmatpush1.msra.mxu0 0.0
        %871 = vmatprep.subr.mxu0 0.0
        %872 = vmatpush1.msra.mxu0 0.0
        %873 = vmatprep.subr.mxu0 0.0
        %874 = vmatpush1.msra.mxu0 0.0
        %875 = vmatprep.subr.mxu0 0.0
        %876 = vmatpush1.msra.mxu0 0.0
        %877 = vmatprep.subr.mxu0 0.0
        %878 = vmatpush1.msra.mxu0 0.0
        %879 = vmatprep.subr.mxu0 0.0
        %880 = vmatpush1.msra.mxu0 0.0
        %881 = vmatprep.subr.mxu0 0.0
        %882 = vmatpush1.msra.mxu0 0.0
        %883 = vmatprep.subr.mxu0 0.0
        %884 = vmatpush1.msra.mxu0 0.0
        %885 = vmatprep.subr.mxu0 0.0
        %886 = vmatpush1.msra.mxu0 0.0
        %887 = vmatprep.subr.mxu0 0.0
        %888 = vmatpush1.msra.mxu0 0.0
        %889 = vmatprep.subr.mxu0 0.0
        %890 = vmatpush1.msra.mxu0 0.0
        %891 = vmatprep.mubr.f32.mxu0 0.0
        %892 = vmatmul.mubr.f32.gmra.mrb[0].mxu0 %v745
        %v893 = vpop.f32.mrb[0].mxu0
        %v894 = vadd.f32 0.0, %v893
        %v895 = vpop.f32.mrb[0].mxu0
        %v896 = vadd.f32 0.0, %v895
        %897 = vmatprep.mubr.f32.mxu0 0.0
        %898 = vmatmul.mubr.f32.gmra.mrb[0].mxu0 %v748
        %v899 = vpop.f32.mrb[0].mxu0
        %v900 = vadd.f32 0.0, %v899
        %v901 = vpop.f32.mrb[0].mxu0
        %v902 = vadd.f32 0.0, %v901
        %903 = vdwg.mxu0
        %v904 = vadd.f32 %v647, %v817
        %v905 = vadd.f32 %v649, %v819
        %v906 = vadd.f32 %v724, %v894
        %v907 = vadd.f32 %v726, %v896
        %v908 = vadd.f32 %v653, %v823
        %v909 = vadd.f32 %v655, %v825
        %v910 = vadd.f32 %v730, %v900
        %v911 = vadd.f32 %v732, %v902
        %v912 = vld [vmem:[%s2] sm:$0xf]
        %v914 = vlaneseq
        %v915 = vshrl.u32 %v914, 7
        %v916 = vsub.s32 0, %v915
        %v917 = vrot.slane %v912, %v916
        %v918 = vlaneseq
        %v919 = vshrl.u32 %v918, 7
        %v920 = vsub.s32 1, %v919
        %v921 = vrot.slane %v912, %v920
        %v922 = vlaneseq
        %v923 = vshrl.u32 %v922, 7
        %v924 = vsub.s32 2, %v923
        %v925 = vrot.slane %v912, %v924
        %v926 = vlaneseq
        %v927 = vshrl.u32 %v926, 7
        %v928 = vsub.s32 3, %v927
        %v929 = vrot.slane %v912, %v928
        %v934 = vadd.f32 %v904, %v917
        %v935 = vadd.f32 %v905, %v921
        %v936 = vadd.f32 %v906, %v925
        %v937 = vadd.f32 %v907, %v929
        %v938 = vadd.f32 %v908, %v917
        %v939 = vadd.f32 %v909, %v921
        %v940 = vadd.f32 %v910, %v925
        %v941 = vadd.f32 %v911, %v929
        %v942 = vmax.f32 %v934, 0.0
        %v943 = vmax.f32 %v935, 0.0
        %v944 = vmax.f32 %v936, 0.0
        %v945 = vmax.f32 %v937, 0.0
        %v946 = vmax.f32 %v938, 0.0
        %v947 = vmax.f32 %v939, 0.0
        %v948 = vmax.f32 %v940, 0.0
        %v949 = vmax.f32 %v941, 0.0
        %v958 = vcombine.low %v942, %v943
        %v959 = vcombine.high %v942, %v943
        %v960 = vcombine.low %v944, %v945
        %v961 = vcombine.high %v944, %v945
        %v963 = vunpack.c.l.s4 1983009808
        %v964 = vunpack.c.0.s8 %v963
        %v965 = vlaneseq
        %v966 = vshrl.u32 %v965, 7
        %v967 = vsub.s32 %v964, %v966
        %v968 = vrot.slane %v958, %v967
        %v970 = vunpack.c.l.s4 1983009808
        %v971 = vunpack.c.0.s8 %v970
        %v972 = vlaneseq
        %v973 = vshrl.u32 %v972, 7
        %v974 = vsub.s32 %v971, %v973
        %v975 = vrot.slane %v959, %v974
        %v977 = vunpack.c.l.s4 1983009808
        %v978 = vunpack.c.0.s8 %v977
        %v979 = vlaneseq
        %v980 = vshrl.u32 %v979, 7
        %v981 = vsub.s32 %v978, %v980
        %v982 = vrot.slane %v960, %v981
        %v984 = vunpack.c.l.s4 1983009808
        %v985 = vunpack.c.0.s8 %v984
        %v986 = vlaneseq
        %v987 = vshrl.u32 %v986, 7
        %v988 = vsub.s32 %v985, %v987
        %v989 = vrot.slane %v961, %v988
        %v990 = vcombine.low %v968, %v982
        %v991 = vcombine.high %v968, %v982
        %v992 = vcombine.low %v975, %v989
        %v993 = vcombine.high %v975, %v989
        %v994 = vcombine.low %v946, %v947
        %v995 = vcombine.high %v946, %v947
        %v996 = vcombine.low %v948, %v949
        %v997 = vcombine.high %v948, %v949
        %v999 = vunpack.c.l.s4 1983009808
        %v1000 = vunpack.c.0.s8 %v999
        %v1001 = vlaneseq
        %v1002 = vshrl.u32 %v1001, 7
        %v1003 = vsub.s32 %v1000, %v1002
        %v1004 = vrot.slane %v994, %v1003
        %v1006 = vunpack.c.l.s4 1983009808
        %v1007 = vunpack.c.0.s8 %v1006
        %v1008 = vlaneseq
        %v1009 = vshrl.u32 %v1008, 7
        %v1010 = vsub.s32 %v1007, %v1009
        %v1011 = vrot.slane %v995, %v1010
        %v1013 = vunpack.c.l.s4 1983009808
        %v1014 = vunpack.c.0.s8 %v1013
        %v1015 = vlaneseq
        %v1016 = vshrl.u32 %v1015, 7
        %v1017 = vsub.s32 %v1014, %v1016
        %v1018 = vrot.slane %v996, %v1017
        %v1020 = vunpack.c.l.s4 1983009808
        %v1021 = vunpack.c.0.s8 %v1020
        %v1022 = vlaneseq
        %v1023 = vshrl.u32 %v1022, 7
        %v1024 = vsub.s32 %v1021, %v1023
        %v1025 = vrot.slane %v997, %v1024
        %v1026 = vcombine.low %v1004, %v1018
        %v1027 = vcombine.high %v1004, %v1018
        %v1028 = vcombine.low %v1011, %v1025
        %v1029 = vcombine.high %v1011, %v1025
        %v1030 = vcombine.high %v990, %v990
        %v1032 = vunpack.c.l.s4 1983009808
        %v1033 = vunpack.c.0.s8 %v1032
        %v1034 = vlaneseq
        %v1035 = vshrl.u32 %v1034, 7
        %v1036 = vsub.s32 %v1033, %v1035
        %v1037 = vrot.slane %v990, %v1036
        %v1039 = vunpack.c.l.s4 1983009808
        %v1040 = vunpack.c.0.s8 %v1039
        %v1041 = vlaneseq
        %v1042 = vshrl.u32 %v1041, 7
        %v1043 = vsub.s32 %v1040, %v1042
        %v1044 = vrot.slane %v1030, %v1043
        %v1045 = vcombine.high %v1037, %v1037
        %v1046 = vcombine.high %v1044, %v1044
        %v1047 = vcombine.high %v991, %v991
        %v1049 = vunpack.c.l.s4 1983009808
        %v1050 = vunpack.c.0.s8 %v1049
        %v1051 = vlaneseq
        %v1052 = vshrl.u32 %v1051, 7
        %v1053 = vsub.s32 %v1050, %v1052
        %v1054 = vrot.slane %v991, %v1053
        %v1056 = vunpack.c.l.s4 1983009808
        %v1057 = vunpack.c.0.s8 %v1056
        %v1058 = vlaneseq
        %v1059 = vshrl.u32 %v1058, 7
        %v1060 = vsub.s32 %v1057, %v1059
        %v1061 = vrot.slane %v1047, %v1060
        %v1062 = vcombine.high %v1054, %v1054
        %v1063 = vcombine.high %v1061, %v1061
        %v1064 = vcombine.high %v992, %v992
        %v1066 = vunpack.c.l.s4 1983009808
        %v1067 = vunpack.c.0.s8 %v1066
        %v1068 = vlaneseq
        %v1069 = vshrl.u32 %v1068, 7
        %v1070 = vsub.s32 %v1067, %v1069
        %v1071 = vrot.slane %v992, %v1070
        %v1073 = vunpack.c.l.s4 1983009808
        %v1074 = vunpack.c.0.s8 %v1073
        %v1075 = vlaneseq
        %v1076 = vshrl.u32 %v1075, 7
        %v1077 = vsub.s32 %v1074, %v1076
        %v1078 = vrot.slane %v1064, %v1077
        %v1079 = vcombine.high %v1071, %v1071
        %v1080 = vcombine.high %v1078, %v1078
        %v1081 = vcombine.high %v993, %v993
        %v1083 = vunpack.c.l.s4 1983009808
        %v1084 = vunpack.c.0.s8 %v1083
        %v1085 = vlaneseq
        %v1086 = vshrl.u32 %v1085, 7
        %v1087 = vsub.s32 %v1084, %v1086
        %v1088 = vrot.slane %v993, %v1087
        %v1090 = vunpack.c.l.s4 1983009808
        %v1091 = vunpack.c.0.s8 %v1090
        %v1092 = vlaneseq
        %v1093 = vshrl.u32 %v1092, 7
        %v1094 = vsub.s32 %v1091, %v1093
        %v1095 = vrot.slane %v1081, %v1094
        %v1096 = vcombine.high %v1088, %v1088
        %v1097 = vcombine.high %v1095, %v1095
        %v1098 = vcombine.high %v1026, %v1026
        %v1100 = vunpack.c.l.s4 1983009808
        %v1101 = vunpack.c.0.s8 %v1100
        %v1102 = vlaneseq
        %v1103 = vshrl.u32 %v1102, 7
        %v1104 = vsub.s32 %v1101, %v1103
        %v1105 = vrot.slane %v1026, %v1104
        %v1107 = vunpack.c.l.s4 1983009808
        %v1108 = vunpack.c.0.s8 %v1107
        %v1109 = vlaneseq
        %v1110 = vshrl.u32 %v1109, 7
        %v1111 = vsub.s32 %v1108, %v1110
        %v1112 = vrot.slane %v1098, %v1111
        %v1113 = vcombine.high %v1105, %v1105
        %v1114 = vcombine.high %v1112, %v1112
        %v1115 = vcombine.high %v1027, %v1027
        %v1117 = vunpack.c.l.s4 1983009808
        %v1118 = vunpack.c.0.s8 %v1117
        %v1119 = vlaneseq
        %v1120 = vshrl.u32 %v1119, 7
        %v1121 = vsub.s32 %v1118, %v1120
        %v1122 = vrot.slane %v1027, %v1121
        %v1124 = vunpack.c.l.s4 1983009808
        %v1125 = vunpack.c.0.s8 %v1124
        %v1126 = vlaneseq
        %v1127 = vshrl.u32 %v1126, 7
        %v1128 = vsub.s32 %v1125, %v1127
        %v1129 = vrot.slane %v1115, %v1128
        %v1130 = vcombine.high %v1122, %v1122
        %v1131 = vcombine.high %v1129, %v1129
        %v1132 = vcombine.high %v1028, %v1028
        %v1134 = vunpack.c.l.s4 1983009808
        %v1135 = vunpack.c.0.s8 %v1134
        %v1136 = vlaneseq
        %v1137 = vshrl.u32 %v1136, 7
        %v1138 = vsub.s32 %v1135, %v1137
        %v1139 = vrot.slane %v1028, %v1138
        %v1141 = vunpack.c.l.s4 1983009808
        %v1142 = vunpack.c.0.s8 %v1141
        %v1143 = vlaneseq
        %v1144 = vshrl.u32 %v1143, 7
        %v1145 = vsub.s32 %v1142, %v1144
        %v1146 = vrot.slane %v1132, %v1145
        %v1147 = vcombine.high %v1139, %v1139
        %v1148 = vcombine.high %v1146, %v1146
        %v1149 = vcombine.high %v1029, %v1029
        %v1151 = vunpack.c.l.s4 1983009808
        %v1152 = vunpack.c.0.s8 %v1151
        %v1153 = vlaneseq
        %v1154 = vshrl.u32 %v1153, 7
        %v1155 = vsub.s32 %v1152, %v1154
        %v1156 = vrot.slane %v1029, %v1155
        %v1158 = vunpack.c.l.s4 1983009808
        %v1159 = vunpack.c.0.s8 %v1158
        %v1160 = vlaneseq
        %v1161 = vshrl.u32 %v1160, 7
        %v1162 = vsub.s32 %v1159, %v1161
        %v1163 = vrot.slane %v1149, %v1162
        %v1164 = vcombine.high %v1156, %v1156
        %v1165 = vcombine.high %v1163, %v1163
        %vm1198 = vcmask 1041408
        %v1199 = vsel %vm1198, %v1037, -inf
        %v1200 = vrot.slane %v1199, 4
        %v1201 = vmax.f32 %v1199, %v1200
        %v1202 = vrot.slane %v1201, 2
        %v1203 = vmax.f32 %v1201, %v1202
        %v1204 = vrot.slane %v1203, 1
        %v1205 = vmax.f32 %v1203, %v1204
        %v1206 = vsel %vm1198, %v1045, -inf
        %v1207 = vrot.slane %v1206, 4
        %v1208 = vmax.f32 %v1206, %v1207
        %v1209 = vrot.slane %v1208, 2
        %v1210 = vmax.f32 %v1208, %v1209
        %v1211 = vrot.slane %v1210, 1
        %v1212 = vmax.f32 %v1210, %v1211
        %v1213 = vsel %vm1198, %v1044, -inf
        %v1214 = vrot.slane %v1213, 4
        %v1215 = vmax.f32 %v1213, %v1214
        %v1216 = vrot.slane %v1215, 2
        %v1217 = vmax.f32 %v1215, %v1216
        %v1218 = vrot.slane %v1217, 1
        %v1219 = vmax.f32 %v1217, %v1218
        %v1220 = vsel %vm1198, %v1046, -inf
        %v1221 = vrot.slane %v1220, 4
        %v1222 = vmax.f32 %v1220, %v1221
        %v1223 = vrot.slane %v1222, 2
        %v1224 = vmax.f32 %v1222, %v1223
        %v1225 = vrot.slane %v1224, 1
        %v1226 = vmax.f32 %v1224, %v1225
        %v1227 = vsel %vm1198, %v1054, -inf
        %v1228 = vrot.slane %v1227, 4
        %v1229 = vmax.f32 %v1227, %v1228
        %v1230 = vrot.slane %v1229, 2
        %v1231 = vmax.f32 %v1229, %v1230
        %v1232 = vrot.slane %v1231, 1
        %v1233 = vmax.f32 %v1231, %v1232
        %v1234 = vsel %vm1198, %v1062, -inf
        %v1235 = vrot.slane %v1234, 4
        %v1236 = vmax.f32 %v1234, %v1235
        %v1237 = vrot.slane %v1236, 2
        %v1238 = vmax.f32 %v1236, %v1237
        %v1239 = vrot.slane %v1238, 1
        %v1240 = vmax.f32 %v1238, %v1239
        %v1241 = vsel %vm1198, %v1061, -inf
        %v1242 = vrot.slane %v1241, 4
        %v1243 = vmax.f32 %v1241, %v1242
        %v1244 = vrot.slane %v1243, 2
        %v1245 = vmax.f32 %v1243, %v1244
        %v1246 = vrot.slane %v1245, 1
        %v1247 = vmax.f32 %v1245, %v1246
        %v1248 = vsel %vm1198, %v1063, -inf
        %v1249 = vrot.slane %v1248, 4
        %v1250 = vmax.f32 %v1248, %v1249
        %v1251 = vrot.slane %v1250, 2
        %v1252 = vmax.f32 %v1250, %v1251
        %v1253 = vrot.slane %v1252, 1
        %v1254 = vmax.f32 %v1252, %v1253
        %v1255 = vsel %vm1198, %v1071, -inf
        %v1256 = vrot.slane %v1255, 4
        %v1257 = vmax.f32 %v1255, %v1256
        %v1258 = vrot.slane %v1257, 2
        %v1259 = vmax.f32 %v1257, %v1258
        %v1260 = vrot.slane %v1259, 1
        %v1261 = vmax.f32 %v1259, %v1260
        %v1262 = vsel %vm1198, %v1079, -inf
        %v1263 = vrot.slane %v1262, 4
        %v1264 = vmax.f32 %v1262, %v1263
        %v1265 = vrot.slane %v1264, 2
        %v1266 = vmax.f32 %v1264, %v1265
        %v1267 = vrot.slane %v1266, 1
        %v1268 = vmax.f32 %v1266, %v1267
        %v1269 = vsel %vm1198, %v1078, -inf
        %v1270 = vrot.slane %v1269, 4
        %v1271 = vmax.f32 %v1269, %v1270
        %v1272 = vrot.slane %v1271, 2
        %v1273 = vmax.f32 %v1271, %v1272
        %v1274 = vrot.slane %v1273, 1
        %v1275 = vmax.f32 %v1273, %v1274
        %v1276 = vsel %vm1198, %v1080, -inf
        %v1277 = vrot.slane %v1276, 4
        %v1278 = vmax.f32 %v1276, %v1277
        %v1279 = vrot.slane %v1278, 2
        %v1280 = vmax.f32 %v1278, %v1279
        %v1281 = vrot.slane %v1280, 1
        %v1282 = vmax.f32 %v1280, %v1281
        %v1283 = vsel %vm1198, %v1088, -inf
        %v1284 = vrot.slane %v1283, 4
        %v1285 = vmax.f32 %v1283, %v1284
        %v1286 = vrot.slane %v1285, 2
        %v1287 = vmax.f32 %v1285, %v1286
        %v1288 = vrot.slane %v1287, 1
        %v1289 = vmax.f32 %v1287, %v1288
        %v1290 = vsel %vm1198, %v1096, -inf
        %v1291 = vrot.slane %v1290, 4
        %v1292 = vmax.f32 %v1290, %v1291
        %v1293 = vrot.slane %v1292, 2
        %v1294 = vmax.f32 %v1292, %v1293
        %v1295 = vrot.slane %v1294, 1
        %v1296 = vmax.f32 %v1294, %v1295
        %v1297 = vsel %vm1198, %v1095, -inf
        %v1298 = vrot.slane %v1297, 4
        %v1299 = vmax.f32 %v1297, %v1298
        %v1300 = vrot.slane %v1299, 2
        %v1301 = vmax.f32 %v1299, %v1300
        %v1302 = vrot.slane %v1301, 1
        %v1303 = vmax.f32 %v1301, %v1302
        %v1304 = vsel %vm1198, %v1097, -inf
        %v1305 = vrot.slane %v1304, 4
        %v1306 = vmax.f32 %v1304, %v1305
        %v1307 = vrot.slane %v1306, 2
        %v1308 = vmax.f32 %v1306, %v1307
        %v1309 = vrot.slane %v1308, 1
        %v1310 = vmax.f32 %v1308, %v1309
        %v1311 = vsel %vm1198, %v1105, -inf
        %v1312 = vrot.slane %v1311, 4
        %v1313 = vmax.f32 %v1311, %v1312
        %v1314 = vrot.slane %v1313, 2
        %v1315 = vmax.f32 %v1313, %v1314
        %v1316 = vrot.slane %v1315, 1
        %v1317 = vmax.f32 %v1315, %v1316
        %v1318 = vsel %vm1198, %v1113, -inf
        %v1319 = vrot.slane %v1318, 4
        %v1320 = vmax.f32 %v1318, %v1319
        %v1321 = vrot.slane %v1320, 2
        %v1322 = vmax.f32 %v1320, %v1321
        %v1323 = vrot.slane %v1322, 1
        %v1324 = vmax.f32 %v1322, %v1323
        %v1325 = vsel %vm1198, %v1112, -inf
        %v1326 = vrot.slane %v1325, 4
        %v1327 = vmax.f32 %v1325, %v1326
        %v1328 = vrot.slane %v1327, 2
        %v1329 = vmax.f32 %v1327, %v1328
        %v1330 = vrot.slane %v1329, 1
        %v1331 = vmax.f32 %v1329, %v1330
        %v1332 = vsel %vm1198, %v1114, -inf
        %v1333 = vrot.slane %v1332, 4
        %v1334 = vmax.f32 %v1332, %v1333
        %v1335 = vrot.slane %v1334, 2
        %v1336 = vmax.f32 %v1334, %v1335
        %v1337 = vrot.slane %v1336, 1
        %v1338 = vmax.f32 %v1336, %v1337
        %v1339 = vsel %vm1198, %v1122, -inf
        %v1340 = vrot.slane %v1339, 4
        %v1341 = vmax.f32 %v1339, %v1340
        %v1342 = vrot.slane %v1341, 2
        %v1343 = vmax.f32 %v1341, %v1342
        %v1344 = vrot.slane %v1343, 1
        %v1345 = vmax.f32 %v1343, %v1344
        %v1346 = vsel %vm1198, %v1130, -inf
        %v1347 = vrot.slane %v1346, 4
        %v1348 = vmax.f32 %v1346, %v1347
        %v1349 = vrot.slane %v1348, 2
        %v1350 = vmax.f32 %v1348, %v1349
        %v1351 = vrot.slane %v1350, 1
        %v1352 = vmax.f32 %v1350, %v1351
        %v1353 = vsel %vm1198, %v1129, -inf
        %v1354 = vrot.slane %v1353, 4
        %v1355 = vmax.f32 %v1353, %v1354
        %v1356 = vrot.slane %v1355, 2
        %v1357 = vmax.f32 %v1355, %v1356
        %v1358 = vrot.slane %v1357, 1
        %v1359 = vmax.f32 %v1357, %v1358
        %v1360 = vsel %vm1198, %v1131, -inf
        %v1361 = vrot.slane %v1360, 4
        %v1362 = vmax.f32 %v1360, %v1361
        %v1363 = vrot.slane %v1362, 2
        %v1364 = vmax.f32 %v1362, %v1363
        %v1365 = vrot.slane %v1364, 1
        %v1366 = vmax.f32 %v1364, %v1365
        %v1367 = vsel %vm1198, %v1139, -inf
        %v1368 = vrot.slane %v1367, 4
        %v1369 = vmax.f32 %v1367, %v1368
        %v1370 = vrot.slane %v1369, 2
        %v1371 = vmax.f32 %v1369, %v1370
        %v1372 = vrot.slane %v1371, 1
        %v1373 = vmax.f32 %v1371, %v1372
        %v1374 = vsel %vm1198, %v1147, -inf
        %v1375 = vrot.slane %v1374, 4
        %v1376 = vmax.f32 %v1374, %v1375
        %v1377 = vrot.slane %v1376, 2
        %v1378 = vmax.f32 %v1376, %v1377
        %v1379 = vrot.slane %v1378, 1
        %v1380 = vmax.f32 %v1378, %v1379
        %v1381 = vsel %vm1198, %v1146, -inf
        %v1382 = vrot.slane %v1381, 4
        %v1383 = vmax.f32 %v1381, %v1382
        %v1384 = vrot.slane %v1383, 2
        %v1385 = vmax.f32 %v1383, %v1384
        %v1386 = vrot.slane %v1385, 1
        %v1387 = vmax.f32 %v1385, %v1386
        %v1388 = vsel %vm1198, %v1148, -inf
        %v1389 = vrot.slane %v1388, 4
        %v1390 = vmax.f32 %v1388, %v1389
        %v1391 = vrot.slane %v1390, 2
        %v1392 = vmax.f32 %v1390, %v1391
        %v1393 = vrot.slane %v1392, 1
        %v1394 = vmax.f32 %v1392, %v1393
        %v1395 = vsel %vm1198, %v1156, -inf
        %v1396 = vrot.slane %v1395, 4
        %v1397 = vmax.f32 %v1395, %v1396
        %v1398 = vrot.slane %v1397, 2
        %v1399 = vmax.f32 %v1397, %v1398
        %v1400 = vrot.slane %v1399, 1
        %v1401 = vmax.f32 %v1399, %v1400
        %v1402 = vsel %vm1198, %v1164, -inf
        %v1403 = vrot.slane %v1402, 4
        %v1404 = vmax.f32 %v1402, %v1403
        %v1405 = vrot.slane %v1404, 2
        %v1406 = vmax.f32 %v1404, %v1405
        %v1407 = vrot.slane %v1406, 1
        %v1408 = vmax.f32 %v1406, %v1407
        %v1409 = vsel %vm1198, %v1163, -inf
        %v1410 = vrot.slane %v1409, 4
        %v1411 = vmax.f32 %v1409, %v1410
        %v1412 = vrot.slane %v1411, 2
        %v1413 = vmax.f32 %v1411, %v1412
        %v1414 = vrot.slane %v1413, 1
        %v1415 = vmax.f32 %v1413, %v1414
        %v1416 = vsel %vm1198, %v1165, -inf
        %v1417 = vrot.slane %v1416, 4
        %v1418 = vmax.f32 %v1416, %v1417
        %v1419 = vrot.slane %v1418, 2
        %v1420 = vmax.f32 %v1418, %v1419
        %v1421 = vrot.slane %v1420, 1
        %v1422 = vmax.f32 %v1420, %v1421
        %v1423 = vmax.f32 %v1205, %v1219
        %v1424 = vmax.f32 %v1212, %v1226
        %v1425 = vmax.f32 %v1233, %v1247
        %v1426 = vmax.f32 %v1240, %v1254
        %v1427 = vmax.f32 %v1261, %v1275
        %v1428 = vmax.f32 %v1268, %v1282
        %v1429 = vmax.f32 %v1289, %v1303
        %v1430 = vmax.f32 %v1296, %v1310
        %v1431 = vmax.f32 %v1317, %v1331
        %v1432 = vmax.f32 %v1324, %v1338
        %v1433 = vmax.f32 %v1345, %v1359
        %v1434 = vmax.f32 %v1352, %v1366
        %v1435 = vmax.f32 %v1373, %v1387
        %v1436 = vmax.f32 %v1380, %v1394
        %v1437 = vmax.f32 %v1401, %v1415
        %v1438 = vmax.f32 %v1408, %v1422
        %1439 = vst [vmem:[#allocation3] sm:$0xff] 0.0
        %1440 = vst [vmem:[#allocation3 + $0x8] sm:$0xff] 0.0
        %1441 = vst [vmem:[#allocation3 + $0x10] sm:$0x3] 0.0
        %1442 = vst [vmem:[#allocation3 + $0x18] sm:$0x3] 0.0
        %vm1459 = vcmask 1042434
        %v1460 = vsel %vm1459, %v1425, %v1423
        %vm1461 = vcmask 1043459
        %v1462 = vsel %vm1461, %v1427, %v1460
        %vm1463 = vcmask 1044484
        %v1464 = vsel %vm1463, %v1429, %v1462
        %vm1465 = vcmask 1045509
        %v1466 = vsel %vm1465, %v1431, %v1464
        %vm1467 = vcmask 1046534
        %v1468 = vsel %vm1467, %v1433, %v1466
        %vm1469 = vcmask 1047559
        %v1470 = vsel %vm1469, %v1435, %v1468
        %v1471 = vsel %vm1459, %v1426, %v1424
        %v1472 = vsel %vm1461, %v1428, %v1471
        %v1473 = vsel %vm1463, %v1430, %v1472
        %v1474 = vsel %vm1465, %v1432, %v1473
        %v1475 = vsel %vm1467, %v1434, %v1474
        %v1476 = vsel %vm1469, %v1436, %v1475
        %1481 = vst [vmem:[#allocation3] sm:$0xfe] %v1470
        %1482 = vst [vmem:[#allocation3 + $0x8] sm:$0xfe] %v1476
        %1483 = vst [vmem:[#allocation3 + $0x10] sm:$0x1] %v1437
        %1484 = vst [vmem:[#allocation3 + $0x18] sm:$0x1] %v1438
        %v1485 = vld [vmem:[#allocation3] sm:$0xff]
        %v1486 = vld [vmem:[#allocation3 + $0x8] sm:$0xff]
        %v1487 = vpack.c.bf16 %v1485, %v1485
        %v1488 = vpack.c.bf16 %v1486, %v1486
        %v1489 = vld [vmem:[%s3] sm:$0xff]
        %v1490 = vld [vmem:[%s3 + $0x8] sm:$0xff]
        %v1491 = vld [vmem:[%s3 + $0x10] sm:$0xff]
        %v1492 = vld [vmem:[%s3 + $0x18] sm:$0xff]
        %v1493 = vld [vmem:[%s3 + $0x20] sm:$0xff]
        %v1494 = vld [vmem:[%s3 + $0x28] sm:$0xff]
        %v1495 = vld [vmem:[%s3 + $0x30] sm:$0xff]
        %v1496 = vld [vmem:[%s3 + $0x38] sm:$0xff]
        %v1497 = vld [vmem:[%s3 + $0x40] sm:$0xff]
        %v1498 = vld [vmem:[%s3 + $0x48] sm:$0xff]
        %v1499 = vld [vmem:[%s3 + $0x50] sm:$0xff]
        %v1500 = vld [vmem:[%s3 + $0x58] sm:$0xff]
        %v1501 = vld [vmem:[%s3 + $0x60] sm:$0xff]
        %v1502 = vld [vmem:[%s3 + $0x68] sm:$0xff]
        %v1503 = vld [vmem:[%s3 + $0x70] sm:$0xff]
        %v1504 = vld [vmem:[%s3 + $0x78] sm:$0xff]
        %v1505 = vld [vmem:[%s3 + $0x80] sm:$0xff]
        %v1506 = vld [vmem:[%s3 + $0x88] sm:$0xff]
        %v1507 = vld [vmem:[%s3 + $0x90] sm:$0xff]
        %v1508 = vld [vmem:[%s3 + $0x98] sm:$0xff]
        %v1509 = vld [vmem:[%s3 + $0xa0] sm:$0xff]
        %v1510 = vld [vmem:[%s3 + $0xa8] sm:$0xff]
        %v1511 = vld [vmem:[%s3 + $0xb0] sm:$0xff]
        %v1512 = vld [vmem:[%s3 + $0xb8] sm:$0xff]
        %v1513 = vld [vmem:[%s3 + $0xc0] sm:$0xff]
        %v1514 = vld [vmem:[%s3 + $0xc8] sm:$0xff]
        %v1515 = vld [vmem:[%s3 + $0xd0] sm:$0xff]
        %v1516 = vld [vmem:[%s3 + $0xd8] sm:$0xff]
        %v1517 = vld [vmem:[%s3 + $0xe0] sm:$0xff]
        %v1518 = vld [vmem:[%s3 + $0xe8] sm:$0xff]
        %v1519 = vld [vmem:[%s3 + $0xf0] sm:$0xff]
        %v1520 = vld [vmem:[%s3 + $0xf8] sm:$0xff]
        %v1521 = vld [vmem:[%s3 + $0x100] sm:$0xff]
        %v1522 = vld [vmem:[%s3 + $0x108] sm:$0xff]
        %v1523 = vld [vmem:[%s3 + $0x110] sm:$0xff]
        %v1524 = vld [vmem:[%s3 + $0x118] sm:$0xff]
        %v1525 = vld [vmem:[%s3 + $0x120] sm:$0xff]
        %v1526 = vld [vmem:[%s3 + $0x128] sm:$0xff]
        %v1527 = vld [vmem:[%s3 + $0x130] sm:$0xff]
        %v1528 = vld [vmem:[%s3 + $0x138] sm:$0xff]
        %v1529 = vld [vmem:[%s3 + $0x140] sm:$0xff]
        %v1530 = vld [vmem:[%s3 + $0x148] sm:$0xff]
        %v1531 = vld [vmem:[%s3 + $0x150] sm:$0xff]
        %v1532 = vld [vmem:[%s3 + $0x158] sm:$0xff]
        %v1533 = vld [vmem:[%s3 + $0x160] sm:$0xff]
        %v1534 = vld [vmem:[%s3 + $0x168] sm:$0xff]
        %v1535 = vld [vmem:[%s3 + $0x170] sm:$0xff]
        %v1536 = vld [vmem:[%s3 + $0x178] sm:$0xff]
        %v1537 = vld [vmem:[%s3 + $0x180] sm:$0xff]
        %v1538 = vld [vmem:[%s3 + $0x188] sm:$0xff]
        %v1539 = vld [vmem:[%s3 + $0x190] sm:$0xff]
        %v1540 = vld [vmem:[%s3 + $0x198] sm:$0xff]
        %v1541 = vld [vmem:[%s3 + $0x1a0] sm:$0xff]
        %v1542 = vld [vmem:[%s3 + $0x1a8] sm:$0xff]
        %v1543 = vld [vmem:[%s3 + $0x1b0] sm:$0xff]
        %v1544 = vld [vmem:[%s3 + $0x1b8] sm:$0xff]
        %v1545 = vld [vmem:[%s3 + $0x1c0] sm:$0xff]
        %v1546 = vld [vmem:[%s3 + $0x1c8] sm:$0xff]
        %v1547 = vld [vmem:[%s3 + $0x1d0] sm:$0xff]
        %v1548 = vld [vmem:[%s3 + $0x1d8] sm:$0xff]
        %v1549 = vld [vmem:[%s3 + $0x1e0] sm:$0xff]
        %v1550 = vld [vmem:[%s3 + $0x1e8] sm:$0xff]
        %v1551 = vld [vmem:[%s3 + $0x1f0] sm:$0xff]
        %v1552 = vld [vmem:[%s3 + $0x1f8] sm:$0xff]
        %v1553 = vld [vmem:[#allocation3] sm:$0xfe]
        %v1554 = vld [vmem:[#allocation3 + $0x8] sm:$0xfe]
        %v1555 = vld [vmem:[#allocation3 + $0x10] sm:$0x1]
        %v1556 = vld [vmem:[#allocation3 + $0x18] sm:$0x1]
        %v1557 = vpack.c.bf16 %v1555, %v1553
        %v1558 = vpack.c.bf16 %v1556, %v1554
        %v1559 = vld [vmem:[%s3 + $0x200] sm:$0xff]
        %v1560 = vld [vmem:[%s3 + $0x208] sm:$0xff]
        %v1561 = vld [vmem:[%s3 + $0x210] sm:$0xff]
        %v1562 = vld [vmem:[%s3 + $0x218] sm:$0xff]
        %v1563 = vld [vmem:[%s3 + $0x220] sm:$0xff]
        %v1564 = vld [vmem:[%s3 + $0x228] sm:$0xff]
        %v1565 = vld [vmem:[%s3 + $0x230] sm:$0xff]
        %v1566 = vld [vmem:[%s3 + $0x238] sm:$0xff]
        %v1567 = vld [vmem:[%s3 + $0x240] sm:$0xff]
        %v1568 = vld [vmem:[%s3 + $0x248] sm:$0xff]
        %v1569 = vld [vmem:[%s3 + $0x250] sm:$0xff]
        %v1570 = vld [vmem:[%s3 + $0x258] sm:$0xff]
        %v1571 = vld [vmem:[%s3 + $0x260] sm:$0xff]
        %v1572 = vld [vmem:[%s3 + $0x268] sm:$0xff]
        %v1573 = vld [vmem:[%s3 + $0x270] sm:$0xff]
        %v1574 = vld [vmem:[%s3 + $0x278] sm:$0xff]
        %v1575 = vld [vmem:[%s3 + $0x280] sm:$0xff]
        %v1576 = vld [vmem:[%s3 + $0x288] sm:$0xff]
        %v1577 = vld [vmem:[%s3 + $0x290] sm:$0xff]
        %v1578 = vld [vmem:[%s3 + $0x298] sm:$0xff]
        %v1579 = vld [vmem:[%s3 + $0x2a0] sm:$0xff]
        %v1580 = vld [vmem:[%s3 + $0x2a8] sm:$0xff]
        %v1581 = vld [vmem:[%s3 + $0x2b0] sm:$0xff]
        %v1582 = vld [vmem:[%s3 + $0x2b8] sm:$0xff]
        %v1583 = vld [vmem:[%s3 + $0x2c0] sm:$0xff]
        %v1584 = vld [vmem:[%s3 + $0x2c8] sm:$0xff]
        %v1585 = vld [vmem:[%s3 + $0x2d0] sm:$0xff]
        %v1586 = vld [vmem:[%s3 + $0x2d8] sm:$0xff]
        %v1587 = vld [vmem:[%s3 + $0x2e0] sm:$0xff]
        %v1588 = vld [vmem:[%s3 + $0x2e8] sm:$0xff]
        %v1589 = vld [vmem:[%s3 + $0x2f0] sm:$0xff]
        %v1590 = vld [vmem:[%s3 + $0x2f8] sm:$0xff]
        %v1591 = vld [vmem:[%s3 + $0x300] sm:$0xff]
        %v1592 = vld [vmem:[%s3 + $0x308] sm:$0xff]
        %v1593 = vld [vmem:[%s3 + $0x310] sm:$0xff]
        %v1594 = vld [vmem:[%s3 + $0x318] sm:$0xff]
        %v1595 = vld [vmem:[%s3 + $0x320] sm:$0xff]
        %v1596 = vld [vmem:[%s3 + $0x328] sm:$0xff]
        %v1597 = vld [vmem:[%s3 + $0x330] sm:$0xff]
        %v1598 = vld [vmem:[%s3 + $0x338] sm:$0xff]
        %v1599 = vld [vmem:[%s3 + $0x340] sm:$0xff]
        %v1600 = vld [vmem:[%s3 + $0x348] sm:$0xff]
        %v1601 = vld [vmem:[%s3 + $0x350] sm:$0xff]
        %v1602 = vld [vmem:[%s3 + $0x358] sm:$0xff]
        %v1603 = vld [vmem:[%s3 + $0x360] sm:$0xff]
        %v1604 = vld [vmem:[%s3 + $0x368] sm:$0xff]
        %v1605 = vld [vmem:[%s3 + $0x370] sm:$0xff]
        %v1606 = vld [vmem:[%s3 + $0x378] sm:$0xff]
        %v1607 = vld [vmem:[%s3 + $0x380] sm:$0xff]
        %v1608 = vld [vmem:[%s3 + $0x388] sm:$0xff]
        %v1609 = vld [vmem:[%s3 + $0x390] sm:$0xff]
        %v1610 = vld [vmem:[%s3 + $0x398] sm:$0xff]
        %v1611 = vld [vmem:[%s3 + $0x3a0] sm:$0xff]
        %v1612 = vld [vmem:[%s3 + $0x3a8] sm:$0xff]
        %v1613 = vld [vmem:[%s3 + $0x3b0] sm:$0xff]
        %v1614 = vld [vmem:[%s3 + $0x3b8] sm:$0xff]
        %v1615 = vld [vmem:[%s3 + $0x3c0] sm:$0xff]
        %v1616 = vld [vmem:[%s3 + $0x3c8] sm:$0xff]
        %v1617 = vld [vmem:[%s3 + $0x3d0] sm:$0xff]
        %v1618 = vld [vmem:[%s3 + $0x3d8] sm:$0xff]
        %v1619 = vld [vmem:[%s3 + $0x3e0] sm:$0xff]
        %v1620 = vld [vmem:[%s3 + $0x3e8] sm:$0xff]
        %v1621 = vld [vmem:[%s3 + $0x3f0] sm:$0xff]
        %v1622 = vld [vmem:[%s3 + $0x3f8] sm:$0xff]
        %v1624 = vshrl.u32 %v1557, 16
        %v1626 = vshll.u32 %v1557, 16
        %v1628 = vrot.slane %v1626, 1
        %v1629 = vor.u32 %v1624, %v1628
        %v1631 = vshrl.u32 %v1558, 16
        %v1633 = vshll.u32 %v1558, 16
        %v1635 = vrot.slane %v1633, 1
        %v1636 = vor.u32 %v1631, %v1635
        %v1703 = vunpack.c.l.b16 %v1559
        %v1704 = vunpack.c.h.b16 %v1559
        %v1705 = vunpack.c.l.b16 %v1560
        %v1706 = vunpack.c.h.b16 %v1560
        %v1707 = vunpack.c.l.b16 %v1561
        %v1708 = vunpack.c.h.b16 %v1561
        %v1709 = vunpack.c.l.b16 %v1562
        %v1710 = vunpack.c.h.b16 %v1562
        %v1711 = vunpack.c.l.b16 %v1563
        %v1712 = vunpack.c.h.b16 %v1563
        %v1713 = vunpack.c.l.b16 %v1564
        %v1714 = vunpack.c.h.b16 %v1564
        %v1715 = vunpack.c.l.b16 %v1565
        %v1716 = vunpack.c.h.b16 %v1565
        %v1717 = vunpack.c.l.b16 %v1566
        %v1718 = vunpack.c.h.b16 %v1566
        %v1719 = vunpack.c.l.b16 %v1567
        %v1720 = vunpack.c.h.b16 %v1567
        %v1721 = vunpack.c.l.b16 %v1568
        %v1722 = vunpack.c.h.b16 %v1568
        %v1723 = vunpack.c.l.b16 %v1569
        %v1724 = vunpack.c.h.b16 %v1569
        %v1725 = vunpack.c.l.b16 %v1570
        %v1726 = vunpack.c.h.b16 %v1570
        %v1727 = vunpack.c.l.b16 %v1571
        %v1728 = vunpack.c.h.b16 %v1571
        %v1729 = vunpack.c.l.b16 %v1572
        %v1730 = vunpack.c.h.b16 %v1572
        %v1731 = vunpack.c.l.b16 %v1573
        %v1732 = vunpack.c.h.b16 %v1573
        %v1733 = vunpack.c.l.b16 %v1574
        %v1734 = vunpack.c.h.b16 %v1574
        %v1735 = vunpack.c.l.b16 %v1575
        %v1736 = vunpack.c.h.b16 %v1575
        %v1737 = vunpack.c.l.b16 %v1576
        %v1738 = vunpack.c.h.b16 %v1576
        %v1739 = vunpack.c.l.b16 %v1577
        %v1740 = vunpack.c.h.b16 %v1577
        %v1741 = vunpack.c.l.b16 %v1578
        %v1742 = vunpack.c.h.b16 %v1578
        %v1743 = vunpack.c.l.b16 %v1579
        %v1744 = vunpack.c.h.b16 %v1579
        %v1745 = vunpack.c.l.b16 %v1580
        %v1746 = vunpack.c.h.b16 %v1580
        %v1747 = vunpack.c.l.b16 %v1581
        %v1748 = vunpack.c.h.b16 %v1581
        %v1749 = vunpack.c.l.b16 %v1582
        %v1750 = vunpack.c.h.b16 %v1582
        %v1751 = vunpack.c.l.b16 %v1583
        %v1752 = vunpack.c.h.b16 %v1583
        %v1753 = vunpack.c.l.b16 %v1584
        %v1754 = vunpack.c.h.b16 %v1584
        %v1755 = vunpack.c.l.b16 %v1585
        %v1756 = vunpack.c.h.b16 %v1585
        %v1757 = vunpack.c.l.b16 %v1586
        %v1758 = vunpack.c.h.b16 %v1586
        %v1759 = vunpack.c.l.b16 %v1587
        %v1760 = vunpack.c.h.b16 %v1587
        %v1761 = vunpack.c.l.b16 %v1588
        %v1762 = vunpack.c.h.b16 %v1588
        %v1763 = vunpack.c.l.b16 %v1589
        %v1764 = vunpack.c.h.b16 %v1589
        %v1765 = vunpack.c.l.b16 %v1590
        %v1766 = vunpack.c.h.b16 %v1590
        %v1767 = vunpack.c.l.b16 %v1591
        %v1768 = vunpack.c.h.b16 %v1591
        %v1769 = vunpack.c.l.b16 %v1592
        %v1770 = vunpack.c.h.b16 %v1592
        %v1771 = vunpack.c.l.b16 %v1593
        %v1772 = vunpack.c.h.b16 %v1593
        %v1773 = vunpack.c.l.b16 %v1594
        %v1774 = vunpack.c.h.b16 %v1594
        %v1775 = vunpack.c.l.b16 %v1595
        %v1776 = vunpack.c.h.b16 %v1595
        %v1777 = vunpack.c.l.b16 %v1596
        %v1778 = vunpack.c.h.b16 %v1596
        %v1779 = vunpack.c.l.b16 %v1597
        %v1780 = vunpack.c.h.b16 %v1597
        %v1781 = vunpack.c.l.b16 %v1598
        %v1782 = vunpack.c.h.b16 %v1598
        %v1783 = vunpack.c.l.b16 %v1599
        %v1784 = vunpack.c.h.b16 %v1599
        %v1785 = vunpack.c.l.b16 %v1600
        %v1786 = vunpack.c.h.b16 %v1600
        %v1787 = vunpack.c.l.b16 %v1601
        %v1788 = vunpack.c.h.b16 %v1601
        %v1789 = vunpack.c.l.b16 %v1602
        %v1790 = vunpack.c.h.b16 %v1602
        %v1791 = vunpack.c.l.b16 %v1603
        %v1792 = vunpack.c.h.b16 %v1603
        %v1793 = vunpack.c.l.b16 %v1604
        %v1794 = vunpack.c.h.b16 %v1604
        %v1795 = vunpack.c.l.b16 %v1605
        %v1796 = vunpack.c.h.b16 %v1605
        %v1797 = vunpack.c.l.b16 %v1606
        %v1798 = vunpack.c.h.b16 %v1606
        %v1799 = vunpack.c.l.b16 %v1607
        %v1800 = vunpack.c.h.b16 %v1607
        %v1801 = vunpack.c.l.b16 %v1608
        %v1802 = vunpack.c.h.b16 %v1608
        %v1803 = vunpack.c.l.b16 %v1609
        %v1804 = vunpack.c.h.b16 %v1609
        %v1805 = vunpack.c.l.b16 %v1610
        %v1806 = vunpack.c.h.b16 %v1610
        %v1807 = vunpack.c.l.b16 %v1611
        %v1808 = vunpack.c.h.b16 %v1611
        %v1809 = vunpack.c.l.b16 %v1612
        %v1810 = vunpack.c.h.b16 %v1612
        %v1811 = vunpack.c.l.b16 %v1613
        %v1812 = vunpack.c.h.b16 %v1613
        %v1813 = vunpack.c.l.b16 %v1614
        %v1814 = vunpack.c.h.b16 %v1614
        %v1815 = vunpack.c.l.b16 %v1615
        %v1816 = vunpack.c.h.b16 %v1615
        %v1817 = vunpack.c.l.b16 %v1616
        %v1818 = vunpack.c.h.b16 %v1616
        %v1819 = vunpack.c.l.b16 %v1617
        %v1820 = vunpack.c.h.b16 %v1617
        %v1821 = vunpack.c.l.b16 %v1618
        %v1822 = vunpack.c.h.b16 %v1618
        %v1823 = vunpack.c.l.b16 %v1619
        %v1824 = vunpack.c.h.b16 %v1619
        %v1825 = vunpack.c.l.b16 %v1620
        %v1826 = vunpack.c.h.b16 %v1620
        %v1827 = vunpack.c.l.b16 %v1621
        %v1828 = vunpack.c.h.b16 %v1621
        %v1829 = vunpack.c.l.b16 %v1622
        %v1830 = vunpack.c.h.b16 %v1622
        %v1831 = vpack.c.b16 %v1707, %v1703
        %v1832 = vpack.c.b16 %v1708, %v1704
        %v1833 = vpack.c.b16 %v1709, %v1705
        %v1834 = vpack.c.b16 %v1710, %v1706
        %v1835 = vpack.c.b16 %v1715, %v1711
        %v1836 = vpack.c.b16 %v1716, %v1712
        %v1837 = vpack.c.b16 %v1717, %v1713
        %v1838 = vpack.c.b16 %v1718, %v1714
        %v1839 = vpack.c.b16 %v1723, %v1719
        %v1840 = vpack.c.b16 %v1724, %v1720
        %v1841 = vpack.c.b16 %v1725, %v1721
        %v1842 = vpack.c.b16 %v1726, %v1722
        %v1843 = vpack.c.b16 %v1731, %v1727
        %v1844 = vpack.c.b16 %v1732, %v1728
        %v1845 = vpack.c.b16 %v1733, %v1729
        %v1846 = vpack.c.b16 %v1734, %v1730
        %v1847 = vpack.c.b16 %v1739, %v1735
        %v1848 = vpack.c.b16 %v1740, %v1736
        %v1849 = vpack.c.b16 %v1741, %v1737
        %v1850 = vpack.c.b16 %v1742, %v1738
        %v1851 = vpack.c.b16 %v1747, %v1743
        %v1852 = vpack.c.b16 %v1748, %v1744
        %v1853 = vpack.c.b16 %v1749, %v1745
        %v1854 = vpack.c.b16 %v1750, %v1746
        %v1855 = vpack.c.b16 %v1755, %v1751
        %v1856 = vpack.c.b16 %v1756, %v1752
        %v1857 = vpack.c.b16 %v1757, %v1753
        %v1858 = vpack.c.b16 %v1758, %v1754
        %v1859 = vpack.c.b16 %v1763, %v1759
        %v1860 = vpack.c.b16 %v1764, %v1760
        %v1861 = vpack.c.b16 %v1765, %v1761
        %v1862 = vpack.c.b16 %v1766, %v1762
        %v1863 = vpack.c.b16 %v1771, %v1767
        %v1864 = vpack.c.b16 %v1772, %v1768
        %v1865 = vpack.c.b16 %v1773, %v1769
        %v1866 = vpack.c.b16 %v1774, %v1770
        %v1867 = vpack.c.b16 %v1779, %v1775
        %v1868 = vpack.c.b16 %v1780, %v1776
        %v1869 = vpack.c.b16 %v1781, %v1777
        %v1870 = vpack.c.b16 %v1782, %v1778
        %v1871 = vpack.c.b16 %v1787, %v1783
        %v1872 = vpack.c.b16 %v1788, %v1784
        %v1873 = vpack.c.b16 %v1789, %v1785
        %v1874 = vpack.c.b16 %v1790, %v1786
        %v1875 = vpack.c.b16 %v1795, %v1791
        %v1876 = vpack.c.b16 %v1796, %v1792
        %v1877 = vpack.c.b16 %v1797, %v1793
        %v1878 = vpack.c.b16 %v1798, %v1794
        %v1879 = vpack.c.b16 %v1803, %v1799
        %v1880 = vpack.c.b16 %v1804, %v1800
        %v1881 = vpack.c.b16 %v1805, %v1801
        %v1882 = vpack.c.b16 %v1806, %v1802
        %v1883 = vpack.c.b16 %v1811, %v1807
        %v1884 = vpack.c.b16 %v1812, %v1808
        %v1885 = vpack.c.b16 %v1813, %v1809
        %v1886 = vpack.c.b16 %v1814, %v1810
        %v1887 = vpack.c.b16 %v1819, %v1815
        %v1888 = vpack.c.b16 %v1820, %v1816
        %v1889 = vpack.c.b16 %v1821, %v1817
        %v1890 = vpack.c.b16 %v1822, %v1818
        %v1891 = vpack.c.b16 %v1827, %v1823
        %v1892 = vpack.c.b16 %v1828, %v1824
        %v1893 = vpack.c.b16 %v1829, %v1825
        %v1894 = vpack.c.b16 %v1830, %v1826
        %1959 = vmatprep.subr.bf16.mxu0 %v1832
        %1960 = vmatpush1.bf16.msra.mxu0 %v1831
        %1961 = vmatprep.subr.bf16.mxu0 %v1836
        %1962 = vmatpush1.bf16.msra.mxu0 %v1835
        %1963 = vmatprep.subr.bf16.mxu0 %v1840
        %1964 = vmatpush1.bf16.msra.mxu0 %v1839
        %1965 = vmatprep.subr.bf16.mxu0 %v1844
        %1966 = vmatpush1.bf16.msra.mxu0 %v1843
        %1967 = vmatprep.subr.bf16.mxu0 %v1848
        %1968 = vmatpush1.bf16.msra.mxu0 %v1847
        %1969 = vmatprep.subr.bf16.mxu0 %v1852
        %1970 = vmatpush1.bf16.msra.mxu0 %v1851
        %1971 = vmatprep.subr.bf16.mxu0 %v1856
        %1972 = vmatpush1.bf16.msra.mxu0 %v1855
        %1973 = vmatprep.subr.bf16.mxu0 %v1860
        %1974 = vmatpush1.bf16.msra.mxu0 %v1859
        %1975 = vmatprep.subr.bf16.mxu0 %v1864
        %1976 = vmatpush1.bf16.msra.mxu0 %v1863
        %1977 = vmatprep.subr.bf16.mxu0 %v1868
        %1978 = vmatpush1.bf16.msra.mxu0 %v1867
        %1979 = vmatprep.subr.bf16.mxu0 %v1872
        %1980 = vmatpush1.bf16.msra.mxu0 %v1871
        %1981 = vmatprep.subr.bf16.mxu0 %v1876
        %1982 = vmatpush1.bf16.msra.mxu0 %v1875
        %1983 = vmatprep.subr.bf16.mxu0 %v1880
        %1984 = vmatpush1.bf16.msra.mxu0 %v1879
        %1985 = vmatprep.subr.bf16.mxu0 %v1884
        %1986 = vmatpush1.bf16.msra.mxu0 %v1883
        %1987 = vmatprep.subr.bf16.mxu0 %v1888
        %1988 = vmatpush1.bf16.msra.mxu0 %v1887
        %1989 = vmatprep.subr.bf16.mxu0 %v1892
        %1990 = vmatpush1.bf16.msra.mxu0 %v1891
        %1991 = vmatprep.mubr.bf16.mxu0 %v1636
        %1992 = vmatmul.mubr.bf16.gmra.mrb[0].mxu0 %v1629
        %v1993 = vpop.f32.mrb[0].mxu0
        %v1994 = vadd.f32 0.0, %v1993
        %v1995 = vpop.f32.mrb[0].mxu0
        %v1996 = vadd.f32 0.0, %v1995
        %v1997 = vpop.f32.mrb[0].mxu0
        %v1998 = vpop.f32.mrb[0].mxu0
        %1999 = vdwg.mxu0
        %2000 = vmatprep.subr.bf16.mxu0 %v1834
        %2001 = vmatpush1.bf16.msra.mxu0 %v1833
        %2002 = vmatprep.subr.bf16.mxu0 %v1838
        %2003 = vmatpush1.bf16.msra.mxu0 %v1837
        %2004 = vmatprep.subr.bf16.mxu0 %v1842
        %2005 = vmatpush1.bf16.msra.mxu0 %v1841
        %2006 = vmatprep.subr.bf16.mxu0 %v1846
        %2007 = vmatpush1.bf16.msra.mxu0 %v1845
        %2008 = vmatprep.subr.bf16.mxu0 %v1850
        %2009 = vmatpush1.bf16.msra.mxu0 %v1849
        %2010 = vmatprep.subr.bf16.mxu0 %v1854
        %2011 = vmatpush1.bf16.msra.mxu0 %v1853
        %2012 = vmatprep.subr.bf16.mxu0 %v1858
        %2013 = vmatpush1.bf16.msra.mxu0 %v1857
        %2014 = vmatprep.subr.bf16.mxu0 %v1862
        %2015 = vmatpush1.bf16.msra.mxu0 %v1861
        %2016 = vmatprep.subr.bf16.mxu0 %v1866
        %2017 = vmatpush1.bf16.msra.mxu0 %v1865
        %2018 = vmatprep.subr.bf16.mxu0 %v1870
        %2019 = vmatpush1.bf16.msra.mxu0 %v1869
        %2020 = vmatprep.subr.bf16.mxu0 %v1874
        %2021 = vmatpush1.bf16.msra.mxu0 %v1873
        %2022 = vmatprep.subr.bf16.mxu0 %v1878
        %2023 = vmatpush1.bf16.msra.mxu0 %v1877
        %2024 = vmatprep.subr.bf16.mxu0 %v1882
        %2025 = vmatpush1.bf16.msra.mxu0 %v1881
        %2026 = vmatprep.subr.bf16.mxu0 %v1886
        %2027 = vmatpush1.bf16.msra.mxu0 %v1885
        %2028 = vmatprep.subr.bf16.mxu0 %v1890
        %2029 = vmatpush1.bf16.msra.mxu0 %v1889
        %2030 = vmatprep.subr.bf16.mxu0 %v1894
        %2031 = vmatpush1.bf16.msra.mxu0 %v1893
        %2032 = vmatprep.mubr.bf16.mxu0 %v1636
        %2033 = vmatmul.mubr.bf16.gmra.mrb[0].mxu0 %v1629
        %v2034 = vpop.f32.mrb[0].mxu0
        %v2035 = vadd.f32 0.0, %v2034
        %v2036 = vpop.f32.mrb[0].mxu0
        %v2037 = vadd.f32 0.0, %v2036
        %v2038 = vpop.f32.mrb[0].mxu0
        %v2039 = vpop.f32.mrb[0].mxu0
        %2040 = vdwg.mxu0
        %v2105 = vunpack.c.l.b16 %v1489
        %v2106 = vunpack.c.h.b16 %v1489
        %v2107 = vunpack.c.l.b16 %v1490
        %v2108 = vunpack.c.h.b16 %v1490
        %v2109 = vunpack.c.l.b16 %v1491
        %v2110 = vunpack.c.h.b16 %v1491
        %v2111 = vunpack.c.l.b16 %v1492
        %v2112 = vunpack.c.h.b16 %v1492
        %v2113 = vunpack.c.l.b16 %v1493
        %v2114 = vunpack.c.h.b16 %v1493
        %v2115 = vunpack.c.l.b16 %v1494
        %v2116 = vunpack.c.h.b16 %v1494
        %v2117 = vunpack.c.l.b16 %v1495
        %v2118 = vunpack.c.h.b16 %v1495
        %v2119 = vunpack.c.l.b16 %v1496
        %v2120 = vunpack.c.h.b16 %v1496
        %v2121 = vunpack.c.l.b16 %v1497
        %v2122 = vunpack.c.h.b16 %v1497
        %v2123 = vunpack.c.l.b16 %v1498
        %v2124 = vunpack.c.h.b16 %v1498
        %v2125 = vunpack.c.l.b16 %v1499
        %v2126 = vunpack.c.h.b16 %v1499
        %v2127 = vunpack.c.l.b16 %v1500
        %v2128 = vunpack.c.h.b16 %v1500
        %v2129 = vunpack.c.l.b16 %v1501
        %v2130 = vunpack.c.h.b16 %v1501
        %v2131 = vunpack.c.l.b16 %v1502
        %v2132 = vunpack.c.h.b16 %v1502
        %v2133 = vunpack.c.l.b16 %v1503
        %v2134 = vunpack.c.h.b16 %v1503
        %v2135 = vunpack.c.l.b16 %v1504
        %v2136 = vunpack.c.h.b16 %v1504
        %v2137 = vunpack.c.l.b16 %v1505
        %v2138 = vunpack.c.h.b16 %v1505
        %v2139 = vunpack.c.l.b16 %v1506
        %v2140 = vunpack.c.h.b16 %v1506
        %v2141 = vunpack.c.l.b16 %v1507
        %v2142 = vunpack.c.h.b16 %v1507
        %v2143 = vunpack.c.l.b16 %v1508
        %v2144 = vunpack.c.h.b16 %v1508
        %v2145 = vunpack.c.l.b16 %v1509
        %v2146 = vunpack.c.h.b16 %v1509
        %v2147 = vunpack.c.l.b16 %v1510
        %v2148 = vunpack.c.h.b16 %v1510
        %v2149 = vunpack.c.l.b16 %v1511
        %v2150 = vunpack.c.h.b16 %v1511
        %v2151 = vunpack.c.l.b16 %v1512
        %v2152 = vunpack.c.h.b16 %v1512
        %v2153 = vunpack.c.l.b16 %v1513
        %v2154 = vunpack.c.h.b16 %v1513
        %v2155 = vunpack.c.l.b16 %v1514
        %v2156 = vunpack.c.h.b16 %v1514
        %v2157 = vunpack.c.l.b16 %v1515
        %v2158 = vunpack.c.h.b16 %v1515
        %v2159 = vunpack.c.l.b16 %v1516
        %v2160 = vunpack.c.h.b16 %v1516
        %v2161 = vunpack.c.l.b16 %v1517
        %v2162 = vunpack.c.h.b16 %v1517
        %v2163 = vunpack.c.l.b16 %v1518
        %v2164 = vunpack.c.h.b16 %v1518
        %v2165 = vunpack.c.l.b16 %v1519
        %v2166 = vunpack.c.h.b16 %v1519
        %v2167 = vunpack.c.l.b16 %v1520
        %v2168 = vunpack.c.h.b16 %v1520
        %v2169 = vunpack.c.l.b16 %v1521
        %v2170 = vunpack.c.h.b16 %v1521
        %v2171 = vunpack.c.l.b16 %v1522
        %v2172 = vunpack.c.h.b16 %v1522
        %v2173 = vunpack.c.l.b16 %v1523
        %v2174 = vunpack.c.h.b16 %v1523
        %v2175 = vunpack.c.l.b16 %v1524
        %v2176 = vunpack.c.h.b16 %v1524
        %v2177 = vunpack.c.l.b16 %v1525
        %v2178 = vunpack.c.h.b16 %v1525
        %v2179 = vunpack.c.l.b16 %v1526
        %v2180 = vunpack.c.h.b16 %v1526
        %v2181 = vunpack.c.l.b16 %v1527
        %v2182 = vunpack.c.h.b16 %v1527
        %v2183 = vunpack.c.l.b16 %v1528
        %v2184 = vunpack.c.h.b16 %v1528
        %v2185 = vunpack.c.l.b16 %v1529
        %v2186 = vunpack.c.h.b16 %v1529
        %v2187 = vunpack.c.l.b16 %v1530
        %v2188 = vunpack.c.h.b16 %v1530
        %v2189 = vunpack.c.l.b16 %v1531
        %v2190 = vunpack.c.h.b16 %v1531
        %v2191 = vunpack.c.l.b16 %v1532
        %v2192 = vunpack.c.h.b16 %v1532
        %v2193 = vunpack.c.l.b16 %v1533
        %v2194 = vunpack.c.h.b16 %v1533
        %v2195 = vunpack.c.l.b16 %v1534
        %v2196 = vunpack.c.h.b16 %v1534
        %v2197 = vunpack.c.l.b16 %v1535
        %v2198 = vunpack.c.h.b16 %v1535
        %v2199 = vunpack.c.l.b16 %v1536
        %v2200 = vunpack.c.h.b16 %v1536
        %v2201 = vunpack.c.l.b16 %v1537
        %v2202 = vunpack.c.h.b16 %v1537
        %v2203 = vunpack.c.l.b16 %v1538
        %v2204 = vunpack.c.h.b16 %v1538
        %v2205 = vunpack.c.l.b16 %v1539
        %v2206 = vunpack.c.h.b16 %v1539
        %v2207 = vunpack.c.l.b16 %v1540
        %v2208 = vunpack.c.h.b16 %v1540
        %v2209 = vunpack.c.l.b16 %v1541
        %v2210 = vunpack.c.h.b16 %v1541
        %v2211 = vunpack.c.l.b16 %v1542
        %v2212 = vunpack.c.h.b16 %v1542
        %v2213 = vunpack.c.l.b16 %v1543
        %v2214 = vunpack.c.h.b16 %v1543
        %v2215 = vunpack.c.l.b16 %v1544
        %v2216 = vunpack.c.h.b16 %v1544
        %v2217 = vunpack.c.l.b16 %v1545
        %v2218 = vunpack.c.h.b16 %v1545
        %v2219 = vunpack.c.l.b16 %v1546
        %v2220 = vunpack.c.h.b16 %v1546
        %v2221 = vunpack.c.l.b16 %v1547
        %v2222 = vunpack.c.h.b16 %v1547
        %v2223 = vunpack.c.l.b16 %v1548
        %v2224 = vunpack.c.h.b16 %v1548
        %v2225 = vunpack.c.l.b16 %v1549
        %v2226 = vunpack.c.h.b16 %v1549
        %v2227 = vunpack.c.l.b16 %v1550
        %v2228 = vunpack.c.h.b16 %v1550
        %v2229 = vunpack.c.l.b16 %v1551
        %v2230 = vunpack.c.h.b16 %v1551
        %v2231 = vunpack.c.l.b16 %v1552
        %v2232 = vunpack.c.h.b16 %v1552
        %v2233 = vpack.c.b16 %v2109, %v2105
        %v2234 = vpack.c.b16 %v2110, %v2106
        %v2235 = vpack.c.b16 %v2111, %v2107
        %v2236 = vpack.c.b16 %v2112, %v2108
        %v2237 = vpack.c.b16 %v2117, %v2113
        %v2238 = vpack.c.b16 %v2118, %v2114
        %v2239 = vpack.c.b16 %v2119, %v2115
        %v2240 = vpack.c.b16 %v2120, %v2116
        %v2241 = vpack.c.b16 %v2125, %v2121
        %v2242 = vpack.c.b16 %v2126, %v2122
        %v2243 = vpack.c.b16 %v2127, %v2123
        %v2244 = vpack.c.b16 %v2128, %v2124
        %v2245 = vpack.c.b16 %v2133, %v2129
        %v2246 = vpack.c.b16 %v2134, %v2130
        %v2247 = vpack.c.b16 %v2135, %v2131
        %v2248 = vpack.c.b16 %v2136, %v2132
        %v2249 = vpack.c.b16 %v2141, %v2137
        %v2250 = vpack.c.b16 %v2142, %v2138
        %v2251 = vpack.c.b16 %v2143, %v2139
        %v2252 = vpack.c.b16 %v2144, %v2140
        %v2253 = vpack.c.b16 %v2149, %v2145
        %v2254 = vpack.c.b16 %v2150, %v2146
        %v2255 = vpack.c.b16 %v2151, %v2147
        %v2256 = vpack.c.b16 %v2152, %v2148
        %v2257 = vpack.c.b16 %v2157, %v2153
        %v2258 = vpack.c.b16 %v2158, %v2154
        %v2259 = vpack.c.b16 %v2159, %v2155
        %v2260 = vpack.c.b16 %v2160, %v2156
        %v2261 = vpack.c.b16 %v2165, %v2161
        %v2262 = vpack.c.b16 %v2166, %v2162
        %v2263 = vpack.c.b16 %v2167, %v2163
        %v2264 = vpack.c.b16 %v2168, %v2164
        %v2265 = vpack.c.b16 %v2173, %v2169
        %v2266 = vpack.c.b16 %v2174, %v2170
        %v2267 = vpack.c.b16 %v2175, %v2171
        %v2268 = vpack.c.b16 %v2176, %v2172
        %v2269 = vpack.c.b16 %v2181, %v2177
        %v2270 = vpack.c.b16 %v2182, %v2178
        %v2271 = vpack.c.b16 %v2183, %v2179
        %v2272 = vpack.c.b16 %v2184, %v2180
        %v2273 = vpack.c.b16 %v2189, %v2185
        %v2274 = vpack.c.b16 %v2190, %v2186
        %v2275 = vpack.c.b16 %v2191, %v2187
        %v2276 = vpack.c.b16 %v2192, %v2188
        %v2277 = vpack.c.b16 %v2197, %v2193
        %v2278 = vpack.c.b16 %v2198, %v2194
        %v2279 = vpack.c.b16 %v2199, %v2195
        %v2280 = vpack.c.b16 %v2200, %v2196
        %v2281 = vpack.c.b16 %v2205, %v2201
        %v2282 = vpack.c.b16 %v2206, %v2202
        %v2283 = vpack.c.b16 %v2207, %v2203
        %v2284 = vpack.c.b16 %v2208, %v2204
        %v2285 = vpack.c.b16 %v2213, %v2209
        %v2286 = vpack.c.b16 %v2214, %v2210
        %v2287 = vpack.c.b16 %v2215, %v2211
        %v2288 = vpack.c.b16 %v2216, %v2212
        %v2289 = vpack.c.b16 %v2221, %v2217
        %v2290 = vpack.c.b16 %v2222, %v2218
        %v2291 = vpack.c.b16 %v2223, %v2219
        %v2292 = vpack.c.b16 %v2224, %v2220
        %v2293 = vpack.c.b16 %v2229, %v2225
        %v2294 = vpack.c.b16 %v2230, %v2226
        %v2295 = vpack.c.b16 %v2231, %v2227
        %v2296 = vpack.c.b16 %v2232, %v2228
        %2361 = vmatprep.subr.bf16.mxu0 %v2234
        %2362 = vmatpush1.bf16.msra.mxu0 %v2233
        %2363 = vmatprep.subr.bf16.mxu0 %v2238
        %2364 = vmatpush1.bf16.msra.mxu0 %v2237
        %2365 = vmatprep.subr.bf16.mxu0 %v2242
        %2366 = vmatpush1.bf16.msra.mxu0 %v2241
        %2367 = vmatprep.subr.bf16.mxu0 %v2246
        %2368 = vmatpush1.bf16.msra.mxu0 %v2245
        %2369 = vmatprep.subr.bf16.mxu0 %v2250
        %2370 = vmatpush1.bf16.msra.mxu0 %v2249
        %2371 = vmatprep.subr.bf16.mxu0 %v2254
        %2372 = vmatpush1.bf16.msra.mxu0 %v2253
        %2373 = vmatprep.subr.bf16.mxu0 %v2258
        %2374 = vmatpush1.bf16.msra.mxu0 %v2257
        %2375 = vmatprep.subr.bf16.mxu0 %v2262
        %2376 = vmatpush1.bf16.msra.mxu0 %v2261
        %2377 = vmatprep.subr.bf16.mxu0 %v2266
        %2378 = vmatpush1.bf16.msra.mxu0 %v2265
        %2379 = vmatprep.subr.bf16.mxu0 %v2270
        %2380 = vmatpush1.bf16.msra.mxu0 %v2269
        %2381 = vmatprep.subr.bf16.mxu0 %v2274
        %2382 = vmatpush1.bf16.msra.mxu0 %v2273
        %2383 = vmatprep.subr.bf16.mxu0 %v2278
        %2384 = vmatpush1.bf16.msra.mxu0 %v2277
        %2385 = vmatprep.subr.bf16.mxu0 %v2282
        %2386 = vmatpush1.bf16.msra.mxu0 %v2281
        %2387 = vmatprep.subr.bf16.mxu0 %v2286
        %2388 = vmatpush1.bf16.msra.mxu0 %v2285
        %2389 = vmatprep.subr.bf16.mxu0 %v2290
        %2390 = vmatpush1.bf16.msra.mxu0 %v2289
        %2391 = vmatprep.subr.bf16.mxu0 %v2294
        %2392 = vmatpush1.bf16.msra.mxu0 %v2293
        %2393 = vmatprep.mubr.bf16.mxu0 %v1488
        %2394 = vmatmul.mubr.bf16.gmra.mrb[0].mxu0 %v1487
        %v2395 = vpop.f32.mrb[0].mxu0
        %v2396 = vadd.f32 %v1994, %v2395
        %v2397 = vpop.f32.mrb[0].mxu0
        %v2398 = vadd.f32 %v1996, %v2397
        %v2399 = vpop.f32.mrb[0].mxu0
        %v2400 = vpop.f32.mrb[0].mxu0
        %2401 = vdwg.mxu0
        %2402 = vmatprep.subr.bf16.mxu0 %v2236
        %2403 = vmatpush1.bf16.msra.mxu0 %v2235
        %2404 = vmatprep.subr.bf16.mxu0 %v2240
        %2405 = vmatpush1.bf16.msra.mxu0 %v2239
        %2406 = vmatprep.subr.bf16.mxu0 %v2244
        %2407 = vmatpush1.bf16.msra.mxu0 %v2243
        %2408 = vmatprep.subr.bf16.mxu0 %v2248
        %2409 = vmatpush1.bf16.msra.mxu0 %v2247
        %2410 = vmatprep.subr.bf16.mxu0 %v2252
        %2411 = vmatpush1.bf16.msra.mxu0 %v2251
        %2412 = vmatprep.subr.bf16.mxu0 %v2256
        %2413 = vmatpush1.bf16.msra.mxu0 %v2255
        %2414 = vmatprep.subr.bf16.mxu0 %v2260
        %2415 = vmatpush1.bf16.msra.mxu0 %v2259
        %2416 = vmatprep.subr.bf16.mxu0 %v2264
        %2417 = vmatpush1.bf16.msra.mxu0 %v2263
        %2418 = vmatprep.subr.bf16.mxu0 %v2268
        %2419 = vmatpush1.bf16.msra.mxu0 %v2267
        %2420 = vmatprep.subr.bf16.mxu0 %v2272
        %2421 = vmatpush1.bf16.msra.mxu0 %v2271
        %2422 = vmatprep.subr.bf16.mxu0 %v2276
        %2423 = vmatpush1.bf16.msra.mxu0 %v2275
        %2424 = vmatprep.subr.bf16.mxu0 %v2280
        %2425 = vmatpush1.bf16.msra.mxu0 %v2279
        %2426 = vmatprep.subr.bf16.mxu0 %v2284
        %2427 = vmatpush1.bf16.msra.mxu0 %v2283
        %2428 = vmatprep.subr.bf16.mxu0 %v2288
        %2429 = vmatpush1.bf16.msra.mxu0 %v2287
        %2430 = vmatprep.subr.bf16.mxu0 %v2292
        %2431 = vmatpush1.bf16.msra.mxu0 %v2291
        %2432 = vmatprep.subr.bf16.mxu0 %v2296
        %2433 = vmatpush1.bf16.msra.mxu0 %v2295
        %2434 = vmatprep.mubr.bf16.mxu0 %v1488
        %2435 = vmatmul.mubr.bf16.gmra.mrb[0].mxu0 %v1487
        %v2436 = vpop.f32.mrb[0].mxu0
        %v2437 = vadd.f32 %v2035, %v2436
        %v2438 = vpop.f32.mrb[0].mxu0
        %v2439 = vadd.f32 %v2037, %v2438
        %v2440 = vpop.f32.mrb[0].mxu0
        %v2441 = vpop.f32.mrb[0].mxu0
        %2442 = vdwg.mxu0
        %v2443 = vld [vmem:[#allocation3] sm:$0xfc]
        %v2444 = vld [vmem:[#allocation3 + $0x8] sm:$0xfc]
        %v2445 = vld [vmem:[#allocation3 + $0x10] sm:$0x3]
        %v2446 = vld [vmem:[#allocation3 + $0x18] sm:$0x3]
        %v2447 = vpack.c.bf16 %v2445, %v2443
        %v2448 = vpack.c.bf16 %v2446, %v2444
        %v2449 = vld [vmem:[%s3 + $0x400] sm:$0xff]
        %v2450 = vld [vmem:[%s3 + $0x408] sm:$0xff]
        %v2451 = vld [vmem:[%s3 + $0x410] sm:$0xff]
        %v2452 = vld [vmem:[%s3 + $0x418] sm:$0xff]
        %v2453 = vld [vmem:[%s3 + $0x420] sm:$0xff]
        %v2454 = vld [vmem:[%s3 + $0x428] sm:$0xff]
        %v2455 = vld [vmem:[%s3 + $0x430] sm:$0xff]
        %v2456 = vld [vmem:[%s3 + $0x438] sm:$0xff]
        %v2457 = vld [vmem:[%s3 + $0x440] sm:$0xff]
        %v2458 = vld [vmem:[%s3 + $0x448] sm:$0xff]
        %v2459 = vld [vmem:[%s3 + $0x450] sm:$0xff]
        %v2460 = vld [vmem:[%s3 + $0x458] sm:$0xff]
        %v2461 = vld [vmem:[%s3 + $0x460] sm:$0xff]
        %v2462 = vld [vmem:[%s3 + $0x468] sm:$0xff]
        %v2463 = vld [vmem:[%s3 + $0x470] sm:$0xff]
        %v2464 = vld [vmem:[%s3 + $0x478] sm:$0xff]
        %v2465 = vld [vmem:[%s3 + $0x480] sm:$0xff]
        %v2466 = vld [vmem:[%s3 + $0x488] sm:$0xff]
        %v2467 = vld [vmem:[%s3 + $0x490] sm:$0xff]
        %v2468 = vld [vmem:[%s3 + $0x498] sm:$0xff]
        %v2469 = vld [vmem:[%s3 + $0x4a0] sm:$0xff]
        %v2470 = vld [vmem:[%s3 + $0x4a8] sm:$0xff]
        %v2471 = vld [vmem:[%s3 + $0x4b0] sm:$0xff]
        %v2472 = vld [vmem:[%s3 + $0x4b8] sm:$0xff]
        %v2473 = vld [vmem:[%s3 + $0x4c0] sm:$0xff]
        %v2474 = vld [vmem:[%s3 + $0x4c8] sm:$0xff]
        %v2475 = vld [vmem:[%s3 + $0x4d0] sm:$0xff]
        %v2476 = vld [vmem:[%s3 + $0x4d8] sm:$0xff]
        %v2477 = vld [vmem:[%s3 + $0x4e0] sm:$0xff]
        %v2478 = vld [vmem:[%s3 + $0x4e8] sm:$0xff]
        %v2479 = vld [vmem:[%s3 + $0x4f0] sm:$0xff]
        %v2480 = vld [vmem:[%s3 + $0x4f8] sm:$0xff]
        %v2481 = vld [vmem:[%s3 + $0x500] sm:$0xff]
        %v2482 = vld [vmem:[%s3 + $0x508] sm:$0xff]
        %v2483 = vld [vmem:[%s3 + $0x510] sm:$0xff]
        %v2484 = vld [vmem:[%s3 + $0x518] sm:$0xff]
        %v2485 = vld [vmem:[%s3 + $0x520] sm:$0xff]
        %v2486 = vld [vmem:[%s3 + $0x528] sm:$0xff]
        %v2487 = vld [vmem:[%s3 + $0x530] sm:$0xff]
        %v2488 = vld [vmem:[%s3 + $0x538] sm:$0xff]
        %v2489 = vld [vmem:[%s3 + $0x540] sm:$0xff]
        %v2490 = vld [vmem:[%s3 + $0x548] sm:$0xff]
        %v2491 = vld [vmem:[%s3 + $0x550] sm:$0xff]
        %v2492 = vld [vmem:[%s3 + $0x558] sm:$0xff]
        %v2493 = vld [vmem:[%s3 + $0x560] sm:$0xff]
        %v2494 = vld [vmem:[%s3 + $0x568] sm:$0xff]
        %v2495 = vld [vmem:[%s3 + $0x570] sm:$0xff]
        %v2496 = vld [vmem:[%s3 + $0x578] sm:$0xff]
        %v2497 = vld [vmem:[%s3 + $0x580] sm:$0xff]
        %v2498 = vld [vmem:[%s3 + $0x588] sm:$0xff]
        %v2499 = vld [vmem:[%s3 + $0x590] sm:$0xff]
        %v2500 = vld [vmem:[%s3 + $0x598] sm:$0xff]
        %v2501 = vld [vmem:[%s3 + $0x5a0] sm:$0xff]
        %v2502 = vld [vmem:[%s3 + $0x5a8] sm:$0xff]
        %v2503 = vld [vmem:[%s3 + $0x5b0] sm:$0xff]
        %v2504 = vld [vmem:[%s3 + $0x5b8] sm:$0xff]
        %v2505 = vld [vmem:[%s3 + $0x5c0] sm:$0xff]
        %v2506 = vld [vmem:[%s3 + $0x5c8] sm:$0xff]
        %v2507 = vld [vmem:[%s3 + $0x5d0] sm:$0xff]
        %v2508 = vld [vmem:[%s3 + $0x5d8] sm:$0xff]
        %v2509 = vld [vmem:[%s3 + $0x5e0] sm:$0xff]
        %v2510 = vld [vmem:[%s3 + $0x5e8] sm:$0xff]
        %v2511 = vld [vmem:[%s3 + $0x5f0] sm:$0xff]
        %v2512 = vld [vmem:[%s3 + $0x5f8] sm:$0xff]
        %v2515 = vrot.slane %v2447, 1
        %v2516 = vrot.slane %v2448, 1
        %v2583 = vunpack.c.l.b16 %v2449
        %v2584 = vunpack.c.h.b16 %v2449
        %v2585 = vunpack.c.l.b16 %v2450
        %v2586 = vunpack.c.h.b16 %v2450
        %v2587 = vunpack.c.l.b16 %v2451
        %v2588 = vunpack.c.h.b16 %v2451
        %v2589 = vunpack.c.l.b16 %v2452
        %v2590 = vunpack.c.h.b16 %v2452
        %v2591 = vunpack.c.l.b16 %v2453
        %v2592 = vunpack.c.h.b16 %v2453
        %v2593 = vunpack.c.l.b16 %v2454
        %v2594 = vunpack.c.h.b16 %v2454
        %v2595 = vunpack.c.l.b16 %v2455
        %v2596 = vunpack.c.h.b16 %v2455
        %v2597 = vunpack.c.l.b16 %v2456
        %v2598 = vunpack.c.h.b16 %v2456
        %v2599 = vunpack.c.l.b16 %v2457
        %v2600 = vunpack.c.h.b16 %v2457
        %v2601 = vunpack.c.l.b16 %v2458
        %v2602 = vunpack.c.h.b16 %v2458
        %v2603 = vunpack.c.l.b16 %v2459
        %v2604 = vunpack.c.h.b16 %v2459
        %v2605 = vunpack.c.l.b16 %v2460
        %v2606 = vunpack.c.h.b16 %v2460
        %v2607 = vunpack.c.l.b16 %v2461
        %v2608 = vunpack.c.h.b16 %v2461
        %v2609 = vunpack.c.l.b16 %v2462
        %v2610 = vunpack.c.h.b16 %v2462
        %v2611 = vunpack.c.l.b16 %v2463
        %v2612 = vunpack.c.h.b16 %v2463
        %v2613 = vunpack.c.l.b16 %v2464
        %v2614 = vunpack.c.h.b16 %v2464
        %v2615 = vunpack.c.l.b16 %v2465
        %v2616 = vunpack.c.h.b16 %v2465
        %v2617 = vunpack.c.l.b16 %v2466
        %v2618 = vunpack.c.h.b16 %v2466
        %v2619 = vunpack.c.l.b16 %v2467
        %v2620 = vunpack.c.h.b16 %v2467
        %v2621 = vunpack.c.l.b16 %v2468
        %v2622 = vunpack.c.h.b16 %v2468
        %v2623 = vunpack.c.l.b16 %v2469
        %v2624 = vunpack.c.h.b16 %v2469
        %v2625 = vunpack.c.l.b16 %v2470
        %v2626 = vunpack.c.h.b16 %v2470
        %v2627 = vunpack.c.l.b16 %v2471
        %v2628 = vunpack.c.h.b16 %v2471
        %v2629 = vunpack.c.l.b16 %v2472
        %v2630 = vunpack.c.h.b16 %v2472
        %v2631 = vunpack.c.l.b16 %v2473
        %v2632 = vunpack.c.h.b16 %v2473
        %v2633 = vunpack.c.l.b16 %v2474
        %v2634 = vunpack.c.h.b16 %v2474
        %v2635 = vunpack.c.l.b16 %v2475
        %v2636 = vunpack.c.h.b16 %v2475
        %v2637 = vunpack.c.l.b16 %v2476
        %v2638 = vunpack.c.h.b16 %v2476
        %v2639 = vunpack.c.l.b16 %v2477
        %v2640 = vunpack.c.h.b16 %v2477
        %v2641 = vunpack.c.l.b16 %v2478
        %v2642 = vunpack.c.h.b16 %v2478
        %v2643 = vunpack.c.l.b16 %v2479
        %v2644 = vunpack.c.h.b16 %v2479
        %v2645 = vunpack.c.l.b16 %v2480
        %v2646 = vunpack.c.h.b16 %v2480
        %v2647 = vunpack.c.l.b16 %v2481
        %v2648 = vunpack.c.h.b16 %v2481
        %v2649 = vunpack.c.l.b16 %v2482
        %v2650 = vunpack.c.h.b16 %v2482
        %v2651 = vunpack.c.l.b16 %v2483
        %v2652 = vunpack.c.h.b16 %v2483
        %v2653 = vunpack.c.l.b16 %v2484
        %v2654 = vunpack.c.h.b16 %v2484
        %v2655 = vunpack.c.l.b16 %v2485
        %v2656 = vunpack.c.h.b16 %v2485
        %v2657 = vunpack.c.l.b16 %v2486
        %v2658 = vunpack.c.h.b16 %v2486
        %v2659 = vunpack.c.l.b16 %v2487
        %v2660 = vunpack.c.h.b16 %v2487
        %v2661 = vunpack.c.l.b16 %v2488
        %v2662 = vunpack.c.h.b16 %v2488
        %v2663 = vunpack.c.l.b16 %v2489
        %v2664 = vunpack.c.h.b16 %v2489
        %v2665 = vunpack.c.l.b16 %v2490
        %v2666 = vunpack.c.h.b16 %v2490
        %v2667 = vunpack.c.l.b16 %v2491
        %v2668 = vunpack.c.h.b16 %v2491
        %v2669 = vunpack.c.l.b16 %v2492
        %v2670 = vunpack.c.h.b16 %v2492
        %v2671 = vunpack.c.l.b16 %v2493
        %v2672 = vunpack.c.h.b16 %v2493
        %v2673 = vunpack.c.l.b16 %v2494
        %v2674 = vunpack.c.h.b16 %v2494
        %v2675 = vunpack.c.l.b16 %v2495
        %v2676 = vunpack.c.h.b16 %v2495
        %v2677 = vunpack.c.l.b16 %v2496
        %v2678 = vunpack.c.h.b16 %v2496
        %v2679 = vunpack.c.l.b16 %v2497
        %v2680 = vunpack.c.h.b16 %v2497
        %v2681 = vunpack.c.l.b16 %v2498
        %v2682 = vunpack.c.h.b16 %v2498
        %v2683 = vunpack.c.l.b16 %v2499
        %v2684 = vunpack.c.h.b16 %v2499
        %v2685 = vunpack.c.l.b16 %v2500
        %v2686 = vunpack.c.h.b16 %v2500
        %v2687 = vunpack.c.l.b16 %v2501
        %v2688 = vunpack.c.h.b16 %v2501
        %v2689 = vunpack.c.l.b16 %v2502
        %v2690 = vunpack.c.h.b16 %v2502
        %v2691 = vunpack.c.l.b16 %v2503
        %v2692 = vunpack.c.h.b16 %v2503
        %v2693 = vunpack.c.l.b16 %v2504
        %v2694 = vunpack.c.h.b16 %v2504
        %v2695 = vunpack.c.l.b16 %v2505
        %v2696 = vunpack.c.h.b16 %v2505
        %v2697 = vunpack.c.l.b16 %v2506
        %v2698 = vunpack.c.h.b16 %v2506
        %v2699 = vunpack.c.l.b16 %v2507
        %v2700 = vunpack.c.h.b16 %v2507
        %v2701 = vunpack.c.l.b16 %v2508
        %v2702 = vunpack.c.h.b16 %v2508
        %v2703 = vunpack.c.l.b16 %v2509
        %v2704 = vunpack.c.h.b16 %v2509
        %v2705 = vunpack.c.l.b16 %v2510
        %v2706 = vunpack.c.h.b16 %v2510
        %v2707 = vunpack.c.l.b16 %v2511
        %v2708 = vunpack.c.h.b16 %v2511
        %v2709 = vunpack.c.l.b16 %v2512
        %v2710 = vunpack.c.h.b16 %v2512
        %v2711 = vpack.c.b16 %v2587, %v2583
        %v2712 = vpack.c.b16 %v2588, %v2584
        %v2713 = vpack.c.b16 %v2589, %v2585
        %v2714 = vpack.c.b16 %v2590, %v2586
        %v2715 = vpack.c.b16 %v2595, %v2591
        %v2716 = vpack.c.b16 %v2596, %v2592
        %v2717 = vpack.c.b16 %v2597, %v2593
        %v2718 = vpack.c.b16 %v2598, %v2594
        %v2719 = vpack.c.b16 %v2603, %v2599
        %v2720 = vpack.c.b16 %v2604, %v2600
        %v2721 = vpack.c.b16 %v2605, %v2601
        %v2722 = vpack.c.b16 %v2606, %v2602
        %v2723 = vpack.c.b16 %v2611, %v2607
        %v2724 = vpack.c.b16 %v2612, %v2608
        %v2725 = vpack.c.b16 %v2613, %v2609
        %v2726 = vpack.c.b16 %v2614, %v2610
        %v2727 = vpack.c.b16 %v2619, %v2615
        %v2728 = vpack.c.b16 %v2620, %v2616
        %v2729 = vpack.c.b16 %v2621, %v2617
        %v2730 = vpack.c.b16 %v2622, %v2618
        %v2731 = vpack.c.b16 %v2627, %v2623
        %v2732 = vpack.c.b16 %v2628, %v2624
        %v2733 = vpack.c.b16 %v2629, %v2625
        %v2734 = vpack.c.b16 %v2630, %v2626
        %v2735 = vpack.c.b16 %v2635, %v2631
        %v2736 = vpack.c.b16 %v2636, %v2632
        %v2737 = vpack.c.b16 %v2637, %v2633
        %v2738 = vpack.c.b16 %v2638, %v2634
        %v2739 = vpack.c.b16 %v2643, %v2639
        %v2740 = vpack.c.b16 %v2644, %v2640
        %v2741 = vpack.c.b16 %v2645, %v2641
        %v2742 = vpack.c.b16 %v2646, %v2642
        %v2743 = vpack.c.b16 %v2651, %v2647
        %v2744 = vpack.c.b16 %v2652, %v2648
        %v2745 = vpack.c.b16 %v2653, %v2649
        %v2746 = vpack.c.b16 %v2654, %v2650
        %v2747 = vpack.c.b16 %v2659, %v2655
        %v2748 = vpack.c.b16 %v2660, %v2656
        %v2749 = vpack.c.b16 %v2661, %v2657
        %v2750 = vpack.c.b16 %v2662, %v2658
        %v2751 = vpack.c.b16 %v2667, %v2663
        %v2752 = vpack.c.b16 %v2668, %v2664
        %v2753 = vpack.c.b16 %v2669, %v2665
        %v2754 = vpack.c.b16 %v2670, %v2666
        %v2755 = vpack.c.b16 %v2675, %v2671
        %v2756 = vpack.c.b16 %v2676, %v2672
        %v2757 = vpack.c.b16 %v2677, %v2673
        %v2758 = vpack.c.b16 %v2678, %v2674
        %v2759 = vpack.c.b16 %v2683, %v2679
        %v2760 = vpack.c.b16 %v2684, %v2680
        %v2761 = vpack.c.b16 %v2685, %v2681
        %v2762 = vpack.c.b16 %v2686, %v2682
        %v2763 = vpack.c.b16 %v2691, %v2687
        %v2764 = vpack.c.b16 %v2692, %v2688
        %v2765 = vpack.c.b16 %v2693, %v2689
        %v2766 = vpack.c.b16 %v2694, %v2690
        %v2767 = vpack.c.b16 %v2699, %v2695
        %v2768 = vpack.c.b16 %v2700, %v2696
        %v2769 = vpack.c.b16 %v2701, %v2697
        %v2770 = vpack.c.b16 %v2702, %v2698
        %v2771 = vpack.c.b16 %v2707, %v2703
        %v2772 = vpack.c.b16 %v2708, %v2704
        %v2773 = vpack.c.b16 %v2709, %v2705
        %v2774 = vpack.c.b16 %v2710, %v2706
        %2839 = vmatprep.subr.bf16.mxu0 %v2712
        %2840 = vmatpush1.bf16.msra.mxu0 %v2711
        %2841 = vmatprep.subr.bf16.mxu0 %v2716
        %2842 = vmatpush1.bf16.msra.mxu0 %v2715
        %2843 = vmatprep.subr.bf16.mxu0 %v2720
        %2844 = vmatpush1.bf16.msra.mxu0 %v2719
        %2845 = vmatprep.subr.bf16.mxu0 %v2724
        %2846 = vmatpush1.bf16.msra.mxu0 %v2723
        %2847 = vmatprep.subr.bf16.mxu0 %v2728
        %2848 = vmatpush1.bf16.msra.mxu0 %v2727
        %2849 = vmatprep.subr.bf16.mxu0 %v2732
        %2850 = vmatpush1.bf16.msra.mxu0 %v2731
        %2851 = vmatprep.subr.bf16.mxu0 %v2736
        %2852 = vmatpush1.bf16.msra.mxu0 %v2735
        %2853 = vmatprep.subr.bf16.mxu0 %v2740
        %2854 = vmatpush1.bf16.msra.mxu0 %v2739
        %2855 = vmatprep.subr.bf16.mxu0 %v2744
        %2856 = vmatpush1.bf16.msra.mxu0 %v2743
        %2857 = vmatprep.subr.bf16.mxu0 %v2748
        %2858 = vmatpush1.bf16.msra.mxu0 %v2747
        %2859 = vmatprep.subr.bf16.mxu0 %v2752
        %2860 = vmatpush1.bf16.msra.mxu0 %v2751
        %2861 = vmatprep.subr.bf16.mxu0 %v2756
        %2862 = vmatpush1.bf16.msra.mxu0 %v2755
        %2863 = vmatprep.subr.bf16.mxu0 %v2760
        %2864 = vmatpush1.bf16.msra.mxu0 %v2759
        %2865 = vmatprep.subr.bf16.mxu0 %v2764
        %2866 = vmatpush1.bf16.msra.mxu0 %v2763
        %2867 = vmatprep.subr.bf16.mxu0 %v2768
        %2868 = vmatpush1.bf16.msra.mxu0 %v2767
        %2869 = vmatprep.subr.bf16.mxu0 %v2772
        %2870 = vmatpush1.bf16.msra.mxu0 %v2771
        %2871 = vmatprep.mubr.bf16.mxu0 %v2516
        %2872 = vmatmul.mubr.bf16.gmra.mrb[0].mxu0 %v2515
        %v2873 = vpop.f32.mrb[0].mxu0
        %v2874 = vadd.f32 0.0, %v2873
        %v2875 = vpop.f32.mrb[0].mxu0
        %v2876 = vadd.f32 0.0, %v2875
        %v2877 = vpop.f32.mrb[0].mxu0
        %v2878 = vpop.f32.mrb[0].mxu0
        %2879 = vdwg.mxu0
        %2880 = vmatprep.subr.bf16.mxu0 %v2714
        %2881 = vmatpush1.bf16.msra.mxu0 %v2713
        %2882 = vmatprep.subr.bf16.mxu0 %v2718
        %2883 = vmatpush1.bf16.msra.mxu0 %v2717
        %2884 = vmatprep.subr.bf16.mxu0 %v2722
        %2885 = vmatpush1.bf16.msra.mxu0 %v2721
        %2886 = vmatprep.subr.bf16.mxu0 %v2726
        %2887 = vmatpush1.bf16.msra.mxu0 %v2725
        %2888 = vmatprep.subr.bf16.mxu0 %v2730
        %2889 = vmatpush1.bf16.msra.mxu0 %v2729
        %2890 = vmatprep.subr.bf16.mxu0 %v2734
        %2891 = vmatpush1.bf16.msra.mxu0 %v2733
        %2892 = vmatprep.subr.bf16.mxu0 %v2738
        %2893 = vmatpush1.bf16.msra.mxu0 %v2737
        %2894 = vmatprep.subr.bf16.mxu0 %v2742
        %2895 = vmatpush1.bf16.msra.mxu0 %v2741
        %2896 = vmatprep.subr.bf16.mxu0 %v2746
        %2897 = vmatpush1.bf16.msra.mxu0 %v2745
        %2898 = vmatprep.subr.bf16.mxu0 %v2750
        %2899 = vmatpush1.bf16.msra.mxu0 %v2749
        %2900 = vmatprep.subr.bf16.mxu0 %v2754
        %2901 = vmatpush1.bf16.msra.mxu0 %v2753
        %2902 = vmatprep.subr.bf16.mxu0 %v2758
        %2903 = vmatpush1.bf16.msra.mxu0 %v2757
        %2904 = vmatprep.subr.bf16.mxu0 %v2762
        %2905 = vmatpush1.bf16.msra.mxu0 %v2761
        %2906 = vmatprep.subr.bf16.mxu0 %v2766
        %2907 = vmatpush1.bf16.msra.mxu0 %v2765
        %2908 = vmatprep.subr.bf16.mxu0 %v2770
        %2909 = vmatpush1.bf16.msra.mxu0 %v2769
        %2910 = vmatprep.subr.bf16.mxu0 %v2774
        %2911 = vmatpush1.bf16.msra.mxu0 %v2773
        %2912 = vmatprep.mubr.bf16.mxu0 %v2516
        %2913 = vmatmul.mubr.bf16.gmra.mrb[0].mxu0 %v2515
        %v2914 = vpop.f32.mrb[0].mxu0
        %v2915 = vadd.f32 0.0, %v2914
        %v2916 = vpop.f32.mrb[0].mxu0
        %v2917 = vadd.f32 0.0, %v2916
        %v2918 = vpop.f32.mrb[0].mxu0
        %v2919 = vpop.f32.mrb[0].mxu0
        %2920 = vdwg.mxu0
        %v2921 = vadd.f32 %v2396, %v2874
        %v2922 = vadd.f32 %v2398, %v2876
        %v2923 = vadd.f32 %v2437, %v2915
        %v2924 = vadd.f32 %v2439, %v2917
        %v2925 = vld [vmem:[%s4] sm:$0xf]
        %v2927 = vlaneseq
        %v2928 = vshrl.u32 %v2927, 7
        %v2929 = vsub.s32 0, %v2928
        %v2930 = vrot.slane %v2925, %v2929
        %v2931 = vlaneseq
        %v2932 = vshrl.u32 %v2931, 7
        %v2933 = vsub.s32 1, %v2932
        %v2934 = vrot.slane %v2925, %v2933
        %v2935 = vlaneseq
        %v2936 = vshrl.u32 %v2935, 7
        %v2937 = vsub.s32 2, %v2936
        %v2938 = vrot.slane %v2925, %v2937
        %v2939 = vlaneseq
        %v2940 = vshrl.u32 %v2939, 7
        %v2941 = vsub.s32 3, %v2940
        %v2942 = vrot.slane %v2925, %v2941
        %v2947 = vadd.f32 %v2921, %v2930
        %v2948 = vadd.f32 %v2922, %v2934
        %v2949 = vadd.f32 %v2923, %v2938
        %v2950 = vadd.f32 %v2924, %v2942
        %v2951 = vmax.f32 %v2947, 0.0
        %v2952 = vmax.f32 %v2948, 0.0
        %v2953 = vmax.f32 %v2949, 0.0
        %v2954 = vmax.f32 %v2950, 0.0
        %v2959 = vcombine.low %v2951, %v2952
        %v2960 = vcombine.high %v2951, %v2952
        %v2961 = vcombine.low %v2953, %v2954
        %v2962 = vcombine.high %v2953, %v2954
        %v2964 = vunpack.c.l.s4 1983009808
        %v2965 = vunpack.c.0.s8 %v2964
        %v2966 = vlaneseq
        %v2967 = vshrl.u32 %v2966, 7
        %v2968 = vsub.s32 %v2965, %v2967
        %v2969 = vrot.slane %v2959, %v2968
        %v2971 = vunpack.c.l.s4 1983009808
        %v2972 = vunpack.c.0.s8 %v2971
        %v2973 = vlaneseq
        %v2974 = vshrl.u32 %v2973, 7
        %v2975 = vsub.s32 %v2972, %v2974
        %v2976 = vrot.slane %v2960, %v2975
        %v2978 = vunpack.c.l.s4 1983009808
        %v2979 = vunpack.c.0.s8 %v2978
        %v2980 = vlaneseq
        %v2981 = vshrl.u32 %v2980, 7
        %v2982 = vsub.s32 %v2979, %v2981
        %v2983 = vrot.slane %v2961, %v2982
        %v2985 = vunpack.c.l.s4 1983009808
        %v2986 = vunpack.c.0.s8 %v2985
        %v2987 = vlaneseq
        %v2988 = vshrl.u32 %v2987, 7
        %v2989 = vsub.s32 %v2986, %v2988
        %v2990 = vrot.slane %v2962, %v2989
        %v2991 = vcombine.low %v2969, %v2983
        %v2992 = vcombine.high %v2969, %v2983
        %v2993 = vcombine.low %v2976, %v2990
        %v2994 = vcombine.high %v2976, %v2990
        %v2995 = vcombine.high %v2991, %v2991
        %v2997 = vunpack.c.l.s4 1983009808
        %v2998 = vunpack.c.0.s8 %v2997
        %v2999 = vlaneseq
        %v3000 = vshrl.u32 %v2999, 7
        %v3001 = vsub.s32 %v2998, %v3000
        %v3002 = vrot.slane %v2991, %v3001
        %v3004 = vunpack.c.l.s4 1983009808
        %v3005 = vunpack.c.0.s8 %v3004
        %v3006 = vlaneseq
        %v3007 = vshrl.u32 %v3006, 7
        %v3008 = vsub.s32 %v3005, %v3007
        %v3009 = vrot.slane %v2995, %v3008
        %v3010 = vcombine.high %v3002, %v3002
        %v3011 = vcombine.high %v3009, %v3009
        %v3012 = vcombine.high %v2992, %v2992
        %v3014 = vunpack.c.l.s4 1983009808
        %v3015 = vunpack.c.0.s8 %v3014
        %v3016 = vlaneseq
        %v3017 = vshrl.u32 %v3016, 7
        %v3018 = vsub.s32 %v3015, %v3017
        %v3019 = vrot.slane %v2992, %v3018
        %v3021 = vunpack.c.l.s4 1983009808
        %v3022 = vunpack.c.0.s8 %v3021
        %v3023 = vlaneseq
        %v3024 = vshrl.u32 %v3023, 7
        %v3025 = vsub.s32 %v3022, %v3024
        %v3026 = vrot.slane %v3012, %v3025
        %v3027 = vcombine.high %v3019, %v3019
        %v3028 = vcombine.high %v3026, %v3026
        %v3029 = vcombine.high %v2993, %v2993
        %v3031 = vunpack.c.l.s4 1983009808
        %v3032 = vunpack.c.0.s8 %v3031
        %v3033 = vlaneseq
        %v3034 = vshrl.u32 %v3033, 7
        %v3035 = vsub.s32 %v3032, %v3034
        %v3036 = vrot.slane %v2993, %v3035
        %v3038 = vunpack.c.l.s4 1983009808
        %v3039 = vunpack.c.0.s8 %v3038
        %v3040 = vlaneseq
        %v3041 = vshrl.u32 %v3040, 7
        %v3042 = vsub.s32 %v3039, %v3041
        %v3043 = vrot.slane %v3029, %v3042
        %v3044 = vcombine.high %v3036, %v3036
        %v3045 = vcombine.high %v3043, %v3043
        %v3046 = vcombine.high %v2994, %v2994
        %v3048 = vunpack.c.l.s4 1983009808
        %v3049 = vunpack.c.0.s8 %v3048
        %v3050 = vlaneseq
        %v3051 = vshrl.u32 %v3050, 7
        %v3052 = vsub.s32 %v3049, %v3051
        %v3053 = vrot.slane %v2994, %v3052
        %v3055 = vunpack.c.l.s4 1983009808
        %v3056 = vunpack.c.0.s8 %v3055
        %v3057 = vlaneseq
        %v3058 = vshrl.u32 %v3057, 7
        %v3059 = vsub.s32 %v3056, %v3058
        %v3060 = vrot.slane %v3046, %v3059
        %v3061 = vcombine.high %v3053, %v3053
        %v3062 = vcombine.high %v3060, %v3060
        %v3079 = vsel %vm1198, %v3002, -inf
        %v3080 = vrot.slane %v3079, 4
        %v3081 = vmax.f32 %v3079, %v3080
        %v3082 = vrot.slane %v3081, 2
        %v3083 = vmax.f32 %v3081, %v3082
        %v3084 = vrot.slane %v3083, 1
        %v3085 = vmax.f32 %v3083, %v3084
        %v3086 = vsel %vm1198, %v3010, -inf
        %v3087 = vrot.slane %v3086, 4
        %v3088 = vmax.f32 %v3086, %v3087
        %v3089 = vrot.slane %v3088, 2
        %v3090 = vmax.f32 %v3088, %v3089
        %v3091 = vrot.slane %v3090, 1
        %v3092 = vmax.f32 %v3090, %v3091
        %v3093 = vsel %vm1198, %v3009, -inf
        %v3094 = vrot.slane %v3093, 4
        %v3095 = vmax.f32 %v3093, %v3094
        %v3096 = vrot.slane %v3095, 2
        %v3097 = vmax.f32 %v3095, %v3096
        %v3098 = vrot.slane %v3097, 1
        %v3099 = vmax.f32 %v3097, %v3098
        %v3100 = vsel %vm1198, %v3011, -inf
        %v3101 = vrot.slane %v3100, 4
        %v3102 = vmax.f32 %v3100, %v3101
        %v3103 = vrot.slane %v3102, 2
        %v3104 = vmax.f32 %v3102, %v3103
        %v3105 = vrot.slane %v3104, 1
        %v3106 = vmax.f32 %v3104, %v3105
        %v3107 = vsel %vm1198, %v3019, -inf
        %v3108 = vrot.slane %v3107, 4
        %v3109 = vmax.f32 %v3107, %v3108
        %v3110 = vrot.slane %v3109, 2
        %v3111 = vmax.f32 %v3109, %v3110
        %v3112 = vrot.slane %v3111, 1
        %v3113 = vmax.f32 %v3111, %v3112
        %v3114 = vsel %vm1198, %v3027, -inf
        %v3115 = vrot.slane %v3114, 4
        %v3116 = vmax.f32 %v3114, %v3115
        %v3117 = vrot.slane %v3116, 2
        %v3118 = vmax.f32 %v3116, %v3117
        %v3119 = vrot.slane %v3118, 1
        %v3120 = vmax.f32 %v3118, %v3119
        %v3121 = vsel %vm1198, %v3026, -inf
        %v3122 = vrot.slane %v3121, 4
        %v3123 = vmax.f32 %v3121, %v3122
        %v3124 = vrot.slane %v3123, 2
        %v3125 = vmax.f32 %v3123, %v3124
        %v3126 = vrot.slane %v3125, 1
        %v3127 = vmax.f32 %v3125, %v3126
        %v3128 = vsel %vm1198, %v3028, -inf
        %v3129 = vrot.slane %v3128, 4
        %v3130 = vmax.f32 %v3128, %v3129
        %v3131 = vrot.slane %v3130, 2
        %v3132 = vmax.f32 %v3130, %v3131
        %v3133 = vrot.slane %v3132, 1
        %v3134 = vmax.f32 %v3132, %v3133
        %v3135 = vsel %vm1198, %v3036, -inf
        %v3136 = vrot.slane %v3135, 4
        %v3137 = vmax.f32 %v3135, %v3136
        %v3138 = vrot.slane %v3137, 2
        %v3139 = vmax.f32 %v3137, %v3138
        %v3140 = vrot.slane %v3139, 1
        %v3141 = vmax.f32 %v3139, %v3140
        %v3142 = vsel %vm1198, %v3044, -inf
        %v3143 = vrot.slane %v3142, 4
        %v3144 = vmax.f32 %v3142, %v3143
        %v3145 = vrot.slane %v3144, 2
        %v3146 = vmax.f32 %v3144, %v3145
        %v3147 = vrot.slane %v3146, 1
        %v3148 = vmax.f32 %v3146, %v3147
        %v3149 = vsel %vm1198, %v3043, -inf
        %v3150 = vrot.slane %v3149, 4
        %v3151 = vmax.f32 %v3149, %v3150
        %v3152 = vrot.slane %v3151, 2
        %v3153 = vmax.f32 %v3151, %v3152
        %v3154 = vrot.slane %v3153, 1
        %v3155 = vmax.f32 %v3153, %v3154
        %v3156 = vsel %vm1198, %v3045, -inf
        %v3157 = vrot.slane %v3156, 4
        %v3158 = vmax.f32 %v3156, %v3157
        %v3159 = vrot.slane %v3158, 2
        %v3160 = vmax.f32 %v3158, %v3159
        %v3161 = vrot.slane %v3160, 1
        %v3162 = vmax.f32 %v3160, %v3161
        %v3163 = vsel %vm1198, %v3053, -inf
        %v3164 = vrot.slane %v3163, 4
        %v3165 = vmax.f32 %v3163, %v3164
        %v3166 = vrot.slane %v3165, 2
        %v3167 = vmax.f32 %v3165, %v3166
        %v3168 = vrot.slane %v3167, 1
        %v3169 = vmax.f32 %v3167, %v3168
        %v3170 = vsel %vm1198, %v3061, -inf
        %v3171 = vrot.slane %v3170, 4
        %v3172 = vmax.f32 %v3170, %v3171
        %v3173 = vrot.slane %v3172, 2
        %v3174 = vmax.f32 %v3172, %v3173
        %v3175 = vrot.slane %v3174, 1
        %v3176 = vmax.f32 %v3174, %v3175
        %v3177 = vsel %vm1198, %v3060, -inf
        %v3178 = vrot.slane %v3177, 4
        %v3179 = vmax.f32 %v3177, %v3178
        %v3180 = vrot.slane %v3179, 2
        %v3181 = vmax.f32 %v3179, %v3180
        %v3182 = vrot.slane %v3181, 1
        %v3183 = vmax.f32 %v3181, %v3182
        %v3184 = vsel %vm1198, %v3062, -inf
        %v3185 = vrot.slane %v3184, 4
        %v3186 = vmax.f32 %v3184, %v3185
        %v3187 = vrot.slane %v3186, 2
        %v3188 = vmax.f32 %v3186, %v3187
        %v3189 = vrot.slane %v3188, 1
        %v3190 = vmax.f32 %v3188, %v3189
        %v3191 = vmax.f32 %v3085, %v3099
        %v3192 = vmax.f32 %v3092, %v3106
        %v3193 = vmax.f32 %v3113, %v3127
        %v3194 = vmax.f32 %v3120, %v3134
        %v3195 = vmax.f32 %v3141, %v3155
        %v3196 = vmax.f32 %v3148, %v3162
        %v3197 = vmax.f32 %v3169, %v3183
        %v3198 = vmax.f32 %v3176, %v3190
        %3199 = vst [vmem:[#allocation4] sm:$0x3f] 0.0
        %3200 = vst [vmem:[#allocation4 + $0x8] sm:$0x3f] 0.0
        %v3209 = vsel %vm1459, %v3193, %v3191
        %v3210 = vsel %vm1461, %v3195, %v3209
        %v3211 = vsel %vm1463, %v3197, %v3210
        %v3212 = vsel %vm1459, %v3194, %v3192
        %v3213 = vsel %vm1461, %v3196, %v3212
        %v3214 = vsel %vm1463, %v3198, %v3213
        %3217 = vst [vmem:[#allocation4] sm:$0x1e] %v3211
        %3218 = vst [vmem:[#allocation4 + $0x8] sm:$0x1e] %v3214
        %v3219 = vld [vmem:[#allocation4] sm:$0xf]
        %v3220 = vld [vmem:[#allocation4 + $0x8] sm:$0xf]
        %v3221 = vpack.c.bf16 %v3219, %v3219
        %v3222 = vpack.c.bf16 %v3220, %v3220
        %v3223 = vld [vmem:[%s5] sm:$0xff]
        %v3224 = vld [vmem:[%s5 + $0x8] sm:$0xff]
        %v3225 = vld [vmem:[%s5 + $0x10] sm:$0xff]
        %v3226 = vld [vmem:[%s5 + $0x18] sm:$0xff]
        %v3227 = vld [vmem:[%s5 + $0x20] sm:$0xff]
        %v3228 = vld [vmem:[%s5 + $0x28] sm:$0xff]
        %v3229 = vld [vmem:[%s5 + $0x30] sm:$0xff]
        %v3230 = vld [vmem:[%s5 + $0x38] sm:$0xff]
        %v3231 = vld [vmem:[%s5 + $0x40] sm:$0xff]
        %v3232 = vld [vmem:[%s5 + $0x48] sm:$0xff]
        %v3233 = vld [vmem:[%s5 + $0x50] sm:$0xff]
        %v3234 = vld [vmem:[%s5 + $0x58] sm:$0xff]
        %v3235 = vld [vmem:[%s5 + $0x60] sm:$0xff]
        %v3236 = vld [vmem:[%s5 + $0x68] sm:$0xff]
        %v3237 = vld [vmem:[%s5 + $0x70] sm:$0xff]
        %v3238 = vld [vmem:[%s5 + $0x78] sm:$0xff]
        %v3239 = vld [vmem:[%s5 + $0x80] sm:$0xff]
        %v3240 = vld [vmem:[%s5 + $0x88] sm:$0xff]
        %v3241 = vld [vmem:[%s5 + $0x90] sm:$0xff]
        %v3242 = vld [vmem:[%s5 + $0x98] sm:$0xff]
        %v3243 = vld [vmem:[%s5 + $0xa0] sm:$0xff]
        %v3244 = vld [vmem:[%s5 + $0xa8] sm:$0xff]
        %v3245 = vld [vmem:[%s5 + $0xb0] sm:$0xff]
        %v3246 = vld [vmem:[%s5 + $0xb8] sm:$0xff]
        %v3247 = vld [vmem:[%s5 + $0xc0] sm:$0xff]
        %v3248 = vld [vmem:[%s5 + $0xc8] sm:$0xff]
        %v3249 = vld [vmem:[%s5 + $0xd0] sm:$0xff]
        %v3250 = vld [vmem:[%s5 + $0xd8] sm:$0xff]
        %v3251 = vld [vmem:[%s5 + $0xe0] sm:$0xff]
        %v3252 = vld [vmem:[%s5 + $0xe8] sm:$0xff]
        %v3253 = vld [vmem:[%s5 + $0xf0] sm:$0xff]
        %v3254 = vld [vmem:[%s5 + $0xf8] sm:$0xff]
        %v3255 = vld [vmem:[%s5 + $0x100] sm:$0xff]
        %v3256 = vld [vmem:[%s5 + $0x108] sm:$0xff]
        %v3257 = vld [vmem:[%s5 + $0x110] sm:$0xff]
        %v3258 = vld [vmem:[%s5 + $0x118] sm:$0xff]
        %v3259 = vld [vmem:[%s5 + $0x120] sm:$0xff]
        %v3260 = vld [vmem:[%s5 + $0x128] sm:$0xff]
        %v3261 = vld [vmem:[%s5 + $0x130] sm:$0xff]
        %v3262 = vld [vmem:[%s5 + $0x138] sm:$0xff]
        %v3263 = vld [vmem:[%s5 + $0x140] sm:$0xff]
        %v3264 = vld [vmem:[%s5 + $0x148] sm:$0xff]
        %v3265 = vld [vmem:[%s5 + $0x150] sm:$0xff]
        %v3266 = vld [vmem:[%s5 + $0x158] sm:$0xff]
        %v3267 = vld [vmem:[%s5 + $0x160] sm:$0xff]
        %v3268 = vld [vmem:[%s5 + $0x168] sm:$0xff]
        %v3269 = vld [vmem:[%s5 + $0x170] sm:$0xff]
        %v3270 = vld [vmem:[%s5 + $0x178] sm:$0xff]
        %v3271 = vld [vmem:[%s5 + $0x180] sm:$0xff]
        %v3272 = vld [vmem:[%s5 + $0x188] sm:$0xff]
        %v3273 = vld [vmem:[%s5 + $0x190] sm:$0xff]
        %v3274 = vld [vmem:[%s5 + $0x198] sm:$0xff]
        %v3275 = vld [vmem:[%s5 + $0x1a0] sm:$0xff]
        %v3276 = vld [vmem:[%s5 + $0x1a8] sm:$0xff]
        %v3277 = vld [vmem:[%s5 + $0x1b0] sm:$0xff]
        %v3278 = vld [vmem:[%s5 + $0x1b8] sm:$0xff]
        %v3279 = vld [vmem:[%s5 + $0x1c0] sm:$0xff]
        %v3280 = vld [vmem:[%s5 + $0x1c8] sm:$0xff]
        %v3281 = vld [vmem:[%s5 + $0x1d0] sm:$0xff]
        %v3282 = vld [vmem:[%s5 + $0x1d8] sm:$0xff]
        %v3283 = vld [vmem:[%s5 + $0x1e0] sm:$0xff]
        %v3284 = vld [vmem:[%s5 + $0x1e8] sm:$0xff]
        %v3285 = vld [vmem:[%s5 + $0x1f0] sm:$0xff]
        %v3286 = vld [vmem:[%s5 + $0x1f8] sm:$0xff]
        %v3287 = vld [vmem:[#allocation4] sm:$0x1e]
        %v3288 = vld [vmem:[#allocation4 + $0x8] sm:$0x1e]
        %v3289 = vpack.c.bf16 %v3287, %v3287
        %v3290 = vpack.c.bf16 %v3288, %v3288
        %v3291 = vld [vmem:[%s5 + $0x200] sm:$0xff]
        %v3292 = vld [vmem:[%s5 + $0x208] sm:$0xff]
        %v3293 = vld [vmem:[%s5 + $0x210] sm:$0xff]
        %v3294 = vld [vmem:[%s5 + $0x218] sm:$0xff]
        %v3295 = vld [vmem:[%s5 + $0x220] sm:$0xff]
        %v3296 = vld [vmem:[%s5 + $0x228] sm:$0xff]
        %v3297 = vld [vmem:[%s5 + $0x230] sm:$0xff]
        %v3298 = vld [vmem:[%s5 + $0x238] sm:$0xff]
        %v3299 = vld [vmem:[%s5 + $0x240] sm:$0xff]
        %v3300 = vld [vmem:[%s5 + $0x248] sm:$0xff]
        %v3301 = vld [vmem:[%s5 + $0x250] sm:$0xff]
        %v3302 = vld [vmem:[%s5 + $0x258] sm:$0xff]
        %v3303 = vld [vmem:[%s5 + $0x260] sm:$0xff]
        %v3304 = vld [vmem:[%s5 + $0x268] sm:$0xff]
        %v3305 = vld [vmem:[%s5 + $0x270] sm:$0xff]
        %v3306 = vld [vmem:[%s5 + $0x278] sm:$0xff]
        %v3307 = vld [vmem:[%s5 + $0x280] sm:$0xff]
        %v3308 = vld [vmem:[%s5 + $0x288] sm:$0xff]
        %v3309 = vld [vmem:[%s5 + $0x290] sm:$0xff]
        %v3310 = vld [vmem:[%s5 + $0x298] sm:$0xff]
        %v3311 = vld [vmem:[%s5 + $0x2a0] sm:$0xff]
        %v3312 = vld [vmem:[%s5 + $0x2a8] sm:$0xff]
        %v3313 = vld [vmem:[%s5 + $0x2b0] sm:$0xff]
        %v3314 = vld [vmem:[%s5 + $0x2b8] sm:$0xff]
        %v3315 = vld [vmem:[%s5 + $0x2c0] sm:$0xff]
        %v3316 = vld [vmem:[%s5 + $0x2c8] sm:$0xff]
        %v3317 = vld [vmem:[%s5 + $0x2d0] sm:$0xff]
        %v3318 = vld [vmem:[%s5 + $0x2d8] sm:$0xff]
        %v3319 = vld [vmem:[%s5 + $0x2e0] sm:$0xff]
        %v3320 = vld [vmem:[%s5 + $0x2e8] sm:$0xff]
        %v3321 = vld [vmem:[%s5 + $0x2f0] sm:$0xff]
        %v3322 = vld [vmem:[%s5 + $0x2f8] sm:$0xff]
        %v3323 = vld [vmem:[%s5 + $0x300] sm:$0xff]
        %v3324 = vld [vmem:[%s5 + $0x308] sm:$0xff]
        %v3325 = vld [vmem:[%s5 + $0x310] sm:$0xff]
        %v3326 = vld [vmem:[%s5 + $0x318] sm:$0xff]
        %v3327 = vld [vmem:[%s5 + $0x320] sm:$0xff]
        %v3328 = vld [vmem:[%s5 + $0x328] sm:$0xff]
        %v3329 = vld [vmem:[%s5 + $0x330] sm:$0xff]
        %v3330 = vld [vmem:[%s5 + $0x338] sm:$0xff]
        %v3331 = vld [vmem:[%s5 + $0x340] sm:$0xff]
        %v3332 = vld [vmem:[%s5 + $0x348] sm:$0xff]
        %v3333 = vld [vmem:[%s5 + $0x350] sm:$0xff]
        %v3334 = vld [vmem:[%s5 + $0x358] sm:$0xff]
        %v3335 = vld [vmem:[%s5 + $0x360] sm:$0xff]
        %v3336 = vld [vmem:[%s5 + $0x368] sm:$0xff]
        %v3337 = vld [vmem:[%s5 + $0x370] sm:$0xff]
        %v3338 = vld [vmem:[%s5 + $0x378] sm:$0xff]
        %v3339 = vld [vmem:[%s5 + $0x380] sm:$0xff]
        %v3340 = vld [vmem:[%s5 + $0x388] sm:$0xff]
        %v3341 = vld [vmem:[%s5 + $0x390] sm:$0xff]
        %v3342 = vld [vmem:[%s5 + $0x398] sm:$0xff]
        %v3343 = vld [vmem:[%s5 + $0x3a0] sm:$0xff]
        %v3344 = vld [vmem:[%s5 + $0x3a8] sm:$0xff]
        %v3345 = vld [vmem:[%s5 + $0x3b0] sm:$0xff]
        %v3346 = vld [vmem:[%s5 + $0x3b8] sm:$0xff]
        %v3347 = vld [vmem:[%s5 + $0x3c0] sm:$0xff]
        %v3348 = vld [vmem:[%s5 + $0x3c8] sm:$0xff]
        %v3349 = vld [vmem:[%s5 + $0x3d0] sm:$0xff]
        %v3350 = vld [vmem:[%s5 + $0x3d8] sm:$0xff]
        %v3351 = vld [vmem:[%s5 + $0x3e0] sm:$0xff]
        %v3352 = vld [vmem:[%s5 + $0x3e8] sm:$0xff]
        %v3353 = vld [vmem:[%s5 + $0x3f0] sm:$0xff]
        %v3354 = vld [vmem:[%s5 + $0x3f8] sm:$0xff]
        %v3356 = vshrl.u32 %v3289, 16
        %v3358 = vshll.u32 %v3289, 16
        %v3360 = vrot.slane %v3358, 1
        %v3361 = vor.u32 %v3356, %v3360
        %v3363 = vshrl.u32 %v3290, 16
        %v3365 = vshll.u32 %v3290, 16
        %v3367 = vrot.slane %v3365, 1
        %v3368 = vor.u32 %v3363, %v3367
        %v3435 = vunpack.c.l.b16 %v3291
        %v3436 = vunpack.c.h.b16 %v3291
        %v3437 = vunpack.c.l.b16 %v3292
        %v3438 = vunpack.c.h.b16 %v3292
        %v3439 = vunpack.c.l.b16 %v3293
        %v3440 = vunpack.c.h.b16 %v3293
        %v3441 = vunpack.c.l.b16 %v3294
        %v3442 = vunpack.c.h.b16 %v3294
        %v3443 = vunpack.c.l.b16 %v3295
        %v3444 = vunpack.c.h.b16 %v3295
        %v3445 = vunpack.c.l.b16 %v3296
        %v3446 = vunpack.c.h.b16 %v3296
        %v3447 = vunpack.c.l.b16 %v3297
        %v3448 = vunpack.c.h.b16 %v3297
        %v3449 = vunpack.c.l.b16 %v3298
        %v3450 = vunpack.c.h.b16 %v3298
        %v3451 = vunpack.c.l.b16 %v3299
        %v3452 = vunpack.c.h.b16 %v3299
        %v3453 = vunpack.c.l.b16 %v3300
        %v3454 = vunpack.c.h.b16 %v3300
        %v3455 = vunpack.c.l.b16 %v3301
        %v3456 = vunpack.c.h.b16 %v3301
        %v3457 = vunpack.c.l.b16 %v3302
        %v3458 = vunpack.c.h.b16 %v3302
        %v3459 = vunpack.c.l.b16 %v3303
        %v3460 = vunpack.c.h.b16 %v3303
        %v3461 = vunpack.c.l.b16 %v3304
        %v3462 = vunpack.c.h.b16 %v3304
        %v3463 = vunpack.c.l.b16 %v3305
        %v3464 = vunpack.c.h.b16 %v3305
        %v3465 = vunpack.c.l.b16 %v3306
        %v3466 = vunpack.c.h.b16 %v3306
        %v3467 = vunpack.c.l.b16 %v3307
        %v3468 = vunpack.c.h.b16 %v3307
        %v3469 = vunpack.c.l.b16 %v3308
        %v3470 = vunpack.c.h.b16 %v3308
        %v3471 = vunpack.c.l.b16 %v3309
        %v3472 = vunpack.c.h.b16 %v3309
        %v3473 = vunpack.c.l.b16 %v3310
        %v3474 = vunpack.c.h.b16 %v3310
        %v3475 = vunpack.c.l.b16 %v3311
        %v3476 = vunpack.c.h.b16 %v3311
        %v3477 = vunpack.c.l.b16 %v3312
        %v3478 = vunpack.c.h.b16 %v3312
        %v3479 = vunpack.c.l.b16 %v3313
        %v3480 = vunpack.c.h.b16 %v3313
        %v3481 = vunpack.c.l.b16 %v3314
        %v3482 = vunpack.c.h.b16 %v3314
        %v3483 = vunpack.c.l.b16 %v3315
        %v3484 = vunpack.c.h.b16 %v3315
        %v3485 = vunpack.c.l.b16 %v3316
        %v3486 = vunpack.c.h.b16 %v3316
        %v3487 = vunpack.c.l.b16 %v3317
        %v3488 = vunpack.c.h.b16 %v3317
        %v3489 = vunpack.c.l.b16 %v3318
        %v3490 = vunpack.c.h.b16 %v3318
        %v3491 = vunpack.c.l.b16 %v3319
        %v3492 = vunpack.c.h.b16 %v3319
        %v3493 = vunpack.c.l.b16 %v3320
        %v3494 = vunpack.c.h.b16 %v3320
        %v3495 = vunpack.c.l.b16 %v3321
        %v3496 = vunpack.c.h.b16 %v3321
        %v3497 = vunpack.c.l.b16 %v3322
        %v3498 = vunpack.c.h.b16 %v3322
        %v3499 = vunpack.c.l.b16 %v3323
        %v3500 = vunpack.c.h.b16 %v3323
        %v3501 = vunpack.c.l.b16 %v3324
        %v3502 = vunpack.c.h.b16 %v3324
        %v3503 = vunpack.c.l.b16 %v3325
        %v3504 = vunpack.c.h.b16 %v3325
        %v3505 = vunpack.c.l.b16 %v3326
        %v3506 = vunpack.c.h.b16 %v3326
        %v3507 = vunpack.c.l.b16 %v3327
        %v3508 = vunpack.c.h.b16 %v3327
        %v3509 = vunpack.c.l.b16 %v3328
        %v3510 = vunpack.c.h.b16 %v3328
        %v3511 = vunpack.c.l.b16 %v3329
        %v3512 = vunpack.c.h.b16 %v3329
        %v3513 = vunpack.c.l.b16 %v3330
        %v3514 = vunpack.c.h.b16 %v3330
        %v3515 = vunpack.c.l.b16 %v3331
        %v3516 = vunpack.c.h.b16 %v3331
        %v3517 = vunpack.c.l.b16 %v3332
        %v3518 = vunpack.c.h.b16 %v3332
        %v3519 = vunpack.c.l.b16 %v3333
        %v3520 = vunpack.c.h.b16 %v3333
        %v3521 = vunpack.c.l.b16 %v3334
        %v3522 = vunpack.c.h.b16 %v3334
        %v3523 = vunpack.c.l.b16 %v3335
        %v3524 = vunpack.c.h.b16 %v3335
        %v3525 = vunpack.c.l.b16 %v3336
        %v3526 = vunpack.c.h.b16 %v3336
        %v3527 = vunpack.c.l.b16 %v3337
        %v3528 = vunpack.c.h.b16 %v3337
        %v3529 = vunpack.c.l.b16 %v3338
        %v3530 = vunpack.c.h.b16 %v3338
        %v3531 = vunpack.c.l.b16 %v3339
        %v3532 = vunpack.c.h.b16 %v3339
        %v3533 = vunpack.c.l.b16 %v3340
        %v3534 = vunpack.c.h.b16 %v3340
        %v3535 = vunpack.c.l.b16 %v3341
        %v3536 = vunpack.c.h.b16 %v3341
        %v3537 = vunpack.c.l.b16 %v3342
        %v3538 = vunpack.c.h.b16 %v3342
        %v3539 = vunpack.c.l.b16 %v3343
        %v3540 = vunpack.c.h.b16 %v3343
        %v3541 = vunpack.c.l.b16 %v3344
        %v3542 = vunpack.c.h.b16 %v3344
        %v3543 = vunpack.c.l.b16 %v3345
        %v3544 = vunpack.c.h.b16 %v3345
        %v3545 = vunpack.c.l.b16 %v3346
        %v3546 = vunpack.c.h.b16 %v3346
        %v3547 = vunpack.c.l.b16 %v3347
        %v3548 = vunpack.c.h.b16 %v3347
        %v3549 = vunpack.c.l.b16 %v3348
        %v3550 = vunpack.c.h.b16 %v3348
        %v3551 = vunpack.c.l.b16 %v3349
        %v3552 = vunpack.c.h.b16 %v3349
        %v3553 = vunpack.c.l.b16 %v3350
        %v3554 = vunpack.c.h.b16 %v3350
        %v3555 = vunpack.c.l.b16 %v3351
        %v3556 = vunpack.c.h.b16 %v3351
        %v3557 = vunpack.c.l.b16 %v3352
        %v3558 = vunpack.c.h.b16 %v3352
        %v3559 = vunpack.c.l.b16 %v3353
        %v3560 = vunpack.c.h.b16 %v3353
        %v3561 = vunpack.c.l.b16 %v3354
        %v3562 = vunpack.c.h.b16 %v3354
        %v3563 = vpack.c.b16 %v3439, %v3435
        %v3564 = vpack.c.b16 %v3440, %v3436
        %v3565 = vpack.c.b16 %v3441, %v3437
        %v3566 = vpack.c.b16 %v3442, %v3438
        %v3567 = vpack.c.b16 %v3447, %v3443
        %v3568 = vpack.c.b16 %v3448, %v3444
        %v3569 = vpack.c.b16 %v3449, %v3445
        %v3570 = vpack.c.b16 %v3450, %v3446
        %v3571 = vpack.c.b16 %v3455, %v3451
        %v3572 = vpack.c.b16 %v3456, %v3452
        %v3573 = vpack.c.b16 %v3457, %v3453
        %v3574 = vpack.c.b16 %v3458, %v3454
        %v3575 = vpack.c.b16 %v3463, %v3459
        %v3576 = vpack.c.b16 %v3464, %v3460
        %v3577 = vpack.c.b16 %v3465, %v3461
        %v3578 = vpack.c.b16 %v3466, %v3462
        %v3579 = vpack.c.b16 %v3471, %v3467
        %v3580 = vpack.c.b16 %v3472, %v3468
        %v3581 = vpack.c.b16 %v3473, %v3469
        %v3582 = vpack.c.b16 %v3474, %v3470
        %v3583 = vpack.c.b16 %v3479, %v3475
        %v3584 = vpack.c.b16 %v3480, %v3476
        %v3585 = vpack.c.b16 %v3481, %v3477
        %v3586 = vpack.c.b16 %v3482, %v3478
        %v3587 = vpack.c.b16 %v3487, %v3483
        %v3588 = vpack.c.b16 %v3488, %v3484
        %v3589 = vpack.c.b16 %v3489, %v3485
        %v3590 = vpack.c.b16 %v3490, %v3486
        %v3591 = vpack.c.b16 %v3495, %v3491
        %v3592 = vpack.c.b16 %v3496, %v3492
        %v3593 = vpack.c.b16 %v3497, %v3493
        %v3594 = vpack.c.b16 %v3498, %v3494
        %v3595 = vpack.c.b16 %v3503, %v3499
        %v3596 = vpack.c.b16 %v3504, %v3500
        %v3597 = vpack.c.b16 %v3505, %v3501
        %v3598 = vpack.c.b16 %v3506, %v3502
        %v3599 = vpack.c.b16 %v3511, %v3507
        %v3600 = vpack.c.b16 %v3512, %v3508
        %v3601 = vpack.c.b16 %v3513, %v3509
        %v3602 = vpack.c.b16 %v3514, %v3510
        %v3603 = vpack.c.b16 %v3519, %v3515
        %v3604 = vpack.c.b16 %v3520, %v3516
        %v3605 = vpack.c.b16 %v3521, %v3517
        %v3606 = vpack.c.b16 %v3522, %v3518
        %v3607 = vpack.c.b16 %v3527, %v3523
        %v3608 = vpack.c.b16 %v3528, %v3524
        %v3609 = vpack.c.b16 %v3529, %v3525
        %v3610 = vpack.c.b16 %v3530, %v3526
        %v3611 = vpack.c.b16 %v3535, %v3531
        %v3612 = vpack.c.b16 %v3536, %v3532
        %v3613 = vpack.c.b16 %v3537, %v3533
        %v3614 = vpack.c.b16 %v3538, %v3534
        %v3615 = vpack.c.b16 %v3543, %v3539
        %v3616 = vpack.c.b16 %v3544, %v3540
        %v3617 = vpack.c.b16 %v3545, %v3541
        %v3618 = vpack.c.b16 %v3546, %v3542
        %v3619 = vpack.c.b16 %v3551, %v3547
        %v3620 = vpack.c.b16 %v3552, %v3548
        %v3621 = vpack.c.b16 %v3553, %v3549
        %v3622 = vpack.c.b16 %v3554, %v3550
        %v3623 = vpack.c.b16 %v3559, %v3555
        %v3624 = vpack.c.b16 %v3560, %v3556
        %v3625 = vpack.c.b16 %v3561, %v3557
        %v3626 = vpack.c.b16 %v3562, %v3558
        %3691 = vmatprep.subr.bf16.mxu0 %v3564
        %3692 = vmatpush1.bf16.msra.mxu0 %v3563
        %3693 = vmatprep.subr.bf16.mxu0 %v3568
        %3694 = vmatpush1.bf16.msra.mxu0 %v3567
        %3695 = vmatprep.subr.bf16.mxu0 %v3572
        %3696 = vmatpush1.bf16.msra.mxu0 %v3571
        %3697 = vmatprep.subr.bf16.mxu0 %v3576
        %3698 = vmatpush1.bf16.msra.mxu0 %v3575
        %3699 = vmatprep.subr.bf16.mxu0 %v3580
        %3700 = vmatpush1.bf16.msra.mxu0 %v3579
        %3701 = vmatprep.subr.bf16.mxu0 %v3584
        %3702 = vmatpush1.bf16.msra.mxu0 %v3583
        %3703 = vmatprep.subr.bf16.mxu0 %v3588
        %3704 = vmatpush1.bf16.msra.mxu0 %v3587
        %3705 = vmatprep.subr.bf16.mxu0 %v3592
        %3706 = vmatpush1.bf16.msra.mxu0 %v3591
        %3707 = vmatprep.subr.bf16.mxu0 %v3596
        %3708 = vmatpush1.bf16.msra.mxu0 %v3595
        %3709 = vmatprep.subr.bf16.mxu0 %v3600
        %3710 = vmatpush1.bf16.msra.mxu0 %v3599
        %3711 = vmatprep.subr.bf16.mxu0 %v3604
        %3712 = vmatpush1.bf16.msra.mxu0 %v3603
        %3713 = vmatprep.subr.bf16.mxu0 %v3608
        %3714 = vmatpush1.bf16.msra.mxu0 %v3607
        %3715 = vmatprep.subr.bf16.mxu0 %v3612
        %3716 = vmatpush1.bf16.msra.mxu0 %v3611
        %3717 = vmatprep.subr.bf16.mxu0 %v3616
        %3718 = vmatpush1.bf16.msra.mxu0 %v3615
        %3719 = vmatprep.subr.bf16.mxu0 %v3620
        %3720 = vmatpush1.bf16.msra.mxu0 %v3619
        %3721 = vmatprep.subr.bf16.mxu0 %v3624
        %3722 = vmatpush1.bf16.msra.mxu0 %v3623
        %3723 = vmatprep.mubr.bf16.mxu0 %v3368
        %3724 = vmatmul.mubr.bf16.gmra.mrb[0].mxu0 %v3361
        %v3725 = vpop.f32.mrb[0].mxu0
        %v3726 = vadd.f32 0.0, %v3725
        %v3727 = vpop.f32.mrb[0].mxu0
        %v3728 = vadd.f32 0.0, %v3727
        %v3729 = vpop.f32.mrb[0].mxu0
        %v3730 = vpop.f32.mrb[0].mxu0
        %3731 = vdwg.mxu0
        %3732 = vmatprep.subr.bf16.mxu0 %v3566
        %3733 = vmatpush1.bf16.msra.mxu0 %v3565
        %3734 = vmatprep.subr.bf16.mxu0 %v3570
        %3735 = vmatpush1.bf16.msra.mxu0 %v3569
        %3736 = vmatprep.subr.bf16.mxu0 %v3574
        %3737 = vmatpush1.bf16.msra.mxu0 %v3573
        %3738 = vmatprep.subr.bf16.mxu0 %v3578
        %3739 = vmatpush1.bf16.msra.mxu0 %v3577
        %3740 = vmatprep.subr.bf16.mxu0 %v3582
        %3741 = vmatpush1.bf16.msra.mxu0 %v3581
        %3742 = vmatprep.subr.bf16.mxu0 %v3586
        %3743 = vmatpush1.bf16.msra.mxu0 %v3585
        %3744 = vmatprep.subr.bf16.mxu0 %v3590
        %3745 = vmatpush1.bf16.msra.mxu0 %v3589
        %3746 = vmatprep.subr.bf16.mxu0 %v3594
        %3747 = vmatpush1.bf16.msra.mxu0 %v3593
        %3748 = vmatprep.subr.bf16.mxu0 %v3598
        %3749 = vmatpush1.bf16.msra.mxu0 %v3597
        %3750 = vmatprep.subr.bf16.mxu0 %v3602
        %3751 = vmatpush1.bf16.msra.mxu0 %v3601
        %3752 = vmatprep.subr.bf16.mxu0 %v3606
        %3753 = vmatpush1.bf16.msra.mxu0 %v3605
        %3754 = vmatprep.subr.bf16.mxu0 %v3610
        %3755 = vmatpush1.bf16.msra.mxu0 %v3609
        %3756 = vmatprep.subr.bf16.mxu0 %v3614
        %3757 = vmatpush1.bf16.msra.mxu0 %v3613
        %3758 = vmatprep.subr.bf16.mxu0 %v3618
        %3759 = vmatpush1.bf16.msra.mxu0 %v3617
        %3760 = vmatprep.subr.bf16.mxu0 %v3622
        %3761 = vmatpush1.bf16.msra.mxu0 %v3621
        %3762 = vmatprep.subr.bf16.mxu0 %v3626
        %3763 = vmatpush1.bf16.msra.mxu0 %v3625
        %3764 = vmatprep.mubr.bf16.mxu0 %v3368
        %3765 = vmatmul.mubr.bf16.gmra.mrb[0].mxu0 %v3361
        %v3766 = vpop.f32.mrb[0].mxu0
        %v3767 = vadd.f32 0.0, %v3766
        %v3768 = vpop.f32.mrb[0].mxu0
        %v3769 = vadd.f32 0.0, %v3768
        %v3770 = vpop.f32.mrb[0].mxu0
        %v3771 = vpop.f32.mrb[0].mxu0
        %3772 = vdwg.mxu0
        %v3837 = vunpack.c.l.b16 %v3223
        %v3838 = vunpack.c.h.b16 %v3223
        %v3839 = vunpack.c.l.b16 %v3224
        %v3840 = vunpack.c.h.b16 %v3224
        %v3841 = vunpack.c.l.b16 %v3225
        %v3842 = vunpack.c.h.b16 %v3225
        %v3843 = vunpack.c.l.b16 %v3226
        %v3844 = vunpack.c.h.b16 %v3226
        %v3845 = vunpack.c.l.b16 %v3227
        %v3846 = vunpack.c.h.b16 %v3227
        %v3847 = vunpack.c.l.b16 %v3228
        %v3848 = vunpack.c.h.b16 %v3228
        %v3849 = vunpack.c.l.b16 %v3229
        %v3850 = vunpack.c.h.b16 %v3229
        %v3851 = vunpack.c.l.b16 %v3230
        %v3852 = vunpack.c.h.b16 %v3230
        %v3853 = vunpack.c.l.b16 %v3231
        %v3854 = vunpack.c.h.b16 %v3231
        %v3855 = vunpack.c.l.b16 %v3232
        %v3856 = vunpack.c.h.b16 %v3232
        %v3857 = vunpack.c.l.b16 %v3233
        %v3858 = vunpack.c.h.b16 %v3233
        %v3859 = vunpack.c.l.b16 %v3234
        %v3860 = vunpack.c.h.b16 %v3234
        %v3861 = vunpack.c.l.b16 %v3235
        %v3862 = vunpack.c.h.b16 %v3235
        %v3863 = vunpack.c.l.b16 %v3236
        %v3864 = vunpack.c.h.b16 %v3236
        %v3865 = vunpack.c.l.b16 %v3237
        %v3866 = vunpack.c.h.b16 %v3237
        %v3867 = vunpack.c.l.b16 %v3238
        %v3868 = vunpack.c.h.b16 %v3238
        %v3869 = vunpack.c.l.b16 %v3239
        %v3870 = vunpack.c.h.b16 %v3239
        %v3871 = vunpack.c.l.b16 %v3240
        %v3872 = vunpack.c.h.b16 %v3240
        %v3873 = vunpack.c.l.b16 %v3241
        %v3874 = vunpack.c.h.b16 %v3241
        %v3875 = vunpack.c.l.b16 %v3242
        %v3876 = vunpack.c.h.b16 %v3242
        %v3877 = vunpack.c.l.b16 %v3243
        %v3878 = vunpack.c.h.b16 %v3243
        %v3879 = vunpack.c.l.b16 %v3244
        %v3880 = vunpack.c.h.b16 %v3244
        %v3881 = vunpack.c.l.b16 %v3245
        %v3882 = vunpack.c.h.b16 %v3245
        %v3883 = vunpack.c.l.b16 %v3246
        %v3884 = vunpack.c.h.b16 %v3246
        %v3885 = vunpack.c.l.b16 %v3247
        %v3886 = vunpack.c.h.b16 %v3247
        %v3887 = vunpack.c.l.b16 %v3248
        %v3888 = vunpack.c.h.b16 %v3248
        %v3889 = vunpack.c.l.b16 %v3249
        %v3890 = vunpack.c.h.b16 %v3249
        %v3891 = vunpack.c.l.b16 %v3250
        %v3892 = vunpack.c.h.b16 %v3250
        %v3893 = vunpack.c.l.b16 %v3251
        %v3894 = vunpack.c.h.b16 %v3251
        %v3895 = vunpack.c.l.b16 %v3252
        %v3896 = vunpack.c.h.b16 %v3252
        %v3897 = vunpack.c.l.b16 %v3253
        %v3898 = vunpack.c.h.b16 %v3253
        %v3899 = vunpack.c.l.b16 %v3254
        %v3900 = vunpack.c.h.b16 %v3254
        %v3901 = vunpack.c.l.b16 %v3255
        %v3902 = vunpack.c.h.b16 %v3255
        %v3903 = vunpack.c.l.b16 %v3256
        %v3904 = vunpack.c.h.b16 %v3256
        %v3905 = vunpack.c.l.b16 %v3257
        %v3906 = vunpack.c.h.b16 %v3257
        %v3907 = vunpack.c.l.b16 %v3258
        %v3908 = vunpack.c.h.b16 %v3258
        %v3909 = vunpack.c.l.b16 %v3259
        %v3910 = vunpack.c.h.b16 %v3259
        %v3911 = vunpack.c.l.b16 %v3260
        %v3912 = vunpack.c.h.b16 %v3260
        %v3913 = vunpack.c.l.b16 %v3261
        %v3914 = vunpack.c.h.b16 %v3261
        %v3915 = vunpack.c.l.b16 %v3262
        %v3916 = vunpack.c.h.b16 %v3262
        %v3917 = vunpack.c.l.b16 %v3263
        %v3918 = vunpack.c.h.b16 %v3263
        %v3919 = vunpack.c.l.b16 %v3264
        %v3920 = vunpack.c.h.b16 %v3264
        %v3921 = vunpack.c.l.b16 %v3265
        %v3922 = vunpack.c.h.b16 %v3265
        %v3923 = vunpack.c.l.b16 %v3266
        %v3924 = vunpack.c.h.b16 %v3266
        %v3925 = vunpack.c.l.b16 %v3267
        %v3926 = vunpack.c.h.b16 %v3267
        %v3927 = vunpack.c.l.b16 %v3268
        %v3928 = vunpack.c.h.b16 %v3268
        %v3929 = vunpack.c.l.b16 %v3269
        %v3930 = vunpack.c.h.b16 %v3269
        %v3931 = vunpack.c.l.b16 %v3270
        %v3932 = vunpack.c.h.b16 %v3270
        %v3933 = vunpack.c.l.b16 %v3271
        %v3934 = vunpack.c.h.b16 %v3271
        %v3935 = vunpack.c.l.b16 %v3272
        %v3936 = vunpack.c.h.b16 %v3272
        %v3937 = vunpack.c.l.b16 %v3273
        %v3938 = vunpack.c.h.b16 %v3273
        %v3939 = vunpack.c.l.b16 %v3274
        %v3940 = vunpack.c.h.b16 %v3274
        %v3941 = vunpack.c.l.b16 %v3275
        %v3942 = vunpack.c.h.b16 %v3275
        %v3943 = vunpack.c.l.b16 %v3276
        %v3944 = vunpack.c.h.b16 %v3276
        %v3945 = vunpack.c.l.b16 %v3277
        %v3946 = vunpack.c.h.b16 %v3277
        %v3947 = vunpack.c.l.b16 %v3278
        %v3948 = vunpack.c.h.b16 %v3278
        %v3949 = vunpack.c.l.b16 %v3279
        %v3950 = vunpack.c.h.b16 %v3279
        %v3951 = vunpack.c.l.b16 %v3280
        %v3952 = vunpack.c.h.b16 %v3280
        %v3953 = vunpack.c.l.b16 %v3281
        %v3954 = vunpack.c.h.b16 %v3281
        %v3955 = vunpack.c.l.b16 %v3282
        %v3956 = vunpack.c.h.b16 %v3282
        %v3957 = vunpack.c.l.b16 %v3283
        %v3958 = vunpack.c.h.b16 %v3283
        %v3959 = vunpack.c.l.b16 %v3284
        %v3960 = vunpack.c.h.b16 %v3284
        %v3961 = vunpack.c.l.b16 %v3285
        %v3962 = vunpack.c.h.b16 %v3285
        %v3963 = vunpack.c.l.b16 %v3286
        %v3964 = vunpack.c.h.b16 %v3286
        %v3965 = vpack.c.b16 %v3841, %v3837
        %v3966 = vpack.c.b16 %v3842, %v3838
        %v3967 = vpack.c.b16 %v3843, %v3839
        %v3968 = vpack.c.b16 %v3844, %v3840
        %v3969 = vpack.c.b16 %v3849, %v3845
        %v3970 = vpack.c.b16 %v3850, %v3846
        %v3971 = vpack.c.b16 %v3851, %v3847
        %v3972 = vpack.c.b16 %v3852, %v3848
        %v3973 = vpack.c.b16 %v3857, %v3853
        %v3974 = vpack.c.b16 %v3858, %v3854
        %v3975 = vpack.c.b16 %v3859, %v3855
        %v3976 = vpack.c.b16 %v3860, %v3856
        %v3977 = vpack.c.b16 %v3865, %v3861
        %v3978 = vpack.c.b16 %v3866, %v3862
        %v3979 = vpack.c.b16 %v3867, %v3863
        %v3980 = vpack.c.b16 %v3868, %v3864
        %v3981 = vpack.c.b16 %v3873, %v3869
        %v3982 = vpack.c.b16 %v3874, %v3870
        %v3983 = vpack.c.b16 %v3875, %v3871
        %v3984 = vpack.c.b16 %v3876, %v3872
        %v3985 = vpack.c.b16 %v3881, %v3877
        %v3986 = vpack.c.b16 %v3882, %v3878
        %v3987 = vpack.c.b16 %v3883, %v3879
        %v3988 = vpack.c.b16 %v3884, %v3880
        %v3989 = vpack.c.b16 %v3889, %v3885
        %v3990 = vpack.c.b16 %v3890, %v3886
        %v3991 = vpack.c.b16 %v3891, %v3887
        %v3992 = vpack.c.b16 %v3892, %v3888
        %v3993 = vpack.c.b16 %v3897, %v3893
        %v3994 = vpack.c.b16 %v3898, %v3894
        %v3995 = vpack.c.b16 %v3899, %v3895
        %v3996 = vpack.c.b16 %v3900, %v3896
        %v3997 = vpack.c.b16 %v3905, %v3901
        %v3998 = vpack.c.b16 %v3906, %v3902
        %v3999 = vpack.c.b16 %v3907, %v3903
        %v4000 = vpack.c.b16 %v3908, %v3904
        %v4001 = vpack.c.b16 %v3913, %v3909
        %v4002 = vpack.c.b16 %v3914, %v3910
        %v4003 = vpack.c.b16 %v3915, %v3911
        %v4004 = vpack.c.b16 %v3916, %v3912
        %v4005 = vpack.c.b16 %v3921, %v3917
        %v4006 = vpack.c.b16 %v3922, %v3918
        %v4007 = vpack.c.b16 %v3923, %v3919
        %v4008 = vpack.c.b16 %v3924, %v3920
        %v4009 = vpack.c.b16 %v3929, %v3925
        %v4010 = vpack.c.b16 %v3930, %v3926
        %v4011 = vpack.c.b16 %v3931, %v3927
        %v4012 = vpack.c.b16 %v3932, %v3928
        %v4013 = vpack.c.b16 %v3937, %v3933
        %v4014 = vpack.c.b16 %v3938, %v3934
        %v4015 = vpack.c.b16 %v3939, %v3935
        %v4016 = vpack.c.b16 %v3940, %v3936
        %v4017 = vpack.c.b16 %v3945, %v3941
        %v4018 = vpack.c.b16 %v3946, %v3942
        %v4019 = vpack.c.b16 %v3947, %v3943
        %v4020 = vpack.c.b16 %v3948, %v3944
        %v4021 = vpack.c.b16 %v3953, %v3949
        %v4022 = vpack.c.b16 %v3954, %v3950
        %v4023 = vpack.c.b16 %v3955, %v3951
        %v4024 = vpack.c.b16 %v3956, %v3952
        %v4025 = vpack.c.b16 %v3961, %v3957
        %v4026 = vpack.c.b16 %v3962, %v3958
        %v4027 = vpack.c.b16 %v3963, %v3959
        %v4028 = vpack.c.b16 %v3964, %v3960
        %4093 = vmatprep.subr.bf16.mxu0 %v3966
        %4094 = vmatpush1.bf16.msra.mxu0 %v3965
        %4095 = vmatprep.subr.bf16.mxu0 %v3970
        %4096 = vmatpush1.bf16.msra.mxu0 %v3969
        %4097 = vmatprep.subr.bf16.mxu0 %v3974
        %4098 = vmatpush1.bf16.msra.mxu0 %v3973
        %4099 = vmatprep.subr.bf16.mxu0 %v3978
        %4100 = vmatpush1.bf16.msra.mxu0 %v3977
        %4101 = vmatprep.subr.bf16.mxu0 %v3982
        %4102 = vmatpush1.bf16.msra.mxu0 %v3981
        %4103 = vmatprep.subr.bf16.mxu0 %v3986
        %4104 = vmatpush1.bf16.msra.mxu0 %v3985
        %4105 = vmatprep.subr.bf16.mxu0 %v3990
        %4106 = vmatpush1.bf16.msra.mxu0 %v3989
        %4107 = vmatprep.subr.bf16.mxu0 %v3994
        %4108 = vmatpush1.bf16.msra.mxu0 %v3993
        %4109 = vmatprep.subr.bf16.mxu0 %v3998
        %4110 = vmatpush1.bf16.msra.mxu0 %v3997
        %4111 = vmatprep.subr.bf16.mxu0 %v4002
        %4112 = vmatpush1.bf16.msra.mxu0 %v4001
        %4113 = vmatprep.subr.bf16.mxu0 %v4006
        %4114 = vmatpush1.bf16.msra.mxu0 %v4005
        %4115 = vmatprep.subr.bf16.mxu0 %v4010
        %4116 = vmatpush1.bf16.msra.mxu0 %v4009
        %4117 = vmatprep.subr.bf16.mxu0 %v4014
        %4118 = vmatpush1.bf16.msra.mxu0 %v4013
        %4119 = vmatprep.subr.bf16.mxu0 %v4018
        %4120 = vmatpush1.bf16.msra.mxu0 %v4017
        %4121 = vmatprep.subr.bf16.mxu0 %v4022
        %4122 = vmatpush1.bf16.msra.mxu0 %v4021
        %4123 = vmatprep.subr.bf16.mxu0 %v4026
        %4124 = vmatpush1.bf16.msra.mxu0 %v4025
        %4125 = vmatprep.mubr.bf16.mxu0 %v3222
        %4126 = vmatmul.mubr.bf16.gmra.mrb[0].mxu0 %v3221
        %v4127 = vpop.f32.mrb[0].mxu0
        %v4128 = vadd.f32 %v3726, %v4127
        %v4129 = vpop.f32.mrb[0].mxu0
        %v4130 = vadd.f32 %v3728, %v4129
        %v4131 = vpop.f32.mrb[0].mxu0
        %v4132 = vpop.f32.mrb[0].mxu0
        %4133 = vdwg.mxu0
        %4134 = vmatprep.subr.bf16.mxu0 %v3968
        %4135 = vmatpush1.bf16.msra.mxu0 %v3967
        %4136 = vmatprep.subr.bf16.mxu0 %v3972
        %4137 = vmatpush1.bf16.msra.mxu0 %v3971
        %4138 = vmatprep.subr.bf16.mxu0 %v3976
        %4139 = vmatpush1.bf16.msra.mxu0 %v3975
        %4140 = vmatprep.subr.bf16.mxu0 %v3980
        %4141 = vmatpush1.bf16.msra.mxu0 %v3979
        %4142 = vmatprep.subr.bf16.mxu0 %v3984
        %4143 = vmatpush1.bf16.msra.mxu0 %v3983
        %4144 = vmatprep.subr.bf16.mxu0 %v3988
        %4145 = vmatpush1.bf16.msra.mxu0 %v3987
        %4146 = vmatprep.subr.bf16.mxu0 %v3992
        %4147 = vmatpush1.bf16.msra.mxu0 %v3991
        %4148 = vmatprep.subr.bf16.mxu0 %v3996
        %4149 = vmatpush1.bf16.msra.mxu0 %v3995
        %4150 = vmatprep.subr.bf16.mxu0 %v4000
        %4151 = vmatpush1.bf16.msra.mxu0 %v3999
        %4152 = vmatprep.subr.bf16.mxu0 %v4004
        %4153 = vmatpush1.bf16.msra.mxu0 %v4003
        %4154 = vmatprep.subr.bf16.mxu0 %v4008
        %4155 = vmatpush1.bf16.msra.mxu0 %v4007
        %4156 = vmatprep.subr.bf16.mxu0 %v4012
        %4157 = vmatpush1.bf16.msra.mxu0 %v4011
        %4158 = vmatprep.subr.bf16.mxu0 %v4016
        %4159 = vmatpush1.bf16.msra.mxu0 %v4015
        %4160 = vmatprep.subr.bf16.mxu0 %v4020
        %4161 = vmatpush1.bf16.msra.mxu0 %v4019
        %4162 = vmatprep.subr.bf16.mxu0 %v4024
        %4163 = vmatpush1.bf16.msra.mxu0 %v4023
        %4164 = vmatprep.subr.bf16.mxu0 %v4028
        %4165 = vmatpush1.bf16.msra.mxu0 %v4027
        %4166 = vmatprep.mubr.bf16.mxu0 %v3222
        %4167 = vmatmul.mubr.bf16.gmra.mrb[0].mxu0 %v3221
        %v4168 = vpop.f32.mrb[0].mxu0
        %v4169 = vadd.f32 %v3767, %v4168
        %v4170 = vpop.f32.mrb[0].mxu0
        %v4171 = vadd.f32 %v3769, %v4170
        %v4172 = vpop.f32.mrb[0].mxu0
        %v4173 = vpop.f32.mrb[0].mxu0
        %4174 = vdwg.mxu0
        %v4175 = vld [vmem:[#allocation4] sm:$0x3c]
        %v4176 = vld [vmem:[#allocation4 + $0x8] sm:$0x3c]
        %v4177 = vpack.c.bf16 %v4175, %v4175
        %v4178 = vpack.c.bf16 %v4176, %v4176
        %v4179 = vld [vmem:[%s5 + $0x400] sm:$0xff]
        %v4180 = vld [vmem:[%s5 + $0x408] sm:$0xff]
        %v4181 = vld [vmem:[%s5 + $0x410] sm:$0xff]
        %v4182 = vld [vmem:[%s5 + $0x418] sm:$0xff]
        %v4183 = vld [vmem:[%s5 + $0x420] sm:$0xff]
        %v4184 = vld [vmem:[%s5 + $0x428] sm:$0xff]
        %v4185 = vld [vmem:[%s5 + $0x430] sm:$0xff]
        %v4186 = vld [vmem:[%s5 + $0x438] sm:$0xff]
        %v4187 = vld [vmem:[%s5 + $0x440] sm:$0xff]
        %v4188 = vld [vmem:[%s5 + $0x448] sm:$0xff]
        %v4189 = vld [vmem:[%s5 + $0x450] sm:$0xff]
        %v4190 = vld [vmem:[%s5 + $0x458] sm:$0xff]
        %v4191 = vld [vmem:[%s5 + $0x460] sm:$0xff]
        %v4192 = vld [vmem:[%s5 + $0x468] sm:$0xff]
        %v4193 = vld [vmem:[%s5 + $0x470] sm:$0xff]
        %v4194 = vld [vmem:[%s5 + $0x478] sm:$0xff]
        %v4195 = vld [vmem:[%s5 + $0x480] sm:$0xff]
        %v4196 = vld [vmem:[%s5 + $0x488] sm:$0xff]
        %v4197 = vld [vmem:[%s5 + $0x490] sm:$0xff]
        %v4198 = vld [vmem:[%s5 + $0x498] sm:$0xff]
        %v4199 = vld [vmem:[%s5 + $0x4a0] sm:$0xff]
        %v4200 = vld [vmem:[%s5 + $0x4a8] sm:$0xff]
        %v4201 = vld [vmem:[%s5 + $0x4b0] sm:$0xff]
        %v4202 = vld [vmem:[%s5 + $0x4b8] sm:$0xff]
        %v4203 = vld [vmem:[%s5 + $0x4c0] sm:$0xff]
        %v4204 = vld [vmem:[%s5 + $0x4c8] sm:$0xff]
        %v4205 = vld [vmem:[%s5 + $0x4d0] sm:$0xff]
        %v4206 = vld [vmem:[%s5 + $0x4d8] sm:$0xff]
        %v4207 = vld [vmem:[%s5 + $0x4e0] sm:$0xff]
        %v4208 = vld [vmem:[%s5 + $0x4e8] sm:$0xff]
        %v4209 = vld [vmem:[%s5 + $0x4f0] sm:$0xff]
        %v4210 = vld [vmem:[%s5 + $0x4f8] sm:$0xff]
        %v4211 = vld [vmem:[%s5 + $0x500] sm:$0xff]
        %v4212 = vld [vmem:[%s5 + $0x508] sm:$0xff]
        %v4213 = vld [vmem:[%s5 + $0x510] sm:$0xff]
        %v4214 = vld [vmem:[%s5 + $0x518] sm:$0xff]
        %v4215 = vld [vmem:[%s5 + $0x520] sm:$0xff]
        %v4216 = vld [vmem:[%s5 + $0x528] sm:$0xff]
        %v4217 = vld [vmem:[%s5 + $0x530] sm:$0xff]
        %v4218 = vld [vmem:[%s5 + $0x538] sm:$0xff]
        %v4219 = vld [vmem:[%s5 + $0x540] sm:$0xff]
        %v4220 = vld [vmem:[%s5 + $0x548] sm:$0xff]
        %v4221 = vld [vmem:[%s5 + $0x550] sm:$0xff]
        %v4222 = vld [vmem:[%s5 + $0x558] sm:$0xff]
        %v4223 = vld [vmem:[%s5 + $0x560] sm:$0xff]
        %v4224 = vld [vmem:[%s5 + $0x568] sm:$0xff]
        %v4225 = vld [vmem:[%s5 + $0x570] sm:$0xff]
        %v4226 = vld [vmem:[%s5 + $0x578] sm:$0xff]
        %v4227 = vld [vmem:[%s5 + $0x580] sm:$0xff]
        %v4228 = vld [vmem:[%s5 + $0x588] sm:$0xff]
        %v4229 = vld [vmem:[%s5 + $0x590] sm:$0xff]
        %v4230 = vld [vmem:[%s5 + $0x598] sm:$0xff]
        %v4231 = vld [vmem:[%s5 + $0x5a0] sm:$0xff]
        %v4232 = vld [vmem:[%s5 + $0x5a8] sm:$0xff]
        %v4233 = vld [vmem:[%s5 + $0x5b0] sm:$0xff]
        %v4234 = vld [vmem:[%s5 + $0x5b8] sm:$0xff]
        %v4235 = vld [vmem:[%s5 + $0x5c0] sm:$0xff]
        %v4236 = vld [vmem:[%s5 + $0x5c8] sm:$0xff]
        %v4237 = vld [vmem:[%s5 + $0x5d0] sm:$0xff]
        %v4238 = vld [vmem:[%s5 + $0x5d8] sm:$0xff]
        %v4239 = vld [vmem:[%s5 + $0x5e0] sm:$0xff]
        %v4240 = vld [vmem:[%s5 + $0x5e8] sm:$0xff]
        %v4241 = vld [vmem:[%s5 + $0x5f0] sm:$0xff]
        %v4242 = vld [vmem:[%s5 + $0x5f8] sm:$0xff]
        %v4245 = vrot.slane %v4177, 1
        %v4246 = vrot.slane %v4178, 1
        %v4313 = vunpack.c.l.b16 %v4179
        %v4314 = vunpack.c.h.b16 %v4179
        %v4315 = vunpack.c.l.b16 %v4180
        %v4316 = vunpack.c.h.b16 %v4180
        %v4317 = vunpack.c.l.b16 %v4181
        %v4318 = vunpack.c.h.b16 %v4181
        %v4319 = vunpack.c.l.b16 %v4182
        %v4320 = vunpack.c.h.b16 %v4182
        %v4321 = vunpack.c.l.b16 %v4183
        %v4322 = vunpack.c.h.b16 %v4183
        %v4323 = vunpack.c.l.b16 %v4184
        %v4324 = vunpack.c.h.b16 %v4184
        %v4325 = vunpack.c.l.b16 %v4185
        %v4326 = vunpack.c.h.b16 %v4185
        %v4327 = vunpack.c.l.b16 %v4186
        %v4328 = vunpack.c.h.b16 %v4186
        %v4329 = vunpack.c.l.b16 %v4187
        %v4330 = vunpack.c.h.b16 %v4187
        %v4331 = vunpack.c.l.b16 %v4188
        %v4332 = vunpack.c.h.b16 %v4188
        %v4333 = vunpack.c.l.b16 %v4189
        %v4334 = vunpack.c.h.b16 %v4189
        %v4335 = vunpack.c.l.b16 %v4190
        %v4336 = vunpack.c.h.b16 %v4190
        %v4337 = vunpack.c.l.b16 %v4191
        %v4338 = vunpack.c.h.b16 %v4191
        %v4339 = vunpack.c.l.b16 %v4192
        %v4340 = vunpack.c.h.b16 %v4192
        %v4341 = vunpack.c.l.b16 %v4193
        %v4342 = vunpack.c.h.b16 %v4193
        %v4343 = vunpack.c.l.b16 %v4194
        %v4344 = vunpack.c.h.b16 %v4194
        %v4345 = vunpack.c.l.b16 %v4195
        %v4346 = vunpack.c.h.b16 %v4195
        %v4347 = vunpack.c.l.b16 %v4196
        %v4348 = vunpack.c.h.b16 %v4196
        %v4349 = vunpack.c.l.b16 %v4197
        %v4350 = vunpack.c.h.b16 %v4197
        %v4351 = vunpack.c.l.b16 %v4198
        %v4352 = vunpack.c.h.b16 %v4198
        %v4353 = vunpack.c.l.b16 %v4199
        %v4354 = vunpack.c.h.b16 %v4199
        %v4355 = vunpack.c.l.b16 %v4200
        %v4356 = vunpack.c.h.b16 %v4200
        %v4357 = vunpack.c.l.b16 %v4201
        %v4358 = vunpack.c.h.b16 %v4201
        %v4359 = vunpack.c.l.b16 %v4202
        %v4360 = vunpack.c.h.b16 %v4202
        %v4361 = vunpack.c.l.b16 %v4203
        %v4362 = vunpack.c.h.b16 %v4203
        %v4363 = vunpack.c.l.b16 %v4204
        %v4364 = vunpack.c.h.b16 %v4204
        %v4365 = vunpack.c.l.b16 %v4205
        %v4366 = vunpack.c.h.b16 %v4205
        %v4367 = vunpack.c.l.b16 %v4206
        %v4368 = vunpack.c.h.b16 %v4206
        %v4369 = vunpack.c.l.b16 %v4207
        %v4370 = vunpack.c.h.b16 %v4207
        %v4371 = vunpack.c.l.b16 %v4208
        %v4372 = vunpack.c.h.b16 %v4208
        %v4373 = vunpack.c.l.b16 %v4209
        %v4374 = vunpack.c.h.b16 %v4209
        %v4375 = vunpack.c.l.b16 %v4210
        %v4376 = vunpack.c.h.b16 %v4210
        %v4377 = vunpack.c.l.b16 %v4211
        %v4378 = vunpack.c.h.b16 %v4211
        %v4379 = vunpack.c.l.b16 %v4212
        %v4380 = vunpack.c.h.b16 %v4212
        %v4381 = vunpack.c.l.b16 %v4213
        %v4382 = vunpack.c.h.b16 %v4213
        %v4383 = vunpack.c.l.b16 %v4214
        %v4384 = vunpack.c.h.b16 %v4214
        %v4385 = vunpack.c.l.b16 %v4215
        %v4386 = vunpack.c.h.b16 %v4215
        %v4387 = vunpack.c.l.b16 %v4216
        %v4388 = vunpack.c.h.b16 %v4216
        %v4389 = vunpack.c.l.b16 %v4217
        %v4390 = vunpack.c.h.b16 %v4217
        %v4391 = vunpack.c.l.b16 %v4218
        %v4392 = vunpack.c.h.b16 %v4218
        %v4393 = vunpack.c.l.b16 %v4219
        %v4394 = vunpack.c.h.b16 %v4219
        %v4395 = vunpack.c.l.b16 %v4220
        %v4396 = vunpack.c.h.b16 %v4220
        %v4397 = vunpack.c.l.b16 %v4221
        %v4398 = vunpack.c.h.b16 %v4221
        %v4399 = vunpack.c.l.b16 %v4222
        %v4400 = vunpack.c.h.b16 %v4222
        %v4401 = vunpack.c.l.b16 %v4223
        %v4402 = vunpack.c.h.b16 %v4223
        %v4403 = vunpack.c.l.b16 %v4224
        %v4404 = vunpack.c.h.b16 %v4224
        %v4405 = vunpack.c.l.b16 %v4225
        %v4406 = vunpack.c.h.b16 %v4225
        %v4407 = vunpack.c.l.b16 %v4226
        %v4408 = vunpack.c.h.b16 %v4226
        %v4409 = vunpack.c.l.b16 %v4227
        %v4410 = vunpack.c.h.b16 %v4227
        %v4411 = vunpack.c.l.b16 %v4228
        %v4412 = vunpack.c.h.b16 %v4228
        %v4413 = vunpack.c.l.b16 %v4229
        %v4414 = vunpack.c.h.b16 %v4229
        %v4415 = vunpack.c.l.b16 %v4230
        %v4416 = vunpack.c.h.b16 %v4230
        %v4417 = vunpack.c.l.b16 %v4231
        %v4418 = vunpack.c.h.b16 %v4231
        %v4419 = vunpack.c.l.b16 %v4232
        %v4420 = vunpack.c.h.b16 %v4232
        %v4421 = vunpack.c.l.b16 %v4233
        %v4422 = vunpack.c.h.b16 %v4233
        %v4423 = vunpack.c.l.b16 %v4234
        %v4424 = vunpack.c.h.b16 %v4234
        %v4425 = vunpack.c.l.b16 %v4235
        %v4426 = vunpack.c.h.b16 %v4235
        %v4427 = vunpack.c.l.b16 %v4236
        %v4428 = vunpack.c.h.b16 %v4236
        %v4429 = vunpack.c.l.b16 %v4237
        %v4430 = vunpack.c.h.b16 %v4237
        %v4431 = vunpack.c.l.b16 %v4238
        %v4432 = vunpack.c.h.b16 %v4238
        %v4433 = vunpack.c.l.b16 %v4239
        %v4434 = vunpack.c.h.b16 %v4239
        %v4435 = vunpack.c.l.b16 %v4240
        %v4436 = vunpack.c.h.b16 %v4240
        %v4437 = vunpack.c.l.b16 %v4241
        %v4438 = vunpack.c.h.b16 %v4241
        %v4439 = vunpack.c.l.b16 %v4242
        %v4440 = vunpack.c.h.b16 %v4242
        %v4441 = vpack.c.b16 %v4317, %v4313
        %v4442 = vpack.c.b16 %v4318, %v4314
        %v4443 = vpack.c.b16 %v4319, %v4315
        %v4444 = vpack.c.b16 %v4320, %v4316
        %v4445 = vpack.c.b16 %v4325, %v4321
        %v4446 = vpack.c.b16 %v4326, %v4322
        %v4447 = vpack.c.b16 %v4327, %v4323
        %v4448 = vpack.c.b16 %v4328, %v4324
        %v4449 = vpack.c.b16 %v4333, %v4329
        %v4450 = vpack.c.b16 %v4334, %v4330
        %v4451 = vpack.c.b16 %v4335, %v4331
        %v4452 = vpack.c.b16 %v4336, %v4332
        %v4453 = vpack.c.b16 %v4341, %v4337
        %v4454 = vpack.c.b16 %v4342, %v4338
        %v4455 = vpack.c.b16 %v4343, %v4339
        %v4456 = vpack.c.b16 %v4344, %v4340
        %v4457 = vpack.c.b16 %v4349, %v4345
        %v4458 = vpack.c.b16 %v4350, %v4346
        %v4459 = vpack.c.b16 %v4351, %v4347
        %v4460 = vpack.c.b16 %v4352, %v4348
        %v4461 = vpack.c.b16 %v4357, %v4353
        %v4462 = vpack.c.b16 %v4358, %v4354
        %v4463 = vpack.c.b16 %v4359, %v4355
        %v4464 = vpack.c.b16 %v4360, %v4356
        %v4465 = vpack.c.b16 %v4365, %v4361
        %v4466 = vpack.c.b16 %v4366, %v4362
        %v4467 = vpack.c.b16 %v4367, %v4363
        %v4468 = vpack.c.b16 %v4368, %v4364
        %v4469 = vpack.c.b16 %v4373, %v4369
        %v4470 = vpack.c.b16 %v4374, %v4370
        %v4471 = vpack.c.b16 %v4375, %v4371
        %v4472 = vpack.c.b16 %v4376, %v4372
        %v4473 = vpack.c.b16 %v4381, %v4377
        %v4474 = vpack.c.b16 %v4382, %v4378
        %v4475 = vpack.c.b16 %v4383, %v4379
        %v4476 = vpack.c.b16 %v4384, %v4380
        %v4477 = vpack.c.b16 %v4389, %v4385
        %v4478 = vpack.c.b16 %v4390, %v4386
        %v4479 = vpack.c.b16 %v4391, %v4387
        %v4480 = vpack.c.b16 %v4392, %v4388
        %v4481 = vpack.c.b16 %v4397, %v4393
        %v4482 = vpack.c.b16 %v4398, %v4394
        %v4483 = vpack.c.b16 %v4399, %v4395
        %v4484 = vpack.c.b16 %v4400, %v4396
        %v4485 = vpack.c.b16 %v4405, %v4401
        %v4486 = vpack.c.b16 %v4406, %v4402
        %v4487 = vpack.c.b16 %v4407, %v4403
        %v4488 = vpack.c.b16 %v4408, %v4404
        %v4489 = vpack.c.b16 %v4413, %v4409
        %v4490 = vpack.c.b16 %v4414, %v4410
        %v4491 = vpack.c.b16 %v4415, %v4411
        %v4492 = vpack.c.b16 %v4416, %v4412
        %v4493 = vpack.c.b16 %v4421, %v4417
        %v4494 = vpack.c.b16 %v4422, %v4418
        %v4495 = vpack.c.b16 %v4423, %v4419
        %v4496 = vpack.c.b16 %v4424, %v4420
        %v4497 = vpack.c.b16 %v4429, %v4425
        %v4498 = vpack.c.b16 %v4430, %v4426
        %v4499 = vpack.c.b16 %v4431, %v4427
        %v4500 = vpack.c.b16 %v4432, %v4428
        %v4501 = vpack.c.b16 %v4437, %v4433
        %v4502 = vpack.c.b16 %v4438, %v4434
        %v4503 = vpack.c.b16 %v4439, %v4435
        %v4504 = vpack.c.b16 %v4440, %v4436
        %4569 = vmatprep.subr.bf16.mxu0 %v4442
        %4570 = vmatpush1.bf16.msra.mxu0 %v4441
        %4571 = vmatprep.subr.bf16.mxu0 %v4446
        %4572 = vmatpush1.bf16.msra.mxu0 %v4445
        %4573 = vmatprep.subr.bf16.mxu0 %v4450
        %4574 = vmatpush1.bf16.msra.mxu0 %v4449
        %4575 = vmatprep.subr.bf16.mxu0 %v4454
        %4576 = vmatpush1.bf16.msra.mxu0 %v4453
        %4577 = vmatprep.subr.bf16.mxu0 %v4458
        %4578 = vmatpush1.bf16.msra.mxu0 %v4457
        %4579 = vmatprep.subr.bf16.mxu0 %v4462
        %4580 = vmatpush1.bf16.msra.mxu0 %v4461
        %4581 = vmatprep.subr.bf16.mxu0 %v4466
        %4582 = vmatpush1.bf16.msra.mxu0 %v4465
        %4583 = vmatprep.subr.bf16.mxu0 %v4470
        %4584 = vmatpush1.bf16.msra.mxu0 %v4469
        %4585 = vmatprep.subr.bf16.mxu0 %v4474
        %4586 = vmatpush1.bf16.msra.mxu0 %v4473
        %4587 = vmatprep.subr.bf16.mxu0 %v4478
        %4588 = vmatpush1.bf16.msra.mxu0 %v4477
        %4589 = vmatprep.subr.bf16.mxu0 %v4482
        %4590 = vmatpush1.bf16.msra.mxu0 %v4481
        %4591 = vmatprep.subr.bf16.mxu0 %v4486
        %4592 = vmatpush1.bf16.msra.mxu0 %v4485
        %4593 = vmatprep.subr.bf16.mxu0 %v4490
        %4594 = vmatpush1.bf16.msra.mxu0 %v4489
        %4595 = vmatprep.subr.bf16.mxu0 %v4494
        %4596 = vmatpush1.bf16.msra.mxu0 %v4493
        %4597 = vmatprep.subr.bf16.mxu0 %v4498
        %4598 = vmatpush1.bf16.msra.mxu0 %v4497
        %4599 = vmatprep.subr.bf16.mxu0 %v4502
        %4600 = vmatpush1.bf16.msra.mxu0 %v4501
        %4601 = vmatprep.mubr.bf16.mxu0 %v4246
        %4602 = vmatmul.mubr.bf16.gmra.mrb[0].mxu0 %v4245
        %v4603 = vpop.f32.mrb[0].mxu0
        %v4604 = vadd.f32 0.0, %v4603
        %v4605 = vpop.f32.mrb[0].mxu0
        %v4606 = vadd.f32 0.0, %v4605
        %v4607 = vpop.f32.mrb[0].mxu0
        %v4608 = vpop.f32.mrb[0].mxu0
        %4609 = vdwg.mxu0
        %4610 = vmatprep.subr.bf16.mxu0 %v4444
        %4611 = vmatpush1.bf16.msra.mxu0 %v4443
        %4612 = vmatprep.subr.bf16.mxu0 %v4448
        %4613 = vmatpush1.bf16.msra.mxu0 %v4447
        %4614 = vmatprep.subr.bf16.mxu0 %v4452
        %4615 = vmatpush1.bf16.msra.mxu0 %v4451
        %4616 = vmatprep.subr.bf16.mxu0 %v4456
        %4617 = vmatpush1.bf16.msra.mxu0 %v4455
        %4618 = vmatprep.subr.bf16.mxu0 %v4460
        %4619 = vmatpush1.bf16.msra.mxu0 %v4459
        %4620 = vmatprep.subr.bf16.mxu0 %v4464
        %4621 = vmatpush1.bf16.msra.mxu0 %v4463
        %4622 = vmatprep.subr.bf16.mxu0 %v4468
        %4623 = vmatpush1.bf16.msra.mxu0 %v4467
        %4624 = vmatprep.subr.bf16.mxu0 %v4472
        %4625 = vmatpush1.bf16.msra.mxu0 %v4471
        %4626 = vmatprep.subr.bf16.mxu0 %v4476
        %4627 = vmatpush1.bf16.msra.mxu0 %v4475
        %4628 = vmatprep.subr.bf16.mxu0 %v4480
        %4629 = vmatpush1.bf16.msra.mxu0 %v4479
        %4630 = vmatprep.subr.bf16.mxu0 %v4484
        %4631 = vmatpush1.bf16.msra.mxu0 %v4483
        %4632 = vmatprep.subr.bf16.mxu0 %v4488
        %4633 = vmatpush1.bf16.msra.mxu0 %v4487
        %4634 = vmatprep.subr.bf16.mxu0 %v4492
        %4635 = vmatpush1.bf16.msra.mxu0 %v4491
        %4636 = vmatprep.subr.bf16.mxu0 %v4496
        %4637 = vmatpush1.bf16.msra.mxu0 %v4495
        %4638 = vmatprep.subr.bf16.mxu0 %v4500
        %4639 = vmatpush1.bf16.msra.mxu0 %v4499
        %4640 = vmatprep.subr.bf16.mxu0 %v4504
        %4641 = vmatpush1.bf16.msra.mxu0 %v4503
        %4642 = vmatprep.mubr.bf16.mxu0 %v4246
        %4643 = vmatmul.mubr.bf16.gmra.mrb[0].mxu0 %v4245
        %v4644 = vpop.f32.mrb[0].mxu0
        %v4645 = vadd.f32 0.0, %v4644
        %v4646 = vpop.f32.mrb[0].mxu0
        %v4647 = vadd.f32 0.0, %v4646
        %v4648 = vpop.f32.mrb[0].mxu0
        %v4649 = vpop.f32.mrb[0].mxu0
        %4650 = vdwg.mxu0
        %v4651 = vadd.f32 %v4128, %v4604
        %v4652 = vadd.f32 %v4130, %v4606
        %v4653 = vadd.f32 %v4169, %v4645
        %v4654 = vadd.f32 %v4171, %v4647
        %v4655 = vld [vmem:[%s6] sm:$0xf]
        %v4657 = vlaneseq
        %v4658 = vshrl.u32 %v4657, 7
        %v4659 = vsub.s32 0, %v4658
        %v4660 = vrot.slane %v4655, %v4659
        %v4661 = vlaneseq
        %v4662 = vshrl.u32 %v4661, 7
        %v4663 = vsub.s32 1, %v4662
        %v4664 = vrot.slane %v4655, %v4663
        %v4665 = vlaneseq
        %v4666 = vshrl.u32 %v4665, 7
        %v4667 = vsub.s32 2, %v4666
        %v4668 = vrot.slane %v4655, %v4667
        %v4669 = vlaneseq
        %v4670 = vshrl.u32 %v4669, 7
        %v4671 = vsub.s32 3, %v4670
        %v4672 = vrot.slane %v4655, %v4671
        %v4677 = vadd.f32 %v4651, %v4660
        %v4678 = vadd.f32 %v4652, %v4664
        %v4679 = vadd.f32 %v4653, %v4668
        %v4680 = vadd.f32 %v4654, %v4672
        %v4681 = vmax.f32 %v4677, 0.0
        %v4682 = vmax.f32 %v4678, 0.0
        %v4683 = vmax.f32 %v4679, 0.0
        %v4684 = vmax.f32 %v4680, 0.0
        %vm4685 = vcmask 1043456
        %v4686 = vsel %vm4685, %v4681, 0.0
        %v4687 = vrot.slane %v4686, 4
        %v4688 = vadd.f32 %v4686, %v4687
        %v4689 = vrot.slane %v4688, 2
        %v4690 = vadd.f32 %v4688, %v4689
        %v4691 = vrot.slane %v4690, 1
        %v4692 = vadd.f32 %v4690, %v4691
        %v4693 = vsel %vm4685, %v4682, 0.0
        %v4694 = vrot.slane %v4693, 4
        %v4695 = vadd.f32 %v4693, %v4694
        %v4696 = vrot.slane %v4695, 2
        %v4697 = vadd.f32 %v4695, %v4696
        %v4698 = vrot.slane %v4697, 1
        %v4699 = vadd.f32 %v4697, %v4698
        %v4700 = vsel %vm4685, %v4683, 0.0
        %v4701 = vrot.slane %v4700, 4
        %v4702 = vadd.f32 %v4700, %v4701
        %v4703 = vrot.slane %v4702, 2
        %v4704 = vadd.f32 %v4702, %v4703
        %v4705 = vrot.slane %v4704, 1
        %v4706 = vadd.f32 %v4704, %v4705
        %v4707 = vsel %vm4685, %v4684, 0.0
        %v4708 = vrot.slane %v4707, 4
        %v4709 = vadd.f32 %v4707, %v4708
        %v4710 = vrot.slane %v4709, 2
        %v4711 = vadd.f32 %v4709, %v4710
        %v4712 = vrot.slane %v4711, 1
        %v4713 = vadd.f32 %v4711, %v4712
        %v4714 = vadd.f32 %v4692, %v4699
        %v4715 = vadd.f32 %v4714, %v4706
        %v4716 = vadd.f32 %v4715, %v4713
        %v4717 = vmul.f32 %v4716, 0.0625
        %v4718 = vpack.c.bf16 %v4717, %v4717
        %v4719 = vld [vmem:[%s7] sm:$0xf]
        %v4720 = vld [vmem:[%s7 + $0x4] sm:$0xf]
        %v4721 = vld [vmem:[%s7 + $0x8] sm:$0xf]
        %v4722 = vld [vmem:[%s7 + $0xc] sm:$0xf]
        %v4723 = vld [vmem:[%s7 + $0x10] sm:$0xf]
        %v4724 = vld [vmem:[%s7 + $0x14] sm:$0xf]
        %v4725 = vld [vmem:[%s7 + $0x18] sm:$0xf]
        %v4726 = vld [vmem:[%s7 + $0x1c] sm:$0xf]
        %v4727 = vld [vmem:[%s7 + $0x20] sm:$0xf]
        %v4728 = vld [vmem:[%s7 + $0x24] sm:$0xf]
        %v4729 = vld [vmem:[%s7 + $0x28] sm:$0xf]
        %v4730 = vld [vmem:[%s7 + $0x2c] sm:$0xf]
        %v4731 = vld [vmem:[%s7 + $0x30] sm:$0xf]
        %v4732 = vld [vmem:[%s7 + $0x34] sm:$0xf]
        %v4733 = vld [vmem:[%s7 + $0x38] sm:$0xf]
        %v4734 = vld [vmem:[%s7 + $0x3c] sm:$0xf]
        %v4735 = vld [vmem:[%s8] sm:$0x1]
        %v4752 = vunpack.c.l.b16 %v4719
        %v4753 = vunpack.c.l.b16 %v4720
        %v4754 = vunpack.c.l.b16 %v4721
        %v4755 = vunpack.c.l.b16 %v4722
        %v4756 = vunpack.c.l.b16 %v4723
        %v4757 = vunpack.c.l.b16 %v4724
        %v4758 = vunpack.c.l.b16 %v4725
        %v4759 = vunpack.c.l.b16 %v4726
        %v4760 = vunpack.c.l.b16 %v4727
        %v4761 = vunpack.c.l.b16 %v4728
        %v4762 = vunpack.c.l.b16 %v4729
        %v4763 = vunpack.c.l.b16 %v4730
        %v4764 = vunpack.c.l.b16 %v4731
        %v4765 = vunpack.c.l.b16 %v4732
        %v4766 = vunpack.c.l.b16 %v4733
        %v4767 = vunpack.c.l.b16 %v4734
        %v4768 = vpack.c.b16 %v4753, %v4752
        %v4769 = vpack.c.b16 %v4755, %v4754
        %v4770 = vpack.c.b16 %v4757, %v4756
        %v4771 = vpack.c.b16 %v4759, %v4758
        %v4772 = vpack.c.b16 %v4761, %v4760
        %v4773 = vpack.c.b16 %v4763, %v4762
        %v4774 = vpack.c.b16 %v4765, %v4764
        %v4775 = vpack.c.b16 %v4767, %v4766
        %4784 = vmatprep.subr.bf16.mxu0 0
        %4785 = vmatpush1.bf16.msra.mxu0 %v4768
        %4786 = vmatprep.subr.bf16.mxu0 0
        %4787 = vmatpush1.bf16.msra.mxu0 %v4769
        %4788 = vmatprep.subr.bf16.mxu0 0
        %4789 = vmatpush1.bf16.msra.mxu0 %v4770
        %4790 = vmatprep.subr.bf16.mxu0 0
        %4791 = vmatpush1.bf16.msra.mxu0 %v4771
        %4792 = vmatprep.subr.bf16.mxu0 0
        %4793 = vmatpush1.bf16.msra.mxu0 %v4772
        %4794 = vmatprep.subr.bf16.mxu0 0
        %4795 = vmatpush1.bf16.msra.mxu0 %v4773
        %4796 = vmatprep.subr.bf16.mxu0 0
        %4797 = vmatpush1.bf16.msra.mxu0 %v4774
        %4798 = vmatprep.subr.bf16.mxu0 0
        %4799 = vmatpush1.bf16.msra.mxu0 %v4775
        %4800 = vmatprep.subr.bf16.mxu0 0
        %4801 = vmatpush1.bf16.msra.mxu0 0
        %4802 = vmatprep.subr.bf16.mxu0 0
        %4803 = vmatpush1.bf16.msra.mxu0 0
        %4804 = vmatprep.subr.bf16.mxu0 0
        %4805 = vmatpush1.bf16.msra.mxu0 0
        %4806 = vmatprep.subr.bf16.mxu0 0
        %4807 = vmatpush1.bf16.msra.mxu0 0
        %4808 = vmatprep.subr.bf16.mxu0 0
        %4809 = vmatpush1.bf16.msra.mxu0 0
        %4810 = vmatprep.subr.bf16.mxu0 0
        %4811 = vmatpush1.bf16.msra.mxu0 0
        %4812 = vmatprep.subr.bf16.mxu0 0
        %4813 = vmatpush1.bf16.msra.mxu0 0
        %4814 = vmatprep.subr.bf16.mxu0 0
        %4815 = vmatpush1.bf16.msra.mxu0 0
        %4816 = vmatprep.mubr.bf16.mxu0 0
        %4817 = vmatmul.mubr.bf16.gmra.mrb[0].mxu0 %v4718
        %v4818 = vpop.f32.mrb[0].mxu0
        %v4819 = vadd.f32 %v4735, %v4818
        %v4820 = vpop.f32.mrb[0].mxu0
        %v4821 = vpop.f32.mrb[0].mxu0
        %v4822 = vpop.f32.mrb[0].mxu0
        %4823 = vdwg.mxu0
        %v4824 = vmax.f32 %v4819, 0.0
        %v4825 = vpack.c.bf16 %v4824, %v4824
        %v4826 = vld [vmem:[%s9] sm:$0xf]
        %v4827 = vld [vmem:[%s9 + $0x4] sm:$0xf]
        %v4828 = vld [vmem:[%s9 + $0x8] sm:$0xf]
        %v4829 = vld [vmem:[%s9 + $0xc] sm:$0xf]
        %v4830 = vld [vmem:[%s9 + $0x10] sm:$0xf]
        %v4831 = vld [vmem:[%s9 + $0x14] sm:$0xf]
        %v4832 = vld [vmem:[%s9 + $0x18] sm:$0xf]
        %v4833 = vld [vmem:[%s9 + $0x1c] sm:$0xf]
        %v4834 = vld [vmem:[%s9 + $0x20] sm:$0xf]
        %v4835 = vld [vmem:[%s9 + $0x24] sm:$0xf]
        %v4836 = vld [vmem:[%s9 + $0x28] sm:$0xf]
        %v4837 = vld [vmem:[%s9 + $0x2c] sm:$0xf]
        %v4838 = vld [vmem:[%s9 + $0x30] sm:$0xf]
        %v4839 = vld [vmem:[%s9 + $0x34] sm:$0xf]
        %v4840 = vld [vmem:[%s9 + $0x38] sm:$0xf]
        %v4841 = vld [vmem:[%s9 + $0x3c] sm:$0xf]
        %v4842 = vld [vmem:[%s10] sm:$0x1]
        %v4859 = vunpack.c.l.b16 %v4826
        %v4860 = vunpack.c.l.b16 %v4827
        %v4861 = vunpack.c.l.b16 %v4828
        %v4862 = vunpack.c.l.b16 %v4829
        %v4863 = vunpack.c.l.b16 %v4830
        %v4864 = vunpack.c.l.b16 %v4831
        %v4865 = vunpack.c.l.b16 %v4832
        %v4866 = vunpack.c.l.b16 %v4833
        %v4867 = vunpack.c.l.b16 %v4834
        %v4868 = vunpack.c.l.b16 %v4835
        %v4869 = vunpack.c.l.b16 %v4836
        %v4870 = vunpack.c.l.b16 %v4837
        %v4871 = vunpack.c.l.b16 %v4838
        %v4872 = vunpack.c.l.b16 %v4839
        %v4873 = vunpack.c.l.b16 %v4840
        %v4874 = vunpack.c.l.b16 %v4841
        %v4875 = vpack.c.b16 %v4860, %v4859
        %v4876 = vpack.c.b16 %v4862, %v4861
        %v4877 = vpack.c.b16 %v4864, %v4863
        %v4878 = vpack.c.b16 %v4866, %v4865
        %v4879 = vpack.c.b16 %v4868, %v4867
        %v4880 = vpack.c.b16 %v4870, %v4869
        %v4881 = vpack.c.b16 %v4872, %v4871
        %v4882 = vpack.c.b16 %v4874, %v4873
        %4891 = vmatprep.subr.bf16.mxu0 0
        %4892 = vmatpush1.bf16.msra.mxu0 %v4875
        %4893 = vmatprep.subr.bf16.mxu0 0
        %4894 = vmatpush1.bf16.msra.mxu0 %v4876
        %4895 = vmatprep.subr.bf16.mxu0 0
        %4896 = vmatpush1.bf16.msra.mxu0 %v4877
        %4897 = vmatprep.subr.bf16.mxu0 0
        %4898 = vmatpush1.bf16.msra.mxu0 %v4878
        %4899 = vmatprep.subr.bf16.mxu0 0
        %4900 = vmatpush1.bf16.msra.mxu0 %v4879
        %4901 = vmatprep.subr.bf16.mxu0 0
        %4902 = vmatpush1.bf16.msra.mxu0 %v4880
        %4903 = vmatprep.subr.bf16.mxu0 0
        %4904 = vmatpush1.bf16.msra.mxu0 %v4881
        %4905 = vmatprep.subr.bf16.mxu0 0
        %4906 = vmatpush1.bf16.msra.mxu0 %v4882
        %4907 = vmatprep.subr.bf16.mxu0 0
        %4908 = vmatpush1.bf16.msra.mxu0 0
        %4909 = vmatprep.subr.bf16.mxu0 0
        %4910 = vmatpush1.bf16.msra.mxu0 0
        %4911 = vmatprep.subr.bf16.mxu0 0
        %4912 = vmatpush1.bf16.msra.mxu0 0
        %4913 = vmatprep.subr.bf16.mxu0 0
        %4914 = vmatpush1.bf16.msra.mxu0 0
        %4915 = vmatprep.subr.bf16.mxu0 0
        %4916 = vmatpush1.bf16.msra.mxu0 0
        %4917 = vmatprep.subr.bf16.mxu0 0
        %4918 = vmatpush1.bf16.msra.mxu0 0
        %4919 = vmatprep.subr.bf16.mxu0 0
        %4920 = vmatpush1.bf16.msra.mxu0 0
        %4921 = vmatprep.subr.bf16.mxu0 0
        %4922 = vmatpush1.bf16.msra.mxu0 0
        %4923 = vmatprep.mubr.bf16.mxu0 0
        %4924 = vmatmul.mubr.bf16.gmra.mrb[0].mxu0 %v4825
        %v4925 = vpop.f32.mrb[0].mxu0
        %v4926 = vadd.f32 %v4842, %v4925
        %v4927 = vpop.f32.mrb[0].mxu0
        %v4928 = vpop.f32.mrb[0].mxu0
        %v4929 = vpop.f32.mrb[0].mxu0
        %4930 = vdwg.mxu0
        %v4931 = vmul.f32 %v4926, %v4926
        %vm4932 = vcmask 1040384
        %v4933 = vsel %vm4932, %v4931, 0.0
        %4934 = vadd.xlane.f32.xlu0 %v4933
        %v4935 = vpop.xlane.xlu0 %4934
        %v4936 = vmax.f32 %v4935, 1e-24
        %v4937 = vrsqrt.pop %v4936
        %v4938 = vmul.f32 %v4936, 0.5
        %v4939 = vmul.f32 %v4938, %v4937
        %v4940 = vmul.f32 %v4939, %v4937
        %v4941 = vsub.f32 1.5, %v4940
        %v4942 = vmul.f32 %v4937, %v4941
        %v4943 = vmul.f32 %v4926, %v4942
        %4944 = vst [vmem:[%s378] sm:$0x1] %v4943
        %s4945 = sand.u32 %s269, 1
        %s4946 = scalar_lea.sflag [#allocation6], %s4945
        %s4947 = sand.u32 %s269, 1
        %s4948 = scalar_lea.vmem [#allocation5], %s4947
        // Predicated region
        $region65: #{contrastive_forward.1} parent=63 // pred_check
          %p4949 = pneg %p279
        $region66: #{contrastive_forward.1} parent=63 // pred_check_branch
          %4951 = sbr.rel (%p4949) target = $region68
        $region67: #{contrastive_forward.1} parent=63 // pred_region
          %s4953 = ssub.s32 16, 16
          %4954 = vsyncadd %s4946, %s4953
          %s4955 = smul.addr %s25, 16
          %s4956 = scalar_lea.hbm %s11, %s4955
          %s4958 = sshll.u32 %s4948, 4
          %s4959 = int_to_ptr.vmem [resolvable:$true] %s4958
          %4961 = dma.vmem_to_hbm [thread:$0]  %s4959, 16, %s4956, %s4946
        $region68: #{contrastive_forward.1} parent=63 // pred_fallthru
          _
      $region64: #{contrastive_forward.1} parent=5 // pred_fallthru
        _
      %p4962 = scmp.le.s32.totalorder 2, %s20
      // Predicated region
      $region69: #{contrastive_forward.1} parent=5 // pred_check
        %p4963 = pneg %p4962
      $region70: #{contrastive_forward.1} parent=5 // pred_check_branch
        %4965 = sbr.rel (%p4963) target = $region72
      $region71: #{contrastive_forward.1} parent=5 // pred_region
        %s4966 = ssub.s32 %s20, 2
        // Predicated region
        $region73: #{contrastive_forward.1} parent=71 // pred_check
          %p4967 = pneg %p285
        $region74: #{contrastive_forward.1} parent=71 // pred_check_branch
          %4969 = sbr.rel (%p4967) target = $region76
        $region75: #{contrastive_forward.1} parent=71 // pred_region
          %s4970 = sand.u32 %s270, 1
          %s4971 = scalar_lea.sflag [#allocation6], %s4970
          %s4972 = sand.u32 %s270, 1
          %s4973 = scalar_lea.vmem [#allocation5], %s4972
          %4974 = dma.done %s4971, 16
        $region76: #{contrastive_forward.1} parent=71 // pred_fallthru
          _
      $region72: #{contrastive_forward.1} parent=5 // pred_fallthru
        _
    $region6: #{contrastive_forward.1} parent=1 // loop_footer
      %s24 = sadd.s32 1, %s20
    $region7: #{contrastive_forward.1} parent=1 // loop_footer_branch
      %19 = sbr.rel target = $region3
    $region8: #{contrastive_forward.1} parent=1 // loop_exit
      _
    %4975 = vsyncpa [#allocation6], 1
    %s4976 = scalar_lea.sflag [#allocation6], 1
    %4977 = vsyncpa %s4976, 1

</llo_original>
